<compile_context>
chip_gen: v5e
topology: v5e:2x2
jax: 0.10.0
libtpu: 0.0.40
codegen_flags: <defaults>
</compile_context>

<pallas_src>
import functools

import jax
import jax.numpy as jnp
from jax.experimental import pallas as pl
from jax.experimental.pallas import tpu as pltpu


def _sublane_multiple(dtype):
    # Rows packed per vreg sublane tile: f32 -> 8, bf16/f16 -> 16, int8/fp8 -> 32.
    return max(8, 32 // jnp.dtype(dtype).itemsize)


def _sine_layer_kernel(x_ref, w_ref, b_ref, o_ref, *, mxu_dtype):
    # x_ref: (TN, IN)  w_ref: (IN, OUT)  b_ref: (1, OUT)  o_ref: (TN, OUT)
    # omega_0 is already folded into w_ref / b_ref by the wrapper.
    x = x_ref[...]
    w = w_ref[...]
    if mxu_dtype is not None:
        x = x.astype(mxu_dtype)     # per-tile cast in VMEM: no HBM cost
        w = w.astype(mxu_dtype)     # no-op if the wrapper already cast w
    z = jnp.dot(x, w, preferred_element_type=jnp.float32)
    z = z + b_ref[...].astype(jnp.float32)
    # TODO(synk): if the bundle dump shows the sin polynomial saturating the
    # VALU slot (likely on v6e/v7x for wide layers), evaluate bias-add + sin in
    # bf16 there (gate on chip generation; keep f32 on v5e which has no bf16 VPU).
    o_ref[...] = jnp.sin(z).astype(o_ref.dtype)


def sine_layer(x, w, b, *, omega_0=30.0, tile_n=None,
               use_bf16_matmul=False, out_dtype=None):
    """y = sin(omega_0 * (x @ w + b)); w is stored as (in_features, out_features)."""
    N, IN = x.shape
    IN_w, OUT = w.shape
    assert IN == IN_w, "weight must be stored as (in_features, out_features)"
    out_dtype = jnp.dtype(x.dtype if out_dtype is None else out_dtype)
    x_itemsize = jnp.dtype(x.dtype).itemsize
    out_itemsize = out_dtype.itemsize

    # ---- fold omega_0 into the parameters once (outside the per-tile loop) ----
    w = w * jnp.asarray(omega_0, w.dtype)
    b = (b * jnp.asarray(omega_0, b.dtype)).astype(jnp.float32)
    mxu_dtype = jnp.bfloat16 if use_bf16_matmul else None
    if mxu_dtype is not None:
        # The weight is tiny relative to x for realistic N; casting it once in
        # the wrapper also halves its resident VMEM footprint.  x stays in its
        # HBM dtype and is cast per-tile inside the kernel.
        w = w.astype(mxu_dtype)
    b2d = b.reshape(1, OUT)

    # ---- row tiling ----------------------------------------------------------
    # Sublane alignment from the widest packing requirement among x and output.
    row_align = max(_sublane_multiple(x.dtype), _sublane_multiple(out_dtype))
    bytes_per_row = IN * x_itemsize + OUT * out_itemsize

    def working_set(tn):
        return (2 * tn * IN * x_itemsize            # x tile (double buffered)
                + 2 * tn * OUT * out_itemsize       # out tile (double buffered)
                + IN * OUT * w.dtype.itemsize       # weight (grid invariant)
                + OUT * b2d.dtype.itemsize)         # bias   (grid invariant)

    vmem_budget = 44 << 20      # headroom inside v7x's 64 MiB per-TC VMEM
    if tile_n is None:
        # ~3 MiB of x-tile + out-tile per grid step, but keep >= ~8 grid steps
        # when N allows so both v7x TensorCores get work and each core overlaps
        # DMA with compute.
        cand = max(row_align, (3 << 20) // max(bytes_per_row, 1))
        cand = min(cand, max(row_align, pl.cdiv(N, 8)), max(N, row_align))
        tile_n = max(row_align, (cand // row_align) * row_align)
        while tile_n > row_align and working_set(tile_n) > vmem_budget:
            tile_n = max(row_align, (tile_n // 2 // row_align) * row_align)
    assert tile_n % row_align == 0, (
        f"tile_n={tile_n} must be a multiple of {row_align} for "
        f"x={x.dtype}, out={out_dtype}")
    vmem_bytes = working_set(tile_n)
    assert vmem_bytes <= vmem_budget, (
        f"working set {vmem_bytes} B exceeds the {vmem_budget} B VMEM budget "
        "(weight too large to keep resident; a K/N-tiled variant is needed)")

    grid = (pl.cdiv(N, tile_n),)   # ragged last block: Pallas masks its stores

    # Always set the scoped-VMEM limit explicitly (v5e defaults to 16 MiB,
    # v6e/v7x to 32 MiB).  Extra headroom covers the double-buffered fallback
    # for the invariant weight/bias blocks.
    inv_bytes = IN * OUT * w.dtype.itemsize + OUT * b2d.dtype.itemsize
    vmem_limit = int(min(vmem_bytes + inv_bytes + (8 << 20), 60 << 20))
    compiler_params = pltpu.CompilerParams(
        dimension_semantics=("parallel",),
        vmem_limit_bytes=vmem_limit,
    )

    cost = pl.CostEstimate(
        flops=2 * N * IN * OUT,
        transcendentals=N * OUT,
        bytes_accessed=(N * IN * x_itemsize
                        + IN * OUT * w.dtype.itemsize
                        + OUT * b2d.dtype.itemsize
                        + N * OUT * out_itemsize),
    )

    kernel = functools.partial(_sine_layer_kernel, mxu_dtype=mxu_dtype)

    def build_call(single_buffer_invariants):
        inv_kwargs = (dict(pipeline_mode=pl.Buffered(1))
                      if single_buffer_invariants else {})
        return pl.pallas_call(
            kernel,
            out_shape=jax.ShapeDtypeStruct((N, OUT), out_dtype),
            grid_spec=pltpu.PrefetchScalarGridSpec(
                num_scalar_prefetch=0,
                grid=grid,
                in_specs=[
                    pl.BlockSpec((tile_n, IN), lambda i: (i, 0)),   # x row tile
                    pl.BlockSpec((IN, OUT), lambda i: (0, 0), **inv_kwargs),
                    pl.BlockSpec((1, OUT), lambda i: (0, 0), **inv_kwargs),
                ],
                out_specs=pl.BlockSpec((tile_n, OUT), lambda i: (i, 0)),
            ),
            compiler_params=compiler_params,
            cost_estimate=cost,
        )

    try:
        # Grid-invariant weight/bias: single-buffer them to free VMEM for
        # larger row tiles on wide layers.
        return build_call(True)(x, w, b2d)
    except Exception:
        # Fallback if this jax build rejects pipeline_mode on a top-level
        # pallas_call BlockSpec: default double buffering, same semantics.
        return build_call(False)(x, w, b2d)


def init_sine_layer_params(key, in_features, out_features, *, is_first, omega_0):
    """SIREN init matching SineLayer.init_weights (weight custom; bias uses the
    default nn.Linear uniform(-1/sqrt(in), 1/sqrt(in)))."""
    kw, kb = jax.random.split(key)
    if is_first:
        bound_w = 1.0 / in_features
    else:
        bound_w = float(jnp.sqrt(6.0 / in_features) / omega_0)
    # stored as (in_features, out_features) == W^T of torch's (out, in)
    w = jax.random.uniform(
        kw, (in_features, out_features), jnp.float32, -bound_w, bound_w)
    bound_b = 1.0 / float(in_features) ** 0.5
    b = jax.random.uniform(kb, (out_features,), jnp.float32, -bound_b, bound_b)
    return w, b


if __name__ == "__main__":
    key = jax.random.PRNGKey(0)
    k1, k2, k3, k4 = jax.random.split(key, 4)
    omega_0 = 30.0

    # --- test 1: first layer, f32 MXU path, default tile (-> 8 grid steps) ----
    N1, IN1, OUT1 = 1024, 32, 32
    x1 = jax.random.normal(k1, (N1, IN1), jnp.float32)
    w1, b1 = init_sine_layer_params(k2, IN1, OUT1, is_first=True, omega_0=omega_0)
    out1 = jax.block_until_ready(sine_layer(x1, w1, b1, omega_0=omega_0))
    ref1 = jnp.sin(omega_0 * (x1 @ w1 + b1))
    assert out1.shape == (N1, OUT1)
    assert jnp.allclose(out1, ref1, atol=1e-4, rtol=1e-4), \
        float(jnp.max(jnp.abs(out1 - ref1)))

    # --- test 2: hidden layer, bf16 MXU path, ragged rows + non-128 lanes -----
    N2, IN2, OUT2 = 1000, 32, 48
    x2 = jax.random.uniform(k3, (N2, IN2), jnp.float32, -1.0, 1.0)
    w2, b2 = init_sine_layer_params(k4, IN2, OUT2, is_first=False, omega_0=omega_0)
    out2 = jax.block_until_ready(
        sine_layer(x2, w2, b2, omega_0=omega_0, use_bf16_matmul=True))
    ref2 = jnp.sin(omega_0 * (x2 @ w2 + b2))
    assert out2.shape == (N2, OUT2)
    assert jnp.allclose(out2, ref2, atol=1e-1, rtol=0.0), \
        float(jnp.max(jnp.abs(out2 - ref2)))

    print("KERNEL_OK")
</pallas_src>

<mosaic_0001>
module attributes {stable_mosaic.version = 11 : i64} {
  func.func @_sine_layer_kernel(%arg0: i32, %arg1: memref<128x32xf32, #tpu.memory_space<vmem>>, %arg2: memref<32x32xf32, #tpu.memory_space<vmem>>, %arg3: memref<1x32xf32, #tpu.memory_space<vmem>>, %arg4: memref<128x32xf32, #tpu.memory_space<vmem>>) attributes {dimension_semantics = [#tpu.dimension_semantics<parallel>], iteration_bounds = array<i64: 8>, scalar_prefetch = 0 : i64, scratch_operands = 0 : i64, tpu.core_type = #tpu.core_type<tc>, window_params = [{transform_indices = @transform_0, window_bounds = array<i64: 128, 32>}, {pipeline_mode = #tpu.pipeline_mode<synchronous>, transform_indices = @transform_1, window_bounds = array<i64: 32, 32>}, {pipeline_mode = #tpu.pipeline_mode<synchronous>, transform_indices = @transform_2, window_bounds = array<i64: 1, 32>}, {transform_indices = @transform_3, window_bounds = array<i64: 128, 32>}]} {
    %c0 = arith.constant 0 : index
    %c0_0 = arith.constant 0 : index
    %0 = vector.load %arg1[%c0, %c0_0] : memref<128x32xf32, #tpu.memory_space<vmem>>, vector<128x32xf32>
    %c0_1 = arith.constant 0 : index
    %c0_2 = arith.constant 0 : index
    %1 = vector.load %arg2[%c0_1, %c0_2] : memref<32x32xf32, #tpu.memory_space<vmem>>, vector<32x32xf32>
    %cst = arith.constant dense<0.000000e+00> : vector<128x32xf32>
    %2 = tpu.matmul %0, %1, %cst {dimension_numbers = #tpu.dot_dimension_numbers<[1], [0], [0], [1], [0, 0, 1, 1], [], []>} : vector<128x32xf32>, vector<32x32xf32>, vector<128x32xf32> -> vector<128x32xf32>
    %c0_3 = arith.constant 0 : index
    %c0_4 = arith.constant 0 : index
    %3 = vector.load %arg3[%c0_3, %c0_4] : memref<1x32xf32, #tpu.memory_space<vmem>>, vector<1x32xf32>
    %4 = vector.broadcast %3 : vector<1x32xf32> to vector<128x32xf32>
    %5 = arith.addf %2, %4 : vector<128x32xf32>
    %6 = math.sin %5 : vector<128x32xf32>
    %c0_5 = arith.constant 0 : index
    %c0_6 = arith.constant 0 : index
    %7 = vector.load %arg4[%c0_5, %c0_6] : memref<128x32xf32, #tpu.memory_space<vmem>>, vector<128x32xf32>
    tpu.vector_store %arg4[%c0_5, %c0_6], %6 {strides = array<i32>} : memref<128x32xf32, #tpu.memory_space<vmem>>, vector<128x32xf32>,
    return
  }
  func.func @transform_0(%arg0: i32) -> (i32, i32) {
    %c0_i32 = arith.constant 0 : i32
    %c0_i32_0 = arith.constant 0 : i32
    return %arg0, %c0_i32 : i32, i32
  }
  func.func @transform_1(%arg0: i32) -> (i32, i32) {
    %c0_i32 = arith.constant 0 : i32
    %c0_i32_0 = arith.constant 0 : i32
    %c0_i32_1 = arith.constant 0 : i32
    return %c0_i32, %c0_i32_0 : i32, i32
  }
  func.func @transform_2(%arg0: i32) -> (i32, i32) {
    %c0_i32 = arith.constant 0 : i32
    %c0_i32_0 = arith.constant 0 : i32
    %c0_i32_1 = arith.constant 0 : i32
    return %c0_i32, %c0_i32_0 : i32, i32
  }
  func.func @transform_3(%arg0: i32) -> (i32, i32) {
    %c0_i32 = arith.constant 0 : i32
    %c0_i32_0 = arith.constant 0 : i32
    return %arg0, %c0_i32 : i32, i32
  }
}

module attributes {stable_mosaic.version = 11 : i64} {
  func.func @_sine_layer_kernel(%arg0: i32, %arg1: memref<128x32xf32, #tpu.memory_space<vmem>>, %arg2: memref<32x32xf32, #tpu.memory_space<vmem>>, %arg3: memref<1x32xf32, #tpu.memory_space<vmem>>, %arg4: memref<128x32xf32, #tpu.memory_space<vmem>>) attributes {dimension_semantics = [#tpu.dimension_semantics<parallel>], iteration_bounds = array<i64: 8>, scalar_prefetch = 0 : i64, scratch_operands = 0 : i64, tpu.core_type = #tpu.core_type<tc>, window_params = [{transform_indices = @transform_0, window_bounds = array<i64: 128, 32>}, {pipeline_mode = #tpu.pipeline_mode<synchronous>, transform_indices = @transform_1, window_bounds = array<i64: 32, 32>}, {pipeline_mode = #tpu.pipeline_mode<synchronous>, transform_indices = @transform_2, window_bounds = array<i64: 1, 32>}, {transform_indices = @transform_3, window_bounds = array<i64: 128, 32>}]} {
    %c0 = arith.constant 0 : index
    %c0_0 = arith.constant 0 : index
    %0 = vector.load %arg1[%c0, %c0_0] : memref<128x32xf32, #tpu.memory_space<vmem>>, vector<128x32xf32>
    %c0_1 = arith.constant 0 : index
    %c0_2 = arith.constant 0 : index
    %1 = vector.load %arg2[%c0_1, %c0_2] : memref<32x32xf32, #tpu.memory_space<vmem>>, vector<32x32xf32>
    %cst = arith.constant dense<0.000000e+00> : vector<128x32xf32>
    %2 = tpu.matmul %0, %1, %cst {dimension_numbers = #tpu.dot_dimension_numbers<[1], [0], [0], [1], [0, 0, 1, 1], [], []>} : vector<128x32xf32>, vector<32x32xf32>, vector<128x32xf32> -> vector<128x32xf32>
    %c0_3 = arith.constant 0 : index
    %c0_4 = arith.constant 0 : index
    %3 = vector.load %arg3[%c0_3, %c0_4] : memref<1x32xf32, #tpu.memory_space<vmem>>, vector<1x32xf32>
    %4 = vector.broadcast %3 : vector<1x32xf32> to vector<128x32xf32>
    %5 = arith.addf %2, %4 : vector<128x32xf32>
    %6 = math.sin %5 : vector<128x32xf32>
    %c0_5 = arith.constant 0 : index
    %c0_6 = arith.constant 0 : index
    %7 = vector.load %arg4[%c0_5, %c0_6] : memref<128x32xf32, #tpu.memory_space<vmem>>, vector<128x32xf32>
    tpu.vector_store %arg4[%c0_5, %c0_6], %6 {strides = array<i32>} : memref<128x32xf32, #tpu.memory_space<vmem>>, vector<128x32xf32>,
    return
  }
  func.func @transform_0(%arg0: i32) -> (i32, i32) {
    %c0_i32 = arith.constant 0 : i32
    %c0_i32_0 = arith.constant 0 : i32
    return %arg0, %c0_i32 : i32, i32
  }
  func.func @transform_1(%arg0: i32) -> (i32, i32) {
    %c0_i32 = arith.constant 0 : i32
    %c0_i32_0 = arith.constant 0 : i32
    %c0_i32_1 = arith.constant 0 : i32
    return %c0_i32, %c0_i32_0 : i32, i32
  }
  func.func @transform_2(%arg0: i32) -> (i32, i32) {
    %c0_i32 = arith.constant 0 : i32
    %c0_i32_0 = arith.constant 0 : i32
    %c0_i32_1 = arith.constant 0 : i32
    return %c0_i32, %c0_i32_0 : i32, i32
  }
  func.func @transform_3(%arg0: i32) -> (i32, i32) {
    %c0_i32 = arith.constant 0 : i32
    %c0_i32_0 = arith.constant 0 : i32
    return %arg0, %c0_i32 : i32, i32
  }
}

</mosaic_0001>

<llo_original>
// kernel: tpu_custom_call.1
$region0: #{tpu_custom_call.1}
  #allocation0 [shape = 'u32[]', space=smem, size = 0x4, offset = 0x4, fixed_abs, tag = 'smem constant byte address 0x4 - core index']
  #allocation1 [shape = 'u32[72,128]{1,0:T(1,128)}', space=vmem, size = 0x9000, scoped, tag = 'internal scratch']
  %s0 = inlined_call_operand.vmem [shape: f32[1024,32], index: 0, kind: input, shape index: {}]
  %s1 = inlined_call_operand.vmem [shape: f32[32,32], index: 1, kind: input, shape index: {}]
  %s2 = inlined_call_operand.vmem [shape: f32[1,32], index: 2, kind: input, shape index: {}]
  %s3 = inlined_call_operand.vmem [shape: f32[1024,32], index: 3, kind: output, shape index: {}]
  %s4 = sld [smem:[#allocation0]]
  $region45: #{tpu_custom_call.1} parent=0
    _
  %s6 = ssub.s32 1, %s4
  %s7 = scalar_select 0, %s6, %s4
  loop: start=0, step=1, limit=10
  $region2: #{tpu_custom_call.1} parent=0 // loop_pre_header
    _
  $region3: #{tpu_custom_call.1} parent=0 // loop_header
    %s9 = sphi 0, %s13
    %p10 = scmp.ge.s32.totalorder %s9, 10
    %s19 = sphi 0, %s21
    %s22 = sphi 0, %s19
    %s23 = sphi 0, %s22
    %s39 = sphi 0, %s23
    %s43 = sphi 0, %s43
    %s45 = sphi 0, %s43
    %s46 = sphi 0, %s45
    %s60 = sphi 0, %s46
    %s64 = sphi 0, %s64
    %s66 = sphi 0, %s64
    %s67 = sphi 0, %s66
    %s81 = sphi 0, %s67
    %s87 = sphi 0, %s89
    %s90 = sphi 0, %s87
    %s91 = sphi 0, %s90
    %s107 = sphi 0, %s91
  $region4: #{tpu_custom_call.1} parent=0 // loop_header_branch
    %12 = sbr.rel (%p10) target = $region8
  $region5: #{tpu_custom_call.1} parent=0 // loop_body
    %s14 = ssub.s32 %s9, 1
    %s15 = ssub.s32 %s9, 2
    %s16 = sadd.s32 %s9, 1
    %s17 = ssub.s32 %s9, %s16
    %p18 = scmp.eq.s32.totalorder %s17, 0
    %s20 = sadd.s32 %s19, 1
    %s21 = scalar_select %p18, %s19, %s20
    %p24 = pneg %p18
    %p25 = scmp.eq.s32.totalorder %s9, 7
    %p26 = por %p24, %p25
    %p27 = scmp.ne.s32.totalorder %s19, %s22
    %p28 = scmp.eq.s32.totalorder %s9, 0
    %p29 = por %p27, %p28
    %p30 = scmp.ne.s32.totalorder %s19, %s22
    %p31 = scmp.eq.s32.totalorder %s14, 7
    %p32 = por %p30, %p31
    %p33 = scmp.ne.s32.totalorder %s22, %s23
    %p34 = scmp.eq.s32.totalorder %s14, 0
    %p35 = por %p33, %p34
    %p36 = scmp.ne.s32.totalorder %s22, %s23
    %p37 = scmp.eq.s32.totalorder %s15, 7
    %p38 = por %p36, %p37
    %p40 = scmp.ne.s32.totalorder %s23, %s39
    %p41 = scmp.eq.s32.totalorder %s15, 0
    %p42 = por %p40, %p41
    %s44 = sadd.s32 %s43, 1
    %p47 = scmp.eq.s32.totalorder %s9, 7
    %p48 = scmp.ne.s32.totalorder %s43, %s45
    %p49 = scmp.eq.s32.totalorder %s9, 0
    %p50 = por %p48, %p49
    %p51 = scmp.ne.s32.totalorder %s43, %s45
    %p52 = scmp.eq.s32.totalorder %s14, 7
    %p53 = por %p51, %p52
    %p54 = scmp.ne.s32.totalorder %s45, %s46
    %p55 = scmp.eq.s32.totalorder %s14, 0
    %p56 = por %p54, %p55
    %p57 = scmp.ne.s32.totalorder %s45, %s46
    %p58 = scmp.eq.s32.totalorder %s15, 7
    %p59 = por %p57, %p58
    %p61 = scmp.ne.s32.totalorder %s46, %s60
    %p62 = scmp.eq.s32.totalorder %s15, 0
    %p63 = por %p61, %p62
    %s65 = sadd.s32 %s64, 1
    %p68 = scmp.eq.s32.totalorder %s9, 7
    %p69 = scmp.ne.s32.totalorder %s64, %s66
    %p70 = scmp.eq.s32.totalorder %s9, 0
    %p71 = por %p69, %p70
    %p72 = scmp.ne.s32.totalorder %s64, %s66
    %p73 = scmp.eq.s32.totalorder %s14, 7
    %p74 = por %p72, %p73
    %p75 = scmp.ne.s32.totalorder %s66, %s67
    %p76 = scmp.eq.s32.totalorder %s14, 0
    %p77 = por %p75, %p76
    %p78 = scmp.ne.s32.totalorder %s66, %s67
    %p79 = scmp.eq.s32.totalorder %s15, 7
    %p80 = por %p78, %p79
    %p82 = scmp.ne.s32.totalorder %s67, %s81
    %p83 = scmp.eq.s32.totalorder %s15, 0
    %p84 = por %p82, %p83
    %s85 = ssub.s32 %s9, %s16
    %p86 = scmp.eq.s32.totalorder %s85, 0
    %s88 = sadd.s32 %s87, 1
    %s89 = scalar_select %p86, %s87, %s88
    %p92 = pneg %p86
    %p93 = scmp.eq.s32.totalorder %s9, 7
    %p94 = por %p92, %p93
    %p95 = scmp.ne.s32.totalorder %s87, %s90
    %p96 = scmp.eq.s32.totalorder %s9, 0
    %p97 = por %p95, %p96
    %p98 = scmp.ne.s32.totalorder %s87, %s90
    %p99 = scmp.eq.s32.totalorder %s14, 7
    %p100 = por %p98, %p99
    %p101 = scmp.ne.s32.totalorder %s90, %s91
    %p102 = scmp.eq.s32.totalorder %s14, 0
    %p103 = por %p101, %p102
    %p104 = scmp.ne.s32.totalorder %s90, %s91
    %p105 = scmp.eq.s32.totalorder %s15, 7
    %p106 = por %p104, %p105
    %p108 = scmp.ne.s32.totalorder %s91, %s107
    %p109 = scmp.eq.s32.totalorder %s15, 0
    %p110 = por %p108, %p109
    %p111 = scmp.le.s32.totalorder 1, %s9
    %p112 = scmp.lt.s32.totalorder %s9, 9
    %p113 = pnand %p111, %p112
    %p114 = pneg %p113
    // Predicated region
    $region9: #{tpu_custom_call.1} parent=5 // pred_check
      _
    $region10: #{tpu_custom_call.1} parent=5 // pred_check_branch
      %116 = sbr.rel (%p113) target = $region12
    $region11: #{tpu_custom_call.1} parent=5 // pred_region
      %s117 = ssub.s32 %s9, 1
      // Predicated region
      $region13: #{tpu_custom_call.1} parent=11 // pred_check
        %p118 = pneg %p56
      $region14: #{tpu_custom_call.1} parent=11 // pred_check_branch
        %120 = sbr.rel (%p118) target = $region16
      $region15: #{tpu_custom_call.1} parent=11 // pred_region
        _
      $region16: #{tpu_custom_call.1} parent=11 // pred_fallthru
        _
      // Predicated region
      $region17: #{tpu_custom_call.1} parent=11 // pred_check
        %p121 = pneg %p77
      $region18: #{tpu_custom_call.1} parent=11 // pred_check_branch
        %123 = sbr.rel (%p121) target = $region20
      $region19: #{tpu_custom_call.1} parent=11 // pred_region
        _
      $region20: #{tpu_custom_call.1} parent=11 // pred_fallthru
        _
    $region12: #{tpu_custom_call.1} parent=5 // pred_fallthru
      _
    %p124 = scmp.lt.s32.totalorder %s9, 8
    // Predicated region
    $region21: #{tpu_custom_call.1} parent=5 // pred_check
      %p125 = pneg %p124
    $region22: #{tpu_custom_call.1} parent=5 // pred_check_branch
      %127 = sbr.rel (%p125) target = $region24
    $region23: #{tpu_custom_call.1} parent=5 // pred_region
      // Predicated region
      $region25: #{tpu_custom_call.1} parent=23 // pred_check
        %p128 = pneg %p29
      $region26: #{tpu_custom_call.1} parent=23 // pred_check_branch
        %130 = sbr.rel (%p128) target = $region28
      $region27: #{tpu_custom_call.1} parent=23 // pred_region
        %s131 = smul.u32 16, %s9
        %p132 = scmp.lt.s32.totalorder %s131, 127
        %s133 = scalar_select %p132, %s131, 127
        %s134 = smul.addr %s133, 8
        %s135 = scalar_lea.vmem %s0, %s134
        %s136 = smul.u32 16, %s9
      $region28: #{tpu_custom_call.1} parent=23 // pred_fallthru
        _
    $region24: #{tpu_custom_call.1} parent=5 // pred_fallthru
      _
    %p137 = scmp.le.s32.totalorder 1, %s9
    %p138 = scmp.lt.s32.totalorder %s9, 9
    %p139 = pnand %p137, %p138
    %p140 = pneg %p139
    // Predicated region
    $region29: #{tpu_custom_call.1} parent=5 // pred_check
      _
    $region30: #{tpu_custom_call.1} parent=5 // pred_check_branch
      %142 = sbr.rel (%p139) target = $region32
    $region31: #{tpu_custom_call.1} parent=5 // pred_region
      %s143 = ssub.s32 %s9, 1
      %s144 = smul.u32 16, %s14
      %p145 = scmp.lt.s32.totalorder %s144, 127
      %s146 = scalar_select %p145, %s144, 127
      %s147 = smul.addr %s146, 8
      %s148 = scalar_lea.vmem %s0, %s147
      %p149 = pneg %p35
      %p150 = pneg %p32
      %p151 = pneg %p56
      %p152 = pneg %p53
      %p153 = pneg %p77
      %p154 = pneg %p74
      %p155 = pneg %p103
      %p156 = pneg %p100
      %s157 = smul.u32 16, %s14
      %p158 = scmp.lt.s32.totalorder %s157, 127
      %s159 = scalar_select %p158, %s157, 127
      %s160 = smul.addr %s159, 8
      %s161 = scalar_lea.vmem %s3, %s160
      %s162 = smul.u32 16, %s14
      %p163 = scmp.lt.s32.totalorder %s162, 127
      %s164 = scalar_select %p163, %s162, 127
      %s165 = smul.addr %s164, 8
      %s166 = scalar_lea.vmem %s0, %s165
      %s167 = smul.u32 16, %s14
      %s168 = smul.u32 16, %s14
      %p169 = scmp.lt.s32.totalorder %s168, 127
      %s170 = scalar_select %p169, %s168, 127
      %s171 = smul.addr %s170, 8
      %s172 = scalar_lea.vmem %s3, %s171
      %s173 = smul.u32 16, %s14
      %v174 = vld [vmem:[%s166] sm:$0xff]
      %v175 = vld [vmem:[%s166 + $0x8] sm:$0xff]
      %v176 = vld [vmem:[%s166 + $0x10] sm:$0xff]
      %v177 = vld [vmem:[%s166 + $0x18] sm:$0xff]
      %v178 = vld [vmem:[%s166 + $0x20] sm:$0xff]
      %v179 = vld [vmem:[%s166 + $0x28] sm:$0xff]
      %v180 = vld [vmem:[%s166 + $0x30] sm:$0xff]
      %v181 = vld [vmem:[%s166 + $0x38] sm:$0xff]
      %v182 = vld [vmem:[%s166 + $0x40] sm:$0xff]
      %v183 = vld [vmem:[%s166 + $0x48] sm:$0xff]
      %v184 = vld [vmem:[%s166 + $0x50] sm:$0xff]
      %v185 = vld [vmem:[%s166 + $0x58] sm:$0xff]
      %v186 = vld [vmem:[%s166 + $0x60] sm:$0xff]
      %v187 = vld [vmem:[%s166 + $0x68] sm:$0xff]
      %v188 = vld [vmem:[%s166 + $0x70] sm:$0xff]
      %v189 = vld [vmem:[%s166 + $0x78] sm:$0xff]
      %v190 = vld [vmem:[%s1] sm:$0xff]
      %v191 = vld [vmem:[%s1 + $0x8] sm:$0xff]
      %v192 = vld [vmem:[%s1 + $0x10] sm:$0xff]
      %v193 = vld [vmem:[%s1 + $0x18] sm:$0xff]
      %v194 = vld [vmem:[%s2] sm:$0x1]
      %v196 = vperm.slane %v194, 0
      %vm198 = vcmask 261120
      %v200 = vsel %vm198, %v174, 0
      %v203 = vsel %vm198, %v175, 0
      %v206 = vsel %vm198, %v176, 0
      %v209 = vsel %vm198, %v177, 0
      %v212 = vsel %vm198, %v178, 0
      %v215 = vsel %vm198, %v179, 0
      %v218 = vsel %vm198, %v180, 0
      %v221 = vsel %vm198, %v181, 0
      %v224 = vsel %vm198, %v182, 0
      %v227 = vsel %vm198, %v183, 0
      %v230 = vsel %vm198, %v184, 0
      %v233 = vsel %vm198, %v185, 0
      %v236 = vsel %vm198, %v186, 0
      %v239 = vsel %vm198, %v187, 0
      %v242 = vsel %vm198, %v188, 0
      %v245 = vsel %vm198, %v189, 0
      %247 = vmatpush.msra.mxu0 0.0
      %248 = vmatpush.msra.mxu0 0.0
      %249 = vmatpush.msra.mxu0 0.0
      %250 = vmatpush.msra.mxu0 0.0
      %251 = vmatpush.msra.mxu0 0.0
      %252 = vmatpush.msra.mxu0 0.0
      %253 = vmatpush.msra.mxu0 0.0
      %254 = vmatpush.msra.mxu0 0.0
      %255 = vmatpush.msra.mxu0 0.0
      %256 = vmatpush.msra.mxu0 0.0
      %257 = vmatpush.msra.mxu0 0.0
      %258 = vmatpush.msra.mxu0 0.0
      %259 = vmatpush.msra.mxu0 %v193
      %260 = vmatpush.msra.mxu0 %v192
      %261 = vmatpush.msra.mxu0 %v191
      %262 = vmatpush.msra.mxu0 %v190
      %263 = vmatmul.f32.gmra.mxu0 %v200
      %v264 = vpop.f32.mrf.mxu0
      %v265 = vadd.f32 %v196, %v264
      %266 = vmatmul.f32.gmra.mxu0 %v203
      %v267 = vpop.f32.mrf.mxu0
      %v268 = vadd.f32 %v196, %v267
      %269 = vmatmul.f32.gmra.mxu0 %v206
      %v270 = vpop.f32.mrf.mxu0
      %v271 = vadd.f32 %v196, %v270
      %272 = vmatmul.f32.gmra.mxu0 %v209
      %v273 = vpop.f32.mrf.mxu0
      %v274 = vadd.f32 %v196, %v273
      %275 = vmatmul.f32.gmra.mxu0 %v212
      %v276 = vpop.f32.mrf.mxu0
      %v277 = vadd.f32 %v196, %v276
      %278 = vmatmul.f32.gmra.mxu0 %v215
      %v279 = vpop.f32.mrf.mxu0
      %v280 = vadd.f32 %v196, %v279
      %281 = vmatmul.f32.gmra.mxu0 %v218
      %v282 = vpop.f32.mrf.mxu0
      %v283 = vadd.f32 %v196, %v282
      %284 = vmatmul.f32.gmra.mxu0 %v221
      %v285 = vpop.f32.mrf.mxu0
      %v286 = vadd.f32 %v196, %v285
      %287 = vmatmul.f32.gmra.mxu0 %v224
      %v288 = vpop.f32.mrf.mxu0
      %v289 = vadd.f32 %v196, %v288
      %290 = vmatmul.f32.gmra.mxu0 %v227
      %v291 = vpop.f32.mrf.mxu0
      %v292 = vadd.f32 %v196, %v291
      %293 = vmatmul.f32.gmra.mxu0 %v230
      %v294 = vpop.f32.mrf.mxu0
      %v295 = vadd.f32 %v196, %v294
      %296 = vmatmul.f32.gmra.mxu0 %v233
      %v297 = vpop.f32.mrf.mxu0
      %v298 = vadd.f32 %v196, %v297
      %299 = vmatmul.f32.gmra.mxu0 %v236
      %v300 = vpop.f32.mrf.mxu0
      %v301 = vadd.f32 %v196, %v300
      %302 = vmatmul.f32.gmra.mxu0 %v239
      %v303 = vpop.f32.mrf.mxu0
      %v304 = vadd.f32 %v196, %v303
      %305 = vmatmul.f32.gmra.mxu0 %v242
      %v306 = vpop.f32.mrf.mxu0
      %v307 = vadd.f32 %v196, %v306
      %308 = vmatmul.f32.gmra.mxu0 %v245
      %v309 = vpop.f32.mrf.mxu0
      %v310 = vadd.f32 %v196, %v309
      %311 = vdwg.mxu0
      %v312 = vand.u32 2147483647, %v265
      %vm313 = vcmp.le.f32.partialorder %v312, 0.7853982
      %vm314 = vcmp.lt.s32.totalorder %v265, 0
      %v315 = vand.u32 %v265, 2139095040
      %v316 = vshrl.u32 %v315, 23
      %v317 = vsub.s32 %v316, 127
      %v318 = vand.u32 2147483647, %v265
      %v319 = vand.u32 %v318, 8388607
      %v320 = vor.u32 %v319, 8388608
      %v321 = vsub.s32 0, %v320
      %v322 = vadd.s32 %v317, 1
      %vm323 = vcmp.gt.s32.totalorder %v322, 0
      %v324 = vsel %vm323, %v322, 0
      %v325 = vshrl.u32 %v324, 5
      %v326 = vand.u32 %v324, 31
      %v327 = vsub.s32 32, %v326
      %v328 = vshrl.u32 683565275, %v327
      %v329 = vshll.u32 683565275, %v326
      %v330 = vshrl.u32 2475754826, %v327
      %v331 = vor.u32 %v329, %v330
      %v332 = vshll.u32 2475754826, %v326
      %v333 = vshrl.u32 2131351028, %v327
      %v334 = vor.u32 %v332, %v333
      %v335 = vshll.u32 2131351028, %v326
      %v336 = vshrl.u32 2102212464, %v327
      %v337 = vor.u32 %v335, %v336
      %v338 = vshll.u32 2102212464, %v326
      %v339 = vshrl.u32 920167782, %v327
      %v340 = vor.u32 %v338, %v339
      %v341 = vshll.u32 920167782, %v326
      %v342 = vshrl.u32 1326507024, %v327
      %v343 = vor.u32 %v341, %v342
      %vm344 = vcmp.lt.s32.totalorder %v325, 1
      %vm345 = vcmp.lt.s32.totalorder %v325, 2
      %vm346 = vcmp.lt.s32.totalorder %v325, 3
      %vm347 = vcmp.lt.s32.totalorder %v325, 4
      %v348 = vsel %vm344, %v328, %v331
      %v349 = vsel %vm347, %v337, 2102212464
      %v350 = vsel %vm346, %v334, %v349
      %v351 = vsel %vm345, %v348, %v350
      %v352 = vsel %vm344, %v331, %v334
      %v353 = vsel %vm347, %v340, 920167782
      %v354 = vsel %vm346, %v337, %v353
      %v355 = vsel %vm345, %v352, %v354
      %v356 = vsel %vm344, %v334, %v337
      %v357 = vsel %vm347, %v343, 1326507024
      %v358 = vsel %vm346, %v340, %v357
      %v359 = vsel %vm345, %v356, %v358
      %v360 = vshll.u32 %v320, 8
      %v361 = vand.u32 %v360, 65535
      %v362 = vshrl.u32 %v360, 16
      %v363 = vand.u32 %v359, 65535
      %v364 = vshrl.u32 %v359, 16
      %v365 = vmul.u32 %v361, %v363
      %v366 = vmul.u32 %v361, %v364
      %v367 = vmul.u32 %v362, %v363
      %v368 = vmul.u32 %v362, %v364
      %v369 = vshll.u32 %v366, 16
      %v370 = vshrl.u32 %v366, 16
      %v371 = vshll.u32 %v367, 16
      %v372 = vshrl.u32 %v367, 16
      %vm373 = vc.u32 %v365, %v369
      %v374 = vsel %vm373, 1, 0
      %v375 = vadd.s32 %v365, %v369
      %v376 = vadd.s32 %v368, %v374
      %vm377 = vc.u32 %v375, %v371
      %v378 = vsel %vm377, 1, 0
      %v379 = vadd.s32 %v375, %v371
      %v380 = vadd.s32 %v376, %v378
      %v381 = vadd.s32 %v380, %v370
      %v382 = vadd.s32 %v381, %v372
      %v383 = vand.u32 %v360, 65535
      %v384 = vshrl.u32 %v360, 16
      %v385 = vand.u32 %v355, 65535
      %v386 = vshrl.u32 %v355, 16
      %v387 = vmul.u32 %v383, %v385
      %v388 = vmul.u32 %v383, %v386
      %v389 = vmul.u32 %v384, %v385
      %v390 = vmul.u32 %v384, %v386
      %v391 = vshll.u32 %v388, 16
      %v392 = vshrl.u32 %v388, 16
      %v393 = vshll.u32 %v389, 16
      %v394 = vshrl.u32 %v389, 16
      %vm395 = vc.u32 %v387, %v391
      %v396 = vsel %vm395, 1, 0
      %v397 = vadd.s32 %v387, %v391
      %v398 = vadd.s32 %v390, %v396
      %vm399 = vc.u32 %v397, %v393
      %v400 = vsel %vm399, 1, 0
      %v401 = vadd.s32 %v397, %v393
      %v402 = vadd.s32 %v398, %v400
      %v403 = vadd.s32 %v402, %v392
      %v404 = vadd.s32 %v403, %v394
      %v405 = vmul.u32 %v360, %v351
      %v406 = vadd.s32 %v382, %v401
      %vm407 = vc.u32 %v382, %v401
      %v408 = vadd.s32 %v404, 1
      %v409 = vsel %vm407, %v408, %v404
      %v410 = vadd.s32 %v405, %v409
      %v411 = vadd.s32 %v410, 536870912
      %v412 = vshrl.u32 %v411, 30
      %v413 = vshll.u32 %v412, 30
      %v414 = vsub.s32 %v410, %v413
      %vm415 = vcmp.lt.s32.totalorder %v414, 0
      %v416 = vsub.s32 0, %v414
      %v417 = vsel %vm415, %v416, %v414
      %v418 = vclz %v417
      %v419 = vsub.s32 %v418, 2
      %vm420 = vcmp.gt.s32.totalorder 0, %v419
      %v421 = vsel %vm420, 0, %v419
      %v422 = vsub.s32 32, %v421
      %v423 = vshll.u32 %v414, %v421
      %v424 = vshrl.u32 %v406, %v422
      %v425 = vor.u32 %v423, %v424
      %v426 = vsub.s32 4294967266, %v421
      %v427 = vadd.s32 %v426, 127
      %v428 = vshll.u32 %v427, 23
      %v429 = vor.u32 4788187, %v428
      %v430 = vand.u32 2147483647, %v429
      %v432 = vcvt.s32.f32 %v425
      %v433 = vmul.f32 %v432, %v430
      %v434 = vxor.u32 %v433, 2147483648
      %v435 = vsel %vm314, %v434, %v433
      %v436 = vsub.s32 4, %v412
      %v437 = vsel %vm314, %v436, %v412
      %v438 = vsel %vm313, %v265, %v435
      %v439 = vsel %vm313, 0, %v437
      %v440 = vmul.f32 %v438, %v438
      %v441 = vmul.f32 %v440, -0.001358992
      %v442 = vadd.f32 %v441, 0.041655596
      %v443 = vmul.f32 %v440, %v442
      %v444 = vadd.f32 %v443, -0.4999988
      %v445 = vmul.f32 %v440, %v444
      %v446 = vadd.f32 1.0, %v445
      %v447 = vmul.f32 %v438, %v438
      %v448 = vmul.f32 %v447, -0.00019511016
      %v449 = vadd.f32 %v448, 0.008332121
      %v450 = vmul.f32 %v447, %v449
      %v451 = vadd.f32 %v450, -0.16666654
      %v452 = vmul.f32 %v447, %v451
      %v453 = vadd.f32 %v452, 1.0
      %v454 = vmul.f32 %v453, %v438
      %vm455 = vweird.f32 %v265
      %v456 = vadd.s32 %v439, 3
      %v457 = vand.u32 %v456, 3
      %vm458 = vcmp.lt.s32.totalorder %v457, 2
      %vm459 = vcmp.eq.s32.totalorder %v457, 0
      %v460 = vxor.u32 %v454, 2147483648
      %v461 = vsel %vm459, %v446, %v460
      %vm462 = vcmp.eq.s32.totalorder %v457, 2
      %v463 = vxor.u32 %v446, 2147483648
      %v464 = vsel %vm462, %v463, %v454
      %v465 = vsel %vm458, %v461, %v464
      %v466 = vsel %vm455, nan, %v465
      %v467 = vand.u32 2147483647, %v268
      %vm468 = vcmp.le.f32.partialorder %v467, 0.7853982
      %vm469 = vcmp.lt.s32.totalorder %v268, 0
      %v470 = vand.u32 %v268, 2139095040
      %v471 = vshrl.u32 %v470, 23
      %v472 = vsub.s32 %v471, 127
      %v473 = vand.u32 2147483647, %v268
      %v474 = vand.u32 %v473, 8388607
      %v475 = vor.u32 %v474, 8388608
      %v476 = vsub.s32 0, %v475
      %v477 = vadd.s32 %v472, 1
      %vm478 = vcmp.gt.s32.totalorder %v477, 0
      %v479 = vsel %vm478, %v477, 0
      %v480 = vshrl.u32 %v479, 5
      %v481 = vand.u32 %v479, 31
      %v482 = vsub.s32 32, %v481
      %v483 = vshrl.u32 683565275, %v482
      %v484 = vshll.u32 683565275, %v481
      %v485 = vshrl.u32 2475754826, %v482
      %v486 = vor.u32 %v484, %v485
      %v487 = vshll.u32 2475754826, %v481
      %v488 = vshrl.u32 2131351028, %v482
      %v489 = vor.u32 %v487, %v488
      %v490 = vshll.u32 2131351028, %v481
      %v491 = vshrl.u32 2102212464, %v482
      %v492 = vor.u32 %v490, %v491
      %v493 = vshll.u32 2102212464, %v481
      %v494 = vshrl.u32 920167782, %v482
      %v495 = vor.u32 %v493, %v494
      %v496 = vshll.u32 920167782, %v481
      %v497 = vshrl.u32 1326507024, %v482
      %v498 = vor.u32 %v496, %v497
      %vm499 = vcmp.lt.s32.totalorder %v480, 1
      %vm500 = vcmp.lt.s32.totalorder %v480, 2
      %vm501 = vcmp.lt.s32.totalorder %v480, 3
      %vm502 = vcmp.lt.s32.totalorder %v480, 4
      %v503 = vsel %vm499, %v483, %v486
      %v504 = vsel %vm502, %v492, 2102212464
      %v505 = vsel %vm501, %v489, %v504
      %v506 = vsel %vm500, %v503, %v505
      %v507 = vsel %vm499, %v486, %v489
      %v508 = vsel %vm502, %v495, 920167782
      %v509 = vsel %vm501, %v492, %v508
      %v510 = vsel %vm500, %v507, %v509
      %v511 = vsel %vm499, %v489, %v492
      %v512 = vsel %vm502, %v498, 1326507024
      %v513 = vsel %vm501, %v495, %v512
      %v514 = vsel %vm500, %v511, %v513
      %v515 = vshll.u32 %v475, 8
      %v516 = vand.u32 %v515, 65535
      %v517 = vshrl.u32 %v515, 16
      %v518 = vand.u32 %v514, 65535
      %v519 = vshrl.u32 %v514, 16
      %v520 = vmul.u32 %v516, %v518
      %v521 = vmul.u32 %v516, %v519
      %v522 = vmul.u32 %v517, %v518
      %v523 = vmul.u32 %v517, %v519
      %v524 = vshll.u32 %v521, 16
      %v525 = vshrl.u32 %v521, 16
      %v526 = vshll.u32 %v522, 16
      %v527 = vshrl.u32 %v522, 16
      %vm528 = vc.u32 %v520, %v524
      %v529 = vsel %vm528, 1, 0
      %v530 = vadd.s32 %v520, %v524
      %v531 = vadd.s32 %v523, %v529
      %vm532 = vc.u32 %v530, %v526
      %v533 = vsel %vm532, 1, 0
      %v534 = vadd.s32 %v530, %v526
      %v535 = vadd.s32 %v531, %v533
      %v536 = vadd.s32 %v535, %v525
      %v537 = vadd.s32 %v536, %v527
      %v538 = vand.u32 %v515, 65535
      %v539 = vshrl.u32 %v515, 16
      %v540 = vand.u32 %v510, 65535
      %v541 = vshrl.u32 %v510, 16
      %v542 = vmul.u32 %v538, %v540
      %v543 = vmul.u32 %v538, %v541
      %v544 = vmul.u32 %v539, %v540
      %v545 = vmul.u32 %v539, %v541
      %v546 = vshll.u32 %v543, 16
      %v547 = vshrl.u32 %v543, 16
      %v548 = vshll.u32 %v544, 16
      %v549 = vshrl.u32 %v544, 16
      %vm550 = vc.u32 %v542, %v546
      %v551 = vsel %vm550, 1, 0
      %v552 = vadd.s32 %v542, %v546
      %v553 = vadd.s32 %v545, %v551
      %vm554 = vc.u32 %v552, %v548
      %v555 = vsel %vm554, 1, 0
      %v556 = vadd.s32 %v552, %v548
      %v557 = vadd.s32 %v553, %v555
      %v558 = vadd.s32 %v557, %v547
      %v559 = vadd.s32 %v558, %v549
      %v560 = vmul.u32 %v515, %v506
      %v561 = vadd.s32 %v537, %v556
      %vm562 = vc.u32 %v537, %v556
      %v563 = vadd.s32 %v559, 1
      %v564 = vsel %vm562, %v563, %v559
      %v565 = vadd.s32 %v560, %v564
      %v566 = vadd.s32 %v565, 536870912
      %v567 = vshrl.u32 %v566, 30
      %v568 = vshll.u32 %v567, 30
      %v569 = vsub.s32 %v565, %v568
      %vm570 = vcmp.lt.s32.totalorder %v569, 0
      %v571 = vsub.s32 0, %v569
      %v572 = vsel %vm570, %v571, %v569
      %v573 = vclz %v572
      %v574 = vsub.s32 %v573, 2
      %vm575 = vcmp.gt.s32.totalorder 0, %v574
      %v576 = vsel %vm575, 0, %v574
      %v577 = vsub.s32 32, %v576
      %v578 = vshll.u32 %v569, %v576
      %v579 = vshrl.u32 %v561, %v577
      %v580 = vor.u32 %v578, %v579
      %v581 = vsub.s32 4294967266, %v576
      %v582 = vadd.s32 %v581, 127
      %v583 = vshll.u32 %v582, 23
      %v584 = vor.u32 4788187, %v583
      %v585 = vand.u32 2147483647, %v584
      %v587 = vcvt.s32.f32 %v580
      %v588 = vmul.f32 %v587, %v585
      %v589 = vxor.u32 %v588, 2147483648
      %v590 = vsel %vm469, %v589, %v588
      %v591 = vsub.s32 4, %v567
      %v592 = vsel %vm469, %v591, %v567
      %v593 = vsel %vm468, %v268, %v590
      %v594 = vsel %vm468, 0, %v592
      %v595 = vmul.f32 %v593, %v593
      %v596 = vmul.f32 %v595, -0.001358992
      %v597 = vadd.f32 %v596, 0.041655596
      %v598 = vmul.f32 %v595, %v597
      %v599 = vadd.f32 %v598, -0.4999988
      %v600 = vmul.f32 %v595, %v599
      %v601 = vadd.f32 1.0, %v600
      %v602 = vmul.f32 %v593, %v593
      %v603 = vmul.f32 %v602, -0.00019511016
      %v604 = vadd.f32 %v603, 0.008332121
      %v605 = vmul.f32 %v602, %v604
      %v606 = vadd.f32 %v605, -0.16666654
      %v607 = vmul.f32 %v602, %v606
      %v608 = vadd.f32 %v607, 1.0
      %v609 = vmul.f32 %v608, %v593
      %vm610 = vweird.f32 %v268
      %v611 = vadd.s32 %v594, 3
      %v612 = vand.u32 %v611, 3
      %vm613 = vcmp.lt.s32.totalorder %v612, 2
      %vm614 = vcmp.eq.s32.totalorder %v612, 0
      %v615 = vxor.u32 %v609, 2147483648
      %v616 = vsel %vm614, %v601, %v615
      %vm617 = vcmp.eq.s32.totalorder %v612, 2
      %v618 = vxor.u32 %v601, 2147483648
      %v619 = vsel %vm617, %v618, %v609
      %v620 = vsel %vm613, %v616, %v619
      %v621 = vsel %vm610, nan, %v620
      %v622 = vand.u32 2147483647, %v271
      %vm623 = vcmp.le.f32.partialorder %v622, 0.7853982
      %vm624 = vcmp.lt.s32.totalorder %v271, 0
      %v625 = vand.u32 %v271, 2139095040
      %v626 = vshrl.u32 %v625, 23
      %v627 = vsub.s32 %v626, 127
      %v628 = vand.u32 2147483647, %v271
      %v629 = vand.u32 %v628, 8388607
      %v630 = vor.u32 %v629, 8388608
      %v631 = vsub.s32 0, %v630
      %v632 = vadd.s32 %v627, 1
      %vm633 = vcmp.gt.s32.totalorder %v632, 0
      %v634 = vsel %vm633, %v632, 0
      %v635 = vshrl.u32 %v634, 5
      %v636 = vand.u32 %v634, 31
      %v637 = vsub.s32 32, %v636
      %v638 = vshrl.u32 683565275, %v637
      %v639 = vshll.u32 683565275, %v636
      %v640 = vshrl.u32 2475754826, %v637
      %v641 = vor.u32 %v639, %v640
      %v642 = vshll.u32 2475754826, %v636
      %v643 = vshrl.u32 2131351028, %v637
      %v644 = vor.u32 %v642, %v643
      %v645 = vshll.u32 2131351028, %v636
      %v646 = vshrl.u32 2102212464, %v637
      %v647 = vor.u32 %v645, %v646
      %v648 = vshll.u32 2102212464, %v636
      %v649 = vshrl.u32 920167782, %v637
      %v650 = vor.u32 %v648, %v649
      %v651 = vshll.u32 920167782, %v636
      %v652 = vshrl.u32 1326507024, %v637
      %v653 = vor.u32 %v651, %v652
      %vm654 = vcmp.lt.s32.totalorder %v635, 1
      %vm655 = vcmp.lt.s32.totalorder %v635, 2
      %vm656 = vcmp.lt.s32.totalorder %v635, 3
      %vm657 = vcmp.lt.s32.totalorder %v635, 4
      %v658 = vsel %vm654, %v638, %v641
      %v659 = vsel %vm657, %v647, 2102212464
      %v660 = vsel %vm656, %v644, %v659
      %v661 = vsel %vm655, %v658, %v660
      %v662 = vsel %vm654, %v641, %v644
      %v663 = vsel %vm657, %v650, 920167782
      %v664 = vsel %vm656, %v647, %v663
      %v665 = vsel %vm655, %v662, %v664
      %v666 = vsel %vm654, %v644, %v647
      %v667 = vsel %vm657, %v653, 1326507024
      %v668 = vsel %vm656, %v650, %v667
      %v669 = vsel %vm655, %v666, %v668
      %v670 = vshll.u32 %v630, 8
      %v671 = vand.u32 %v670, 65535
      %v672 = vshrl.u32 %v670, 16
      %v673 = vand.u32 %v669, 65535
      %v674 = vshrl.u32 %v669, 16
      %v675 = vmul.u32 %v671, %v673
      %v676 = vmul.u32 %v671, %v674
      %v677 = vmul.u32 %v672, %v673
      %v678 = vmul.u32 %v672, %v674
      %v679 = vshll.u32 %v676, 16
      %v680 = vshrl.u32 %v676, 16
      %v681 = vshll.u32 %v677, 16
      %v682 = vshrl.u32 %v677, 16
      %vm683 = vc.u32 %v675, %v679
      %v684 = vsel %vm683, 1, 0
      %v685 = vadd.s32 %v675, %v679
      %v686 = vadd.s32 %v678, %v684
      %vm687 = vc.u32 %v685, %v681
      %v688 = vsel %vm687, 1, 0
      %v689 = vadd.s32 %v685, %v681
      %v690 = vadd.s32 %v686, %v688
      %v691 = vadd.s32 %v690, %v680
      %v692 = vadd.s32 %v691, %v682
      %v693 = vand.u32 %v670, 65535
      %v694 = vshrl.u32 %v670, 16
      %v695 = vand.u32 %v665, 65535
      %v696 = vshrl.u32 %v665, 16
      %v697 = vmul.u32 %v693, %v695
      %v698 = vmul.u32 %v693, %v696
      %v699 = vmul.u32 %v694, %v695
      %v700 = vmul.u32 %v694, %v696
      %v701 = vshll.u32 %v698, 16
      %v702 = vshrl.u32 %v698, 16
      %v703 = vshll.u32 %v699, 16
      %v704 = vshrl.u32 %v699, 16
      %vm705 = vc.u32 %v697, %v701
      %v706 = vsel %vm705, 1, 0
      %v707 = vadd.s32 %v697, %v701
      %v708 = vadd.s32 %v700, %v706
      %vm709 = vc.u32 %v707, %v703
      %v710 = vsel %vm709, 1, 0
      %v711 = vadd.s32 %v707, %v703
      %v712 = vadd.s32 %v708, %v710
      %v713 = vadd.s32 %v712, %v702
      %v714 = vadd.s32 %v713, %v704
      %v715 = vmul.u32 %v670, %v661
      %v716 = vadd.s32 %v692, %v711
      %vm717 = vc.u32 %v692, %v711
      %v718 = vadd.s32 %v714, 1
      %v719 = vsel %vm717, %v718, %v714
      %v720 = vadd.s32 %v715, %v719
      %v721 = vadd.s32 %v720, 536870912
      %v722 = vshrl.u32 %v721, 30
      %v723 = vshll.u32 %v722, 30
      %v724 = vsub.s32 %v720, %v723
      %vm725 = vcmp.lt.s32.totalorder %v724, 0
      %v726 = vsub.s32 0, %v724
      %v727 = vsel %vm725, %v726, %v724
      %v728 = vclz %v727
      %v729 = vsub.s32 %v728, 2
      %vm730 = vcmp.gt.s32.totalorder 0, %v729
      %v731 = vsel %vm730, 0, %v729
      %v732 = vsub.s32 32, %v731
      %v733 = vshll.u32 %v724, %v731
      %v734 = vshrl.u32 %v716, %v732
      %v735 = vor.u32 %v733, %v734
      %v736 = vsub.s32 4294967266, %v731
      %v737 = vadd.s32 %v736, 127
      %v738 = vshll.u32 %v737, 23
      %v739 = vor.u32 4788187, %v738
      %v740 = vand.u32 2147483647, %v739
      %v742 = vcvt.s32.f32 %v735
      %v743 = vmul.f32 %v742, %v740
      %v744 = vxor.u32 %v743, 2147483648
      %v745 = vsel %vm624, %v744, %v743
      %v746 = vsub.s32 4, %v722
      %v747 = vsel %vm624, %v746, %v722
      %v748 = vsel %vm623, %v271, %v745
      %v749 = vsel %vm623, 0, %v747
      %v750 = vmul.f32 %v748, %v748
      %v751 = vmul.f32 %v750, -0.001358992
      %v752 = vadd.f32 %v751, 0.041655596
      %v753 = vmul.f32 %v750, %v752
      %v754 = vadd.f32 %v753, -0.4999988
      %v755 = vmul.f32 %v750, %v754
      %v756 = vadd.f32 1.0, %v755
      %v757 = vmul.f32 %v748, %v748
      %v758 = vmul.f32 %v757, -0.00019511016
      %v759 = vadd.f32 %v758, 0.008332121
      %v760 = vmul.f32 %v757, %v759
      %v761 = vadd.f32 %v760, -0.16666654
      %v762 = vmul.f32 %v757, %v761
      %v763 = vadd.f32 %v762, 1.0
      %v764 = vmul.f32 %v763, %v748
      %vm765 = vweird.f32 %v271
      %v766 = vadd.s32 %v749, 3
      %v767 = vand.u32 %v766, 3
      %vm768 = vcmp.lt.s32.totalorder %v767, 2
      %vm769 = vcmp.eq.s32.totalorder %v767, 0
      %v770 = vxor.u32 %v764, 2147483648
      %v771 = vsel %vm769, %v756, %v770
      %vm772 = vcmp.eq.s32.totalorder %v767, 2
      %v773 = vxor.u32 %v756, 2147483648
      %v774 = vsel %vm772, %v773, %v764
      %v775 = vsel %vm768, %v771, %v774
      %v776 = vsel %vm765, nan, %v775
      %v777 = vand.u32 2147483647, %v274
      %vm778 = vcmp.le.f32.partialorder %v777, 0.7853982
      %vm779 = vcmp.lt.s32.totalorder %v274, 0
      %v780 = vand.u32 %v274, 2139095040
      %v781 = vshrl.u32 %v780, 23
      %v782 = vsub.s32 %v781, 127
      %v783 = vand.u32 2147483647, %v274
      %v784 = vand.u32 %v783, 8388607
      %v785 = vor.u32 %v784, 8388608
      %v786 = vsub.s32 0, %v785
      %v787 = vadd.s32 %v782, 1
      %vm788 = vcmp.gt.s32.totalorder %v787, 0
      %v789 = vsel %vm788, %v787, 0
      %v790 = vshrl.u32 %v789, 5
      %v791 = vand.u32 %v789, 31
      %v792 = vsub.s32 32, %v791
      %v793 = vshrl.u32 683565275, %v792
      %v794 = vshll.u32 683565275, %v791
      %v795 = vshrl.u32 2475754826, %v792
      %v796 = vor.u32 %v794, %v795
      %v797 = vshll.u32 2475754826, %v791
      %v798 = vshrl.u32 2131351028, %v792
      %v799 = vor.u32 %v797, %v798
      %v800 = vshll.u32 2131351028, %v791
      %v801 = vshrl.u32 2102212464, %v792
      %v802 = vor.u32 %v800, %v801
      %v803 = vshll.u32 2102212464, %v791
      %v804 = vshrl.u32 920167782, %v792
      %v805 = vor.u32 %v803, %v804
      %v806 = vshll.u32 920167782, %v791
      %v807 = vshrl.u32 1326507024, %v792
      %v808 = vor.u32 %v806, %v807
      %vm809 = vcmp.lt.s32.totalorder %v790, 1
      %vm810 = vcmp.lt.s32.totalorder %v790, 2
      %vm811 = vcmp.lt.s32.totalorder %v790, 3
      %vm812 = vcmp.lt.s32.totalorder %v790, 4
      %v813 = vsel %vm809, %v793, %v796
      %v814 = vsel %vm812, %v802, 2102212464
      %v815 = vsel %vm811, %v799, %v814
      %v816 = vsel %vm810, %v813, %v815
      %v817 = vsel %vm809, %v796, %v799
      %v818 = vsel %vm812, %v805, 920167782
      %v819 = vsel %vm811, %v802, %v818
      %v820 = vsel %vm810, %v817, %v819
      %v821 = vsel %vm809, %v799, %v802
      %v822 = vsel %vm812, %v808, 1326507024
      %v823 = vsel %vm811, %v805, %v822
      %v824 = vsel %vm810, %v821, %v823
      %v825 = vshll.u32 %v785, 8
      %v826 = vand.u32 %v825, 65535
      %v827 = vshrl.u32 %v825, 16
      %v828 = vand.u32 %v824, 65535
      %v829 = vshrl.u32 %v824, 16
      %v830 = vmul.u32 %v826, %v828
      %v831 = vmul.u32 %v826, %v829
      %v832 = vmul.u32 %v827, %v828
      %v833 = vmul.u32 %v827, %v829
      %v834 = vshll.u32 %v831, 16
      %v835 = vshrl.u32 %v831, 16
      %v836 = vshll.u32 %v832, 16
      %v837 = vshrl.u32 %v832, 16
      %vm838 = vc.u32 %v830, %v834
      %v839 = vsel %vm838, 1, 0
      %v840 = vadd.s32 %v830, %v834
      %v841 = vadd.s32 %v833, %v839
      %vm842 = vc.u32 %v840, %v836
      %v843 = vsel %vm842, 1, 0
      %v844 = vadd.s32 %v840, %v836
      %v845 = vadd.s32 %v841, %v843
      %v846 = vadd.s32 %v845, %v835
      %v847 = vadd.s32 %v846, %v837
      %v848 = vand.u32 %v825, 65535
      %v849 = vshrl.u32 %v825, 16
      %v850 = vand.u32 %v820, 65535
      %v851 = vshrl.u32 %v820, 16
      %v852 = vmul.u32 %v848, %v850
      %v853 = vmul.u32 %v848, %v851
      %v854 = vmul.u32 %v849, %v850
      %v855 = vmul.u32 %v849, %v851
      %v856 = vshll.u32 %v853, 16
      %v857 = vshrl.u32 %v853, 16
      %v858 = vshll.u32 %v854, 16
      %v859 = vshrl.u32 %v854, 16
      %vm860 = vc.u32 %v852, %v856
      %v861 = vsel %vm860, 1, 0
      %v862 = vadd.s32 %v852, %v856
      %v863 = vadd.s32 %v855, %v861
      %vm864 = vc.u32 %v862, %v858
      %v865 = vsel %vm864, 1, 0
      %v866 = vadd.s32 %v862, %v858
      %v867 = vadd.s32 %v863, %v865
      %v868 = vadd.s32 %v867, %v857
      %v869 = vadd.s32 %v868, %v859
      %v870 = vmul.u32 %v825, %v816
      %v871 = vadd.s32 %v847, %v866
      %vm872 = vc.u32 %v847, %v866
      %v873 = vadd.s32 %v869, 1
      %v874 = vsel %vm872, %v873, %v869
      %v875 = vadd.s32 %v870, %v874
      %v876 = vadd.s32 %v875, 536870912
      %v877 = vshrl.u32 %v876, 30
      %v878 = vshll.u32 %v877, 30
      %v879 = vsub.s32 %v875, %v878
      %vm880 = vcmp.lt.s32.totalorder %v879, 0
      %v881 = vsub.s32 0, %v879
      %v882 = vsel %vm880, %v881, %v879
      %v883 = vclz %v882
      %v884 = vsub.s32 %v883, 2
      %vm885 = vcmp.gt.s32.totalorder 0, %v884
      %v886 = vsel %vm885, 0, %v884
      %v887 = vsub.s32 32, %v886
      %v888 = vshll.u32 %v879, %v886
      %v889 = vshrl.u32 %v871, %v887
      %v890 = vor.u32 %v888, %v889
      %v891 = vsub.s32 4294967266, %v886
      %v892 = vadd.s32 %v891, 127
      %v893 = vshll.u32 %v892, 23
      %v894 = vor.u32 4788187, %v893
      %v895 = vand.u32 2147483647, %v894
      %v897 = vcvt.s32.f32 %v890
      %v898 = vmul.f32 %v897, %v895
      %v899 = vxor.u32 %v898, 2147483648
      %v900 = vsel %vm779, %v899, %v898
      %v901 = vsub.s32 4, %v877
      %v902 = vsel %vm779, %v901, %v877
      %v903 = vsel %vm778, %v274, %v900
      %v904 = vsel %vm778, 0, %v902
      %v905 = vmul.f32 %v903, %v903
      %v906 = vmul.f32 %v905, -0.001358992
      %v907 = vadd.f32 %v906, 0.041655596
      %v908 = vmul.f32 %v905, %v907
      %v909 = vadd.f32 %v908, -0.4999988
      %v910 = vmul.f32 %v905, %v909
      %v911 = vadd.f32 1.0, %v910
      %v912 = vmul.f32 %v903, %v903
      %v913 = vmul.f32 %v912, -0.00019511016
      %v914 = vadd.f32 %v913, 0.008332121
      %v915 = vmul.f32 %v912, %v914
      %v916 = vadd.f32 %v915, -0.16666654
      %v917 = vmul.f32 %v912, %v916
      %v918 = vadd.f32 %v917, 1.0
      %v919 = vmul.f32 %v918, %v903
      %vm920 = vweird.f32 %v274
      %v921 = vadd.s32 %v904, 3
      %v922 = vand.u32 %v921, 3
      %vm923 = vcmp.lt.s32.totalorder %v922, 2
      %vm924 = vcmp.eq.s32.totalorder %v922, 0
      %v925 = vxor.u32 %v919, 2147483648
      %v926 = vsel %vm924, %v911, %v925
      %vm927 = vcmp.eq.s32.totalorder %v922, 2
      %v928 = vxor.u32 %v911, 2147483648
      %v929 = vsel %vm927, %v928, %v919
      %v930 = vsel %vm923, %v926, %v929
      %v931 = vsel %vm920, nan, %v930
      %v932 = vand.u32 2147483647, %v277
      %vm933 = vcmp.le.f32.partialorder %v932, 0.7853982
      %vm934 = vcmp.lt.s32.totalorder %v277, 0
      %v935 = vand.u32 %v277, 2139095040
      %v936 = vshrl.u32 %v935, 23
      %v937 = vsub.s32 %v936, 127
      %v938 = vand.u32 2147483647, %v277
      %v939 = vand.u32 %v938, 8388607
      %v940 = vor.u32 %v939, 8388608
      %v941 = vsub.s32 0, %v940
      %v942 = vadd.s32 %v937, 1
      %vm943 = vcmp.gt.s32.totalorder %v942, 0
      %v944 = vsel %vm943, %v942, 0
      %v945 = vshrl.u32 %v944, 5
      %v946 = vand.u32 %v944, 31
      %v947 = vsub.s32 32, %v946
      %v948 = vshrl.u32 683565275, %v947
      %v949 = vshll.u32 683565275, %v946
      %v950 = vshrl.u32 2475754826, %v947
      %v951 = vor.u32 %v949, %v950
      %v952 = vshll.u32 2475754826, %v946
      %v953 = vshrl.u32 2131351028, %v947
      %v954 = vor.u32 %v952, %v953
      %v955 = vshll.u32 2131351028, %v946
      %v956 = vshrl.u32 2102212464, %v947
      %v957 = vor.u32 %v955, %v956
      %v958 = vshll.u32 2102212464, %v946
      %v959 = vshrl.u32 920167782, %v947
      %v960 = vor.u32 %v958, %v959
      %v961 = vshll.u32 920167782, %v946
      %v962 = vshrl.u32 1326507024, %v947
      %v963 = vor.u32 %v961, %v962
      %vm964 = vcmp.lt.s32.totalorder %v945, 1
      %vm965 = vcmp.lt.s32.totalorder %v945, 2
      %vm966 = vcmp.lt.s32.totalorder %v945, 3
      %vm967 = vcmp.lt.s32.totalorder %v945, 4
      %v968 = vsel %vm964, %v948, %v951
      %v969 = vsel %vm967, %v957, 2102212464
      %v970 = vsel %vm966, %v954, %v969
      %v971 = vsel %vm965, %v968, %v970
      %v972 = vsel %vm964, %v951, %v954
      %v973 = vsel %vm967, %v960, 920167782
      %v974 = vsel %vm966, %v957, %v973
      %v975 = vsel %vm965, %v972, %v974
      %v976 = vsel %vm964, %v954, %v957
      %v977 = vsel %vm967, %v963, 1326507024
      %v978 = vsel %vm966, %v960, %v977
      %v979 = vsel %vm965, %v976, %v978
      %v980 = vshll.u32 %v940, 8
      %v981 = vand.u32 %v980, 65535
      %v982 = vshrl.u32 %v980, 16
      %v983 = vand.u32 %v979, 65535
      %v984 = vshrl.u32 %v979, 16
      %v985 = vmul.u32 %v981, %v983
      %v986 = vmul.u32 %v981, %v984
      %v987 = vmul.u32 %v982, %v983
      %v988 = vmul.u32 %v982, %v984
      %v989 = vshll.u32 %v986, 16
      %v990 = vshrl.u32 %v986, 16
      %v991 = vshll.u32 %v987, 16
      %v992 = vshrl.u32 %v987, 16
      %vm993 = vc.u32 %v985, %v989
      %v994 = vsel %vm993, 1, 0
      %v995 = vadd.s32 %v985, %v989
      %v996 = vadd.s32 %v988, %v994
      %vm997 = vc.u32 %v995, %v991
      %v998 = vsel %vm997, 1, 0
      %v999 = vadd.s32 %v995, %v991
      %v1000 = vadd.s32 %v996, %v998
      %v1001 = vadd.s32 %v1000, %v990
      %v1002 = vadd.s32 %v1001, %v992
      %v1003 = vand.u32 %v980, 65535
      %v1004 = vshrl.u32 %v980, 16
      %v1005 = vand.u32 %v975, 65535
      %v1006 = vshrl.u32 %v975, 16
      %v1007 = vmul.u32 %v1003, %v1005
      %v1008 = vmul.u32 %v1003, %v1006
      %v1009 = vmul.u32 %v1004, %v1005
      %v1010 = vmul.u32 %v1004, %v1006
      %v1011 = vshll.u32 %v1008, 16
      %v1012 = vshrl.u32 %v1008, 16
      %v1013 = vshll.u32 %v1009, 16
      %v1014 = vshrl.u32 %v1009, 16
      %vm1015 = vc.u32 %v1007, %v1011
      %v1016 = vsel %vm1015, 1, 0
      %v1017 = vadd.s32 %v1007, %v1011
      %v1018 = vadd.s32 %v1010, %v1016
      %vm1019 = vc.u32 %v1017, %v1013
      %v1020 = vsel %vm1019, 1, 0
      %v1021 = vadd.s32 %v1017, %v1013
      %v1022 = vadd.s32 %v1018, %v1020
      %v1023 = vadd.s32 %v1022, %v1012
      %v1024 = vadd.s32 %v1023, %v1014
      %v1025 = vmul.u32 %v980, %v971
      %v1026 = vadd.s32 %v1002, %v1021
      %vm1027 = vc.u32 %v1002, %v1021
      %v1028 = vadd.s32 %v1024, 1
      %v1029 = vsel %vm1027, %v1028, %v1024
      %v1030 = vadd.s32 %v1025, %v1029
      %v1031 = vadd.s32 %v1030, 536870912
      %v1032 = vshrl.u32 %v1031, 30
      %v1033 = vshll.u32 %v1032, 30
      %v1034 = vsub.s32 %v1030, %v1033
      %vm1035 = vcmp.lt.s32.totalorder %v1034, 0
      %v1036 = vsub.s32 0, %v1034
      %v1037 = vsel %vm1035, %v1036, %v1034
      %v1038 = vclz %v1037
      %v1039 = vsub.s32 %v1038, 2
      %vm1040 = vcmp.gt.s32.totalorder 0, %v1039
      %v1041 = vsel %vm1040, 0, %v1039
      %v1042 = vsub.s32 32, %v1041
      %v1043 = vshll.u32 %v1034, %v1041
      %v1044 = vshrl.u32 %v1026, %v1042
      %v1045 = vor.u32 %v1043, %v1044
      %v1046 = vsub.s32 4294967266, %v1041
      %v1047 = vadd.s32 %v1046, 127
      %v1048 = vshll.u32 %v1047, 23
      %v1049 = vor.u32 4788187, %v1048
      %v1050 = vand.u32 2147483647, %v1049
      %v1052 = vcvt.s32.f32 %v1045
      %v1053 = vmul.f32 %v1052, %v1050
      %v1054 = vxor.u32 %v1053, 2147483648
      %v1055 = vsel %vm934, %v1054, %v1053
      %v1056 = vsub.s32 4, %v1032
      %v1057 = vsel %vm934, %v1056, %v1032
      %v1058 = vsel %vm933, %v277, %v1055
      %v1059 = vsel %vm933, 0, %v1057
      %v1060 = vmul.f32 %v1058, %v1058
      %v1061 = vmul.f32 %v1060, -0.001358992
      %v1062 = vadd.f32 %v1061, 0.041655596
      %v1063 = vmul.f32 %v1060, %v1062
      %v1064 = vadd.f32 %v1063, -0.4999988
      %v1065 = vmul.f32 %v1060, %v1064
      %v1066 = vadd.f32 1.0, %v1065
      %v1067 = vmul.f32 %v1058, %v1058
      %v1068 = vmul.f32 %v1067, -0.00019511016
      %v1069 = vadd.f32 %v1068, 0.008332121
      %v1070 = vmul.f32 %v1067, %v1069
      %v1071 = vadd.f32 %v1070, -0.16666654
      %v1072 = vmul.f32 %v1067, %v1071
      %v1073 = vadd.f32 %v1072, 1.0
      %v1074 = vmul.f32 %v1073, %v1058
      %vm1075 = vweird.f32 %v277
      %v1076 = vadd.s32 %v1059, 3
      %v1077 = vand.u32 %v1076, 3
      %vm1078 = vcmp.lt.s32.totalorder %v1077, 2
      %vm1079 = vcmp.eq.s32.totalorder %v1077, 0
      %v1080 = vxor.u32 %v1074, 2147483648
      %v1081 = vsel %vm1079, %v1066, %v1080
      %vm1082 = vcmp.eq.s32.totalorder %v1077, 2
      %v1083 = vxor.u32 %v1066, 2147483648
      %v1084 = vsel %vm1082, %v1083, %v1074
      %v1085 = vsel %vm1078, %v1081, %v1084
      %v1086 = vsel %vm1075, nan, %v1085
      %v1087 = vand.u32 2147483647, %v280
      %vm1088 = vcmp.le.f32.partialorder %v1087, 0.7853982
      %vm1089 = vcmp.lt.s32.totalorder %v280, 0
      %v1090 = vand.u32 %v280, 2139095040
      %v1091 = vshrl.u32 %v1090, 23
      %v1092 = vsub.s32 %v1091, 127
      %v1093 = vand.u32 2147483647, %v280
      %v1094 = vand.u32 %v1093, 8388607
      %v1095 = vor.u32 %v1094, 8388608
      %v1096 = vsub.s32 0, %v1095
      %v1097 = vadd.s32 %v1092, 1
      %vm1098 = vcmp.gt.s32.totalorder %v1097, 0
      %v1099 = vsel %vm1098, %v1097, 0
      %v1100 = vshrl.u32 %v1099, 5
      %v1101 = vand.u32 %v1099, 31
      %v1102 = vsub.s32 32, %v1101
      %v1103 = vshrl.u32 683565275, %v1102
      %v1104 = vshll.u32 683565275, %v1101
      %v1105 = vshrl.u32 2475754826, %v1102
      %v1106 = vor.u32 %v1104, %v1105
      %v1107 = vshll.u32 2475754826, %v1101
      %v1108 = vshrl.u32 2131351028, %v1102
      %v1109 = vor.u32 %v1107, %v1108
      %v1110 = vshll.u32 2131351028, %v1101
      %v1111 = vshrl.u32 2102212464, %v1102
      %v1112 = vor.u32 %v1110, %v1111
      %v1113 = vshll.u32 2102212464, %v1101
      %v1114 = vshrl.u32 920167782, %v1102
      %v1115 = vor.u32 %v1113, %v1114
      %v1116 = vshll.u32 920167782, %v1101
      %v1117 = vshrl.u32 1326507024, %v1102
      %v1118 = vor.u32 %v1116, %v1117
      %vm1119 = vcmp.lt.s32.totalorder %v1100, 1
      %vm1120 = vcmp.lt.s32.totalorder %v1100, 2
      %vm1121 = vcmp.lt.s32.totalorder %v1100, 3
      %vm1122 = vcmp.lt.s32.totalorder %v1100, 4
      %v1123 = vsel %vm1119, %v1103, %v1106
      %v1124 = vsel %vm1122, %v1112, 2102212464
      %v1125 = vsel %vm1121, %v1109, %v1124
      %v1126 = vsel %vm1120, %v1123, %v1125
      %v1127 = vsel %vm1119, %v1106, %v1109
      %v1128 = vsel %vm1122, %v1115, 920167782
      %v1129 = vsel %vm1121, %v1112, %v1128
      %v1130 = vsel %vm1120, %v1127, %v1129
      %v1131 = vsel %vm1119, %v1109, %v1112
      %v1132 = vsel %vm1122, %v1118, 1326507024
      %v1133 = vsel %vm1121, %v1115, %v1132
      %v1134 = vsel %vm1120, %v1131, %v1133
      %v1135 = vshll.u32 %v1095, 8
      %v1136 = vand.u32 %v1135, 65535
      %v1137 = vshrl.u32 %v1135, 16
      %v1138 = vand.u32 %v1134, 65535
      %v1139 = vshrl.u32 %v1134, 16
      %v1140 = vmul.u32 %v1136, %v1138
      %v1141 = vmul.u32 %v1136, %v1139
      %v1142 = vmul.u32 %v1137, %v1138
      %v1143 = vmul.u32 %v1137, %v1139
      %v1144 = vshll.u32 %v1141, 16
      %v1145 = vshrl.u32 %v1141, 16
      %v1146 = vshll.u32 %v1142, 16
      %v1147 = vshrl.u32 %v1142, 16
      %vm1148 = vc.u32 %v1140, %v1144
      %v1149 = vsel %vm1148, 1, 0
      %v1150 = vadd.s32 %v1140, %v1144
      %v1151 = vadd.s32 %v1143, %v1149
      %vm1152 = vc.u32 %v1150, %v1146
      %v1153 = vsel %vm1152, 1, 0
      %v1154 = vadd.s32 %v1150, %v1146
      %v1155 = vadd.s32 %v1151, %v1153
      %v1156 = vadd.s32 %v1155, %v1145
      %v1157 = vadd.s32 %v1156, %v1147
      %v1158 = vand.u32 %v1135, 65535
      %v1159 = vshrl.u32 %v1135, 16
      %v1160 = vand.u32 %v1130, 65535
      %v1161 = vshrl.u32 %v1130, 16
      %v1162 = vmul.u32 %v1158, %v1160
      %v1163 = vmul.u32 %v1158, %v1161
      %v1164 = vmul.u32 %v1159, %v1160
      %v1165 = vmul.u32 %v1159, %v1161
      %v1166 = vshll.u32 %v1163, 16
      %v1167 = vshrl.u32 %v1163, 16
      %v1168 = vshll.u32 %v1164, 16
      %v1169 = vshrl.u32 %v1164, 16
      %vm1170 = vc.u32 %v1162, %v1166
      %v1171 = vsel %vm1170, 1, 0
      %v1172 = vadd.s32 %v1162, %v1166
      %v1173 = vadd.s32 %v1165, %v1171
      %vm1174 = vc.u32 %v1172, %v1168
      %v1175 = vsel %vm1174, 1, 0
      %v1176 = vadd.s32 %v1172, %v1168
      %v1177 = vadd.s32 %v1173, %v1175
      %v1178 = vadd.s32 %v1177, %v1167
      %v1179 = vadd.s32 %v1178, %v1169
      %v1180 = vmul.u32 %v1135, %v1126
      %v1181 = vadd.s32 %v1157, %v1176
      %vm1182 = vc.u32 %v1157, %v1176
      %v1183 = vadd.s32 %v1179, 1
      %v1184 = vsel %vm1182, %v1183, %v1179
      %v1185 = vadd.s32 %v1180, %v1184
      %v1186 = vadd.s32 %v1185, 536870912
      %v1187 = vshrl.u32 %v1186, 30
      %v1188 = vshll.u32 %v1187, 30
      %v1189 = vsub.s32 %v1185, %v1188
      %vm1190 = vcmp.lt.s32.totalorder %v1189, 0
      %v1191 = vsub.s32 0, %v1189
      %v1192 = vsel %vm1190, %v1191, %v1189
      %v1193 = vclz %v1192
      %v1194 = vsub.s32 %v1193, 2
      %vm1195 = vcmp.gt.s32.totalorder 0, %v1194
      %v1196 = vsel %vm1195, 0, %v1194
      %v1197 = vsub.s32 32, %v1196
      %v1198 = vshll.u32 %v1189, %v1196
      %v1199 = vshrl.u32 %v1181, %v1197
      %v1200 = vor.u32 %v1198, %v1199
      %v1201 = vsub.s32 4294967266, %v1196
      %v1202 = vadd.s32 %v1201, 127
      %v1203 = vshll.u32 %v1202, 23
      %v1204 = vor.u32 4788187, %v1203
      %v1205 = vand.u32 2147483647, %v1204
      %v1207 = vcvt.s32.f32 %v1200
      %v1208 = vmul.f32 %v1207, %v1205
      %v1209 = vxor.u32 %v1208, 2147483648
      %v1210 = vsel %vm1089, %v1209, %v1208
      %v1211 = vsub.s32 4, %v1187
      %v1212 = vsel %vm1089, %v1211, %v1187
      %v1213 = vsel %vm1088, %v280, %v1210
      %v1214 = vsel %vm1088, 0, %v1212
      %v1215 = vmul.f32 %v1213, %v1213
      %v1216 = vmul.f32 %v1215, -0.001358992
      %v1217 = vadd.f32 %v1216, 0.041655596
      %v1218 = vmul.f32 %v1215, %v1217
      %v1219 = vadd.f32 %v1218, -0.4999988
      %v1220 = vmul.f32 %v1215, %v1219
      %v1221 = vadd.f32 1.0, %v1220
      %v1222 = vmul.f32 %v1213, %v1213
      %v1223 = vmul.f32 %v1222, -0.00019511016
      %v1224 = vadd.f32 %v1223, 0.008332121
      %v1225 = vmul.f32 %v1222, %v1224
      %v1226 = vadd.f32 %v1225, -0.16666654
      %v1227 = vmul.f32 %v1222, %v1226
      %v1228 = vadd.f32 %v1227, 1.0
      %v1229 = vmul.f32 %v1228, %v1213
      %vm1230 = vweird.f32 %v280
      %v1231 = vadd.s32 %v1214, 3
      %v1232 = vand.u32 %v1231, 3
      %vm1233 = vcmp.lt.s32.totalorder %v1232, 2
      %vm1234 = vcmp.eq.s32.totalorder %v1232, 0
      %v1235 = vxor.u32 %v1229, 2147483648
      %v1236 = vsel %vm1234, %v1221, %v1235
      %vm1237 = vcmp.eq.s32.totalorder %v1232, 2
      %v1238 = vxor.u32 %v1221, 2147483648
      %v1239 = vsel %vm1237, %v1238, %v1229
      %v1240 = vsel %vm1233, %v1236, %v1239
      %v1241 = vsel %vm1230, nan, %v1240
      %v1242 = vand.u32 2147483647, %v283
      %vm1243 = vcmp.le.f32.partialorder %v1242, 0.7853982
      %vm1244 = vcmp.lt.s32.totalorder %v283, 0
      %v1245 = vand.u32 %v283, 2139095040
      %v1246 = vshrl.u32 %v1245, 23
      %v1247 = vsub.s32 %v1246, 127
      %v1248 = vand.u32 2147483647, %v283
      %v1249 = vand.u32 %v1248, 8388607
      %v1250 = vor.u32 %v1249, 8388608
      %v1251 = vsub.s32 0, %v1250
      %v1252 = vadd.s32 %v1247, 1
      %vm1253 = vcmp.gt.s32.totalorder %v1252, 0
      %v1254 = vsel %vm1253, %v1252, 0
      %v1255 = vshrl.u32 %v1254, 5
      %v1256 = vand.u32 %v1254, 31
      %v1257 = vsub.s32 32, %v1256
      %v1258 = vshrl.u32 683565275, %v1257
      %v1259 = vshll.u32 683565275, %v1256
      %v1260 = vshrl.u32 2475754826, %v1257
      %v1261 = vor.u32 %v1259, %v1260
      %v1262 = vshll.u32 2475754826, %v1256
      %v1263 = vshrl.u32 2131351028, %v1257
      %v1264 = vor.u32 %v1262, %v1263
      %v1265 = vshll.u32 2131351028, %v1256
      %v1266 = vshrl.u32 2102212464, %v1257
      %v1267 = vor.u32 %v1265, %v1266
      %v1268 = vshll.u32 2102212464, %v1256
      %v1269 = vshrl.u32 920167782, %v1257
      %v1270 = vor.u32 %v1268, %v1269
      %v1271 = vshll.u32 920167782, %v1256
      %v1272 = vshrl.u32 1326507024, %v1257
      %v1273 = vor.u32 %v1271, %v1272
      %vm1274 = vcmp.lt.s32.totalorder %v1255, 1
      %vm1275 = vcmp.lt.s32.totalorder %v1255, 2
      %vm1276 = vcmp.lt.s32.totalorder %v1255, 3
      %vm1277 = vcmp.lt.s32.totalorder %v1255, 4
      %v1278 = vsel %vm1274, %v1258, %v1261
      %v1279 = vsel %vm1277, %v1267, 2102212464
      %v1280 = vsel %vm1276, %v1264, %v1279
      %v1281 = vsel %vm1275, %v1278, %v1280
      %v1282 = vsel %vm1274, %v1261, %v1264
      %v1283 = vsel %vm1277, %v1270, 920167782
      %v1284 = vsel %vm1276, %v1267, %v1283
      %v1285 = vsel %vm1275, %v1282, %v1284
      %v1286 = vsel %vm1274, %v1264, %v1267
      %v1287 = vsel %vm1277, %v1273, 1326507024
      %v1288 = vsel %vm1276, %v1270, %v1287
      %v1289 = vsel %vm1275, %v1286, %v1288
      %v1290 = vshll.u32 %v1250, 8
      %v1291 = vand.u32 %v1290, 65535
      %v1292 = vshrl.u32 %v1290, 16
      %v1293 = vand.u32 %v1289, 65535
      %v1294 = vshrl.u32 %v1289, 16
      %v1295 = vmul.u32 %v1291, %v1293
      %v1296 = vmul.u32 %v1291, %v1294
      %v1297 = vmul.u32 %v1292, %v1293
      %v1298 = vmul.u32 %v1292, %v1294
      %v1299 = vshll.u32 %v1296, 16
      %v1300 = vshrl.u32 %v1296, 16
      %v1301 = vshll.u32 %v1297, 16
      %v1302 = vshrl.u32 %v1297, 16
      %vm1303 = vc.u32 %v1295, %v1299
      %v1304 = vsel %vm1303, 1, 0
      %v1305 = vadd.s32 %v1295, %v1299
      %v1306 = vadd.s32 %v1298, %v1304
      %vm1307 = vc.u32 %v1305, %v1301
      %v1308 = vsel %vm1307, 1, 0
      %v1309 = vadd.s32 %v1305, %v1301
      %v1310 = vadd.s32 %v1306, %v1308
      %v1311 = vadd.s32 %v1310, %v1300
      %v1312 = vadd.s32 %v1311, %v1302
      %v1313 = vand.u32 %v1290, 65535
      %v1314 = vshrl.u32 %v1290, 16
      %v1315 = vand.u32 %v1285, 65535
      %v1316 = vshrl.u32 %v1285, 16
      %v1317 = vmul.u32 %v1313, %v1315
      %v1318 = vmul.u32 %v1313, %v1316
      %v1319 = vmul.u32 %v1314, %v1315
      %v1320 = vmul.u32 %v1314, %v1316
      %v1321 = vshll.u32 %v1318, 16
      %v1322 = vshrl.u32 %v1318, 16
      %v1323 = vshll.u32 %v1319, 16
      %v1324 = vshrl.u32 %v1319, 16
      %vm1325 = vc.u32 %v1317, %v1321
      %v1326 = vsel %vm1325, 1, 0
      %v1327 = vadd.s32 %v1317, %v1321
      %v1328 = vadd.s32 %v1320, %v1326
      %vm1329 = vc.u32 %v1327, %v1323
      %v1330 = vsel %vm1329, 1, 0
      %v1331 = vadd.s32 %v1327, %v1323
      %v1332 = vadd.s32 %v1328, %v1330
      %v1333 = vadd.s32 %v1332, %v1322
      %v1334 = vadd.s32 %v1333, %v1324
      %v1335 = vmul.u32 %v1290, %v1281
      %v1336 = vadd.s32 %v1312, %v1331
      %vm1337 = vc.u32 %v1312, %v1331
      %v1338 = vadd.s32 %v1334, 1
      %v1339 = vsel %vm1337, %v1338, %v1334
      %v1340 = vadd.s32 %v1335, %v1339
      %v1341 = vadd.s32 %v1340, 536870912
      %v1342 = vshrl.u32 %v1341, 30
      %v1343 = vshll.u32 %v1342, 30
      %v1344 = vsub.s32 %v1340, %v1343
      %vm1345 = vcmp.lt.s32.totalorder %v1344, 0
      %v1346 = vsub.s32 0, %v1344
      %v1347 = vsel %vm1345, %v1346, %v1344
      %v1348 = vclz %v1347
      %v1349 = vsub.s32 %v1348, 2
      %vm1350 = vcmp.gt.s32.totalorder 0, %v1349
      %v1351 = vsel %vm1350, 0, %v1349
      %v1352 = vsub.s32 32, %v1351
      %v1353 = vshll.u32 %v1344, %v1351
      %v1354 = vshrl.u32 %v1336, %v1352
      %v1355 = vor.u32 %v1353, %v1354
      %v1356 = vsub.s32 4294967266, %v1351
      %v1357 = vadd.s32 %v1356, 127
      %v1358 = vshll.u32 %v1357, 23
      %v1359 = vor.u32 4788187, %v1358
      %v1360 = vand.u32 2147483647, %v1359
      %v1362 = vcvt.s32.f32 %v1355
      %v1363 = vmul.f32 %v1362, %v1360
      %v1364 = vxor.u32 %v1363, 2147483648
      %v1365 = vsel %vm1244, %v1364, %v1363
      %v1366 = vsub.s32 4, %v1342
      %v1367 = vsel %vm1244, %v1366, %v1342
      %v1368 = vsel %vm1243, %v283, %v1365
      %v1369 = vsel %vm1243, 0, %v1367
      %v1370 = vmul.f32 %v1368, %v1368
      %v1371 = vmul.f32 %v1370, -0.001358992
      %v1372 = vadd.f32 %v1371, 0.041655596
      %v1373 = vmul.f32 %v1370, %v1372
      %v1374 = vadd.f32 %v1373, -0.4999988
      %v1375 = vmul.f32 %v1370, %v1374
      %v1376 = vadd.f32 1.0, %v1375
      %v1377 = vmul.f32 %v1368, %v1368
      %v1378 = vmul.f32 %v1377, -0.00019511016
      %v1379 = vadd.f32 %v1378, 0.008332121
      %v1380 = vmul.f32 %v1377, %v1379
      %v1381 = vadd.f32 %v1380, -0.16666654
      %v1382 = vmul.f32 %v1377, %v1381
      %v1383 = vadd.f32 %v1382, 1.0
      %v1384 = vmul.f32 %v1383, %v1368
      %vm1385 = vweird.f32 %v283
      %v1386 = vadd.s32 %v1369, 3
      %v1387 = vand.u32 %v1386, 3
      %vm1388 = vcmp.lt.s32.totalorder %v1387, 2
      %vm1389 = vcmp.eq.s32.totalorder %v1387, 0
      %v1390 = vxor.u32 %v1384, 2147483648
      %v1391 = vsel %vm1389, %v1376, %v1390
      %vm1392 = vcmp.eq.s32.totalorder %v1387, 2
      %v1393 = vxor.u32 %v1376, 2147483648
      %v1394 = vsel %vm1392, %v1393, %v1384
      %v1395 = vsel %vm1388, %v1391, %v1394
      %v1396 = vsel %vm1385, nan, %v1395
      %v1397 = vand.u32 2147483647, %v286
      %vm1398 = vcmp.le.f32.partialorder %v1397, 0.7853982
      %vm1399 = vcmp.lt.s32.totalorder %v286, 0
      %v1400 = vand.u32 %v286, 2139095040
      %v1401 = vshrl.u32 %v1400, 23
      %v1402 = vsub.s32 %v1401, 127
      %v1403 = vand.u32 2147483647, %v286
      %v1404 = vand.u32 %v1403, 8388607
      %v1405 = vor.u32 %v1404, 8388608
      %v1406 = vsub.s32 0, %v1405
      %v1407 = vadd.s32 %v1402, 1
      %vm1408 = vcmp.gt.s32.totalorder %v1407, 0
      %v1409 = vsel %vm1408, %v1407, 0
      %v1410 = vshrl.u32 %v1409, 5
      %v1411 = vand.u32 %v1409, 31
      %v1412 = vsub.s32 32, %v1411
      %v1413 = vshrl.u32 683565275, %v1412
      %v1414 = vshll.u32 683565275, %v1411
      %v1415 = vshrl.u32 2475754826, %v1412
      %v1416 = vor.u32 %v1414, %v1415
      %v1417 = vshll.u32 2475754826, %v1411
      %v1418 = vshrl.u32 2131351028, %v1412
      %v1419 = vor.u32 %v1417, %v1418
      %v1420 = vshll.u32 2131351028, %v1411
      %v1421 = vshrl.u32 2102212464, %v1412
      %v1422 = vor.u32 %v1420, %v1421
      %v1423 = vshll.u32 2102212464, %v1411
      %v1424 = vshrl.u32 920167782, %v1412
      %v1425 = vor.u32 %v1423, %v1424
      %v1426 = vshll.u32 920167782, %v1411
      %v1427 = vshrl.u32 1326507024, %v1412
      %v1428 = vor.u32 %v1426, %v1427
      %vm1429 = vcmp.lt.s32.totalorder %v1410, 1
      %vm1430 = vcmp.lt.s32.totalorder %v1410, 2
      %vm1431 = vcmp.lt.s32.totalorder %v1410, 3
      %vm1432 = vcmp.lt.s32.totalorder %v1410, 4
      %v1433 = vsel %vm1429, %v1413, %v1416
      %v1434 = vsel %vm1432, %v1422, 2102212464
      %v1435 = vsel %vm1431, %v1419, %v1434
      %v1436 = vsel %vm1430, %v1433, %v1435
      %v1437 = vsel %vm1429, %v1416, %v1419
      %v1438 = vsel %vm1432, %v1425, 920167782
      %v1439 = vsel %vm1431, %v1422, %v1438
      %v1440 = vsel %vm1430, %v1437, %v1439
      %v1441 = vsel %vm1429, %v1419, %v1422
      %v1442 = vsel %vm1432, %v1428, 1326507024
      %v1443 = vsel %vm1431, %v1425, %v1442
      %v1444 = vsel %vm1430, %v1441, %v1443
      %v1445 = vshll.u32 %v1405, 8
      %v1446 = vand.u32 %v1445, 65535
      %v1447 = vshrl.u32 %v1445, 16
      %v1448 = vand.u32 %v1444, 65535
      %v1449 = vshrl.u32 %v1444, 16
      %v1450 = vmul.u32 %v1446, %v1448
      %v1451 = vmul.u32 %v1446, %v1449
      %v1452 = vmul.u32 %v1447, %v1448
      %v1453 = vmul.u32 %v1447, %v1449
      %v1454 = vshll.u32 %v1451, 16
      %v1455 = vshrl.u32 %v1451, 16
      %v1456 = vshll.u32 %v1452, 16
      %v1457 = vshrl.u32 %v1452, 16
      %vm1458 = vc.u32 %v1450, %v1454
      %v1459 = vsel %vm1458, 1, 0
      %v1460 = vadd.s32 %v1450, %v1454
      %v1461 = vadd.s32 %v1453, %v1459
      %vm1462 = vc.u32 %v1460, %v1456
      %v1463 = vsel %vm1462, 1, 0
      %v1464 = vadd.s32 %v1460, %v1456
      %v1465 = vadd.s32 %v1461, %v1463
      %v1466 = vadd.s32 %v1465, %v1455
      %v1467 = vadd.s32 %v1466, %v1457
      %v1468 = vand.u32 %v1445, 65535
      %v1469 = vshrl.u32 %v1445, 16
      %v1470 = vand.u32 %v1440, 65535
      %v1471 = vshrl.u32 %v1440, 16
      %v1472 = vmul.u32 %v1468, %v1470
      %v1473 = vmul.u32 %v1468, %v1471
      %v1474 = vmul.u32 %v1469, %v1470
      %v1475 = vmul.u32 %v1469, %v1471
      %v1476 = vshll.u32 %v1473, 16
      %v1477 = vshrl.u32 %v1473, 16
      %v1478 = vshll.u32 %v1474, 16
      %v1479 = vshrl.u32 %v1474, 16
      %vm1480 = vc.u32 %v1472, %v1476
      %v1481 = vsel %vm1480, 1, 0
      %v1482 = vadd.s32 %v1472, %v1476
      %v1483 = vadd.s32 %v1475, %v1481
      %vm1484 = vc.u32 %v1482, %v1478
      %v1485 = vsel %vm1484, 1, 0
      %v1486 = vadd.s32 %v1482, %v1478
      %v1487 = vadd.s32 %v1483, %v1485
      %v1488 = vadd.s32 %v1487, %v1477
      %v1489 = vadd.s32 %v1488, %v1479
      %v1490 = vmul.u32 %v1445, %v1436
      %v1491 = vadd.s32 %v1467, %v1486
      %vm1492 = vc.u32 %v1467, %v1486
      %v1493 = vadd.s32 %v1489, 1
      %v1494 = vsel %vm1492, %v1493, %v1489
      %v1495 = vadd.s32 %v1490, %v1494
      %v1496 = vadd.s32 %v1495, 536870912
      %v1497 = vshrl.u32 %v1496, 30
      %v1498 = vshll.u32 %v1497, 30
      %v1499 = vsub.s32 %v1495, %v1498
      %vm1500 = vcmp.lt.s32.totalorder %v1499, 0
      %v1501 = vsub.s32 0, %v1499
      %v1502 = vsel %vm1500, %v1501, %v1499
      %v1503 = vclz %v1502
      %v1504 = vsub.s32 %v1503, 2
      %vm1505 = vcmp.gt.s32.totalorder 0, %v1504
      %v1506 = vsel %vm1505, 0, %v1504
      %v1507 = vsub.s32 32, %v1506
      %v1508 = vshll.u32 %v1499, %v1506
      %v1509 = vshrl.u32 %v1491, %v1507
      %v1510 = vor.u32 %v1508, %v1509
      %v1511 = vsub.s32 4294967266, %v1506
      %v1512 = vadd.s32 %v1511, 127
      %v1513 = vshll.u32 %v1512, 23
      %v1514 = vor.u32 4788187, %v1513
      %v1515 = vand.u32 2147483647, %v1514
      %v1517 = vcvt.s32.f32 %v1510
      %v1518 = vmul.f32 %v1517, %v1515
      %v1519 = vxor.u32 %v1518, 2147483648
      %v1520 = vsel %vm1399, %v1519, %v1518
      %v1521 = vsub.s32 4, %v1497
      %v1522 = vsel %vm1399, %v1521, %v1497
      %v1523 = vsel %vm1398, %v286, %v1520
      %v1524 = vsel %vm1398, 0, %v1522
      %v1525 = vmul.f32 %v1523, %v1523
      %v1526 = vmul.f32 %v1525, -0.001358992
      %v1527 = vadd.f32 %v1526, 0.041655596
      %v1528 = vmul.f32 %v1525, %v1527
      %v1529 = vadd.f32 %v1528, -0.4999988
      %v1530 = vmul.f32 %v1525, %v1529
      %v1531 = vadd.f32 1.0, %v1530
      %v1532 = vmul.f32 %v1523, %v1523
      %v1533 = vmul.f32 %v1532, -0.00019511016
      %v1534 = vadd.f32 %v1533, 0.008332121
      %v1535 = vmul.f32 %v1532, %v1534
      %v1536 = vadd.f32 %v1535, -0.16666654
      %v1537 = vmul.f32 %v1532, %v1536
      %v1538 = vadd.f32 %v1537, 1.0
      %v1539 = vmul.f32 %v1538, %v1523
      %vm1540 = vweird.f32 %v286
      %v1541 = vadd.s32 %v1524, 3
      %v1542 = vand.u32 %v1541, 3
      %vm1543 = vcmp.lt.s32.totalorder %v1542, 2
      %vm1544 = vcmp.eq.s32.totalorder %v1542, 0
      %v1545 = vxor.u32 %v1539, 2147483648
      %v1546 = vsel %vm1544, %v1531, %v1545
      %vm1547 = vcmp.eq.s32.totalorder %v1542, 2
      %v1548 = vxor.u32 %v1531, 2147483648
      %v1549 = vsel %vm1547, %v1548, %v1539
      %v1550 = vsel %vm1543, %v1546, %v1549
      %v1551 = vsel %vm1540, nan, %v1550
      %v1552 = vand.u32 2147483647, %v289
      %vm1553 = vcmp.le.f32.partialorder %v1552, 0.7853982
      %vm1554 = vcmp.lt.s32.totalorder %v289, 0
      %v1555 = vand.u32 %v289, 2139095040
      %v1556 = vshrl.u32 %v1555, 23
      %v1557 = vsub.s32 %v1556, 127
      %v1558 = vand.u32 2147483647, %v289
      %v1559 = vand.u32 %v1558, 8388607
      %v1560 = vor.u32 %v1559, 8388608
      %v1561 = vsub.s32 0, %v1560
      %v1562 = vadd.s32 %v1557, 1
      %vm1563 = vcmp.gt.s32.totalorder %v1562, 0
      %v1564 = vsel %vm1563, %v1562, 0
      %v1565 = vshrl.u32 %v1564, 5
      %v1566 = vand.u32 %v1564, 31
      %v1567 = vsub.s32 32, %v1566
      %v1568 = vshrl.u32 683565275, %v1567
      %v1569 = vshll.u32 683565275, %v1566
      %v1570 = vshrl.u32 2475754826, %v1567
      %v1571 = vor.u32 %v1569, %v1570
      %v1572 = vshll.u32 2475754826, %v1566
      %v1573 = vshrl.u32 2131351028, %v1567
      %v1574 = vor.u32 %v1572, %v1573
      %v1575 = vshll.u32 2131351028, %v1566
      %v1576 = vshrl.u32 2102212464, %v1567
      %v1577 = vor.u32 %v1575, %v1576
      %v1578 = vshll.u32 2102212464, %v1566
      %v1579 = vshrl.u32 920167782, %v1567
      %v1580 = vor.u32 %v1578, %v1579
      %v1581 = vshll.u32 920167782, %v1566
      %v1582 = vshrl.u32 1326507024, %v1567
      %v1583 = vor.u32 %v1581, %v1582
      %vm1584 = vcmp.lt.s32.totalorder %v1565, 1
      %vm1585 = vcmp.lt.s32.totalorder %v1565, 2
      %vm1586 = vcmp.lt.s32.totalorder %v1565, 3
      %vm1587 = vcmp.lt.s32.totalorder %v1565, 4
      %v1588 = vsel %vm1584, %v1568, %v1571
      %v1589 = vsel %vm1587, %v1577, 2102212464
      %v1590 = vsel %vm1586, %v1574, %v1589
      %v1591 = vsel %vm1585, %v1588, %v1590
      %v1592 = vsel %vm1584, %v1571, %v1574
      %v1593 = vsel %vm1587, %v1580, 920167782
      %v1594 = vsel %vm1586, %v1577, %v1593
      %v1595 = vsel %vm1585, %v1592, %v1594
      %v1596 = vsel %vm1584, %v1574, %v1577
      %v1597 = vsel %vm1587, %v1583, 1326507024
      %v1598 = vsel %vm1586, %v1580, %v1597
      %v1599 = vsel %vm1585, %v1596, %v1598
      %v1600 = vshll.u32 %v1560, 8
      %v1601 = vand.u32 %v1600, 65535
      %v1602 = vshrl.u32 %v1600, 16
      %v1603 = vand.u32 %v1599, 65535
      %v1604 = vshrl.u32 %v1599, 16
      %v1605 = vmul.u32 %v1601, %v1603
      %v1606 = vmul.u32 %v1601, %v1604
      %v1607 = vmul.u32 %v1602, %v1603
      %v1608 = vmul.u32 %v1602, %v1604
      %v1609 = vshll.u32 %v1606, 16
      %v1610 = vshrl.u32 %v1606, 16
      %v1611 = vshll.u32 %v1607, 16
      %v1612 = vshrl.u32 %v1607, 16
      %vm1613 = vc.u32 %v1605, %v1609
      %v1614 = vsel %vm1613, 1, 0
      %v1615 = vadd.s32 %v1605, %v1609
      %v1616 = vadd.s32 %v1608, %v1614
      %vm1617 = vc.u32 %v1615, %v1611
      %v1618 = vsel %vm1617, 1, 0
      %v1619 = vadd.s32 %v1615, %v1611
      %v1620 = vadd.s32 %v1616, %v1618
      %v1621 = vadd.s32 %v1620, %v1610
      %v1622 = vadd.s32 %v1621, %v1612
      %v1623 = vand.u32 %v1600, 65535
      %v1624 = vshrl.u32 %v1600, 16
      %v1625 = vand.u32 %v1595, 65535
      %v1626 = vshrl.u32 %v1595, 16
      %v1627 = vmul.u32 %v1623, %v1625
      %v1628 = vmul.u32 %v1623, %v1626
      %v1629 = vmul.u32 %v1624, %v1625
      %v1630 = vmul.u32 %v1624, %v1626
      %v1631 = vshll.u32 %v1628, 16
      %v1632 = vshrl.u32 %v1628, 16
      %v1633 = vshll.u32 %v1629, 16
      %v1634 = vshrl.u32 %v1629, 16
      %vm1635 = vc.u32 %v1627, %v1631
      %v1636 = vsel %vm1635, 1, 0
      %v1637 = vadd.s32 %v1627, %v1631
      %v1638 = vadd.s32 %v1630, %v1636
      %vm1639 = vc.u32 %v1637, %v1633
      %v1640 = vsel %vm1639, 1, 0
      %v1641 = vadd.s32 %v1637, %v1633
      %v1642 = vadd.s32 %v1638, %v1640
      %v1643 = vadd.s32 %v1642, %v1632
      %v1644 = vadd.s32 %v1643, %v1634
      %v1645 = vmul.u32 %v1600, %v1591
      %v1646 = vadd.s32 %v1622, %v1641
      %vm1647 = vc.u32 %v1622, %v1641
      %v1648 = vadd.s32 %v1644, 1
      %v1649 = vsel %vm1647, %v1648, %v1644
      %v1650 = vadd.s32 %v1645, %v1649
      %v1651 = vadd.s32 %v1650, 536870912
      %v1652 = vshrl.u32 %v1651, 30
      %v1653 = vshll.u32 %v1652, 30
      %v1654 = vsub.s32 %v1650, %v1653
      %vm1655 = vcmp.lt.s32.totalorder %v1654, 0
      %v1656 = vsub.s32 0, %v1654
      %v1657 = vsel %vm1655, %v1656, %v1654
      %v1658 = vclz %v1657
      %v1659 = vsub.s32 %v1658, 2
      %vm1660 = vcmp.gt.s32.totalorder 0, %v1659
      %v1661 = vsel %vm1660, 0, %v1659
      %v1662 = vsub.s32 32, %v1661
      %v1663 = vshll.u32 %v1654, %v1661
      %v1664 = vshrl.u32 %v1646, %v1662
      %v1665 = vor.u32 %v1663, %v1664
      %v1666 = vsub.s32 4294967266, %v1661
      %v1667 = vadd.s32 %v1666, 127
      %v1668 = vshll.u32 %v1667, 23
      %v1669 = vor.u32 4788187, %v1668
      %v1670 = vand.u32 2147483647, %v1669
      %v1672 = vcvt.s32.f32 %v1665
      %v1673 = vmul.f32 %v1672, %v1670
      %v1674 = vxor.u32 %v1673, 2147483648
      %v1675 = vsel %vm1554, %v1674, %v1673
      %v1676 = vsub.s32 4, %v1652
      %v1677 = vsel %vm1554, %v1676, %v1652
      %v1678 = vsel %vm1553, %v289, %v1675
      %v1679 = vsel %vm1553, 0, %v1677
      %v1680 = vmul.f32 %v1678, %v1678
      %v1681 = vmul.f32 %v1680, -0.001358992
      %v1682 = vadd.f32 %v1681, 0.041655596
      %v1683 = vmul.f32 %v1680, %v1682
      %v1684 = vadd.f32 %v1683, -0.4999988
      %v1685 = vmul.f32 %v1680, %v1684
      %v1686 = vadd.f32 1.0, %v1685
      %v1687 = vmul.f32 %v1678, %v1678
      %v1688 = vmul.f32 %v1687, -0.00019511016
      %v1689 = vadd.f32 %v1688, 0.008332121
      %v1690 = vmul.f32 %v1687, %v1689
      %v1691 = vadd.f32 %v1690, -0.16666654
      %v1692 = vmul.f32 %v1687, %v1691
      %v1693 = vadd.f32 %v1692, 1.0
      %v1694 = vmul.f32 %v1693, %v1678
      %vm1695 = vweird.f32 %v289
      %v1696 = vadd.s32 %v1679, 3
      %v1697 = vand.u32 %v1696, 3
      %vm1698 = vcmp.lt.s32.totalorder %v1697, 2
      %vm1699 = vcmp.eq.s32.totalorder %v1697, 0
      %v1700 = vxor.u32 %v1694, 2147483648
      %v1701 = vsel %vm1699, %v1686, %v1700
      %vm1702 = vcmp.eq.s32.totalorder %v1697, 2
      %v1703 = vxor.u32 %v1686, 2147483648
      %v1704 = vsel %vm1702, %v1703, %v1694
      %v1705 = vsel %vm1698, %v1701, %v1704
      %v1706 = vsel %vm1695, nan, %v1705
      %v1707 = vand.u32 2147483647, %v292
      %vm1708 = vcmp.le.f32.partialorder %v1707, 0.7853982
      %vm1709 = vcmp.lt.s32.totalorder %v292, 0
      %v1710 = vand.u32 %v292, 2139095040
      %v1711 = vshrl.u32 %v1710, 23
      %v1712 = vsub.s32 %v1711, 127
      %v1713 = vand.u32 2147483647, %v292
      %v1714 = vand.u32 %v1713, 8388607
      %v1715 = vor.u32 %v1714, 8388608
      %v1716 = vsub.s32 0, %v1715
      %v1717 = vadd.s32 %v1712, 1
      %vm1718 = vcmp.gt.s32.totalorder %v1717, 0
      %v1719 = vsel %vm1718, %v1717, 0
      %v1720 = vshrl.u32 %v1719, 5
      %v1721 = vand.u32 %v1719, 31
      %v1722 = vsub.s32 32, %v1721
      %v1723 = vshrl.u32 683565275, %v1722
      %v1724 = vshll.u32 683565275, %v1721
      %v1725 = vshrl.u32 2475754826, %v1722
      %v1726 = vor.u32 %v1724, %v1725
      %v1727 = vshll.u32 2475754826, %v1721
      %v1728 = vshrl.u32 2131351028, %v1722
      %v1729 = vor.u32 %v1727, %v1728
      %v1730 = vshll.u32 2131351028, %v1721
      %v1731 = vshrl.u32 2102212464, %v1722
      %v1732 = vor.u32 %v1730, %v1731
      %v1733 = vshll.u32 2102212464, %v1721
      %v1734 = vshrl.u32 920167782, %v1722
      %v1735 = vor.u32 %v1733, %v1734
      %v1736 = vshll.u32 920167782, %v1721
      %v1737 = vshrl.u32 1326507024, %v1722
      %v1738 = vor.u32 %v1736, %v1737
      %vm1739 = vcmp.lt.s32.totalorder %v1720, 1
      %vm1740 = vcmp.lt.s32.totalorder %v1720, 2
      %vm1741 = vcmp.lt.s32.totalorder %v1720, 3
      %vm1742 = vcmp.lt.s32.totalorder %v1720, 4
      %v1743 = vsel %vm1739, %v1723, %v1726
      %v1744 = vsel %vm1742, %v1732, 2102212464
      %v1745 = vsel %vm1741, %v1729, %v1744
      %v1746 = vsel %vm1740, %v1743, %v1745
      %v1747 = vsel %vm1739, %v1726, %v1729
      %v1748 = vsel %vm1742, %v1735, 920167782
      %v1749 = vsel %vm1741, %v1732, %v1748
      %v1750 = vsel %vm1740, %v1747, %v1749
      %v1751 = vsel %vm1739, %v1729, %v1732
      %v1752 = vsel %vm1742, %v1738, 1326507024
      %v1753 = vsel %vm1741, %v1735, %v1752
      %v1754 = vsel %vm1740, %v1751, %v1753
      %v1755 = vshll.u32 %v1715, 8
      %v1756 = vand.u32 %v1755, 65535
      %v1757 = vshrl.u32 %v1755, 16
      %v1758 = vand.u32 %v1754, 65535
      %v1759 = vshrl.u32 %v1754, 16
      %v1760 = vmul.u32 %v1756, %v1758
      %v1761 = vmul.u32 %v1756, %v1759
      %v1762 = vmul.u32 %v1757, %v1758
      %v1763 = vmul.u32 %v1757, %v1759
      %v1764 = vshll.u32 %v1761, 16
      %v1765 = vshrl.u32 %v1761, 16
      %v1766 = vshll.u32 %v1762, 16
      %v1767 = vshrl.u32 %v1762, 16
      %vm1768 = vc.u32 %v1760, %v1764
      %v1769 = vsel %vm1768, 1, 0
      %v1770 = vadd.s32 %v1760, %v1764
      %v1771 = vadd.s32 %v1763, %v1769
      %vm1772 = vc.u32 %v1770, %v1766
      %v1773 = vsel %vm1772, 1, 0
      %v1774 = vadd.s32 %v1770, %v1766
      %v1775 = vadd.s32 %v1771, %v1773
      %v1776 = vadd.s32 %v1775, %v1765
      %v1777 = vadd.s32 %v1776, %v1767
      %v1778 = vand.u32 %v1755, 65535
      %v1779 = vshrl.u32 %v1755, 16
      %v1780 = vand.u32 %v1750, 65535
      %v1781 = vshrl.u32 %v1750, 16
      %v1782 = vmul.u32 %v1778, %v1780
      %v1783 = vmul.u32 %v1778, %v1781
      %v1784 = vmul.u32 %v1779, %v1780
      %v1785 = vmul.u32 %v1779, %v1781
      %v1786 = vshll.u32 %v1783, 16
      %v1787 = vshrl.u32 %v1783, 16
      %v1788 = vshll.u32 %v1784, 16
      %v1789 = vshrl.u32 %v1784, 16
      %vm1790 = vc.u32 %v1782, %v1786
      %v1791 = vsel %vm1790, 1, 0
      %v1792 = vadd.s32 %v1782, %v1786
      %v1793 = vadd.s32 %v1785, %v1791
      %vm1794 = vc.u32 %v1792, %v1788
      %v1795 = vsel %vm1794, 1, 0
      %v1796 = vadd.s32 %v1792, %v1788
      %v1797 = vadd.s32 %v1793, %v1795
      %v1798 = vadd.s32 %v1797, %v1787
      %v1799 = vadd.s32 %v1798, %v1789
      %v1800 = vmul.u32 %v1755, %v1746
      %v1801 = vadd.s32 %v1777, %v1796
      %vm1802 = vc.u32 %v1777, %v1796
      %v1803 = vadd.s32 %v1799, 1
      %v1804 = vsel %vm1802, %v1803, %v1799
      %v1805 = vadd.s32 %v1800, %v1804
      %v1806 = vadd.s32 %v1805, 536870912
      %v1807 = vshrl.u32 %v1806, 30
      %v1808 = vshll.u32 %v1807, 30
      %v1809 = vsub.s32 %v1805, %v1808
      %vm1810 = vcmp.lt.s32.totalorder %v1809, 0
      %v1811 = vsub.s32 0, %v1809
      %v1812 = vsel %vm1810, %v1811, %v1809
      %v1813 = vclz %v1812
      %v1814 = vsub.s32 %v1813, 2
      %vm1815 = vcmp.gt.s32.totalorder 0, %v1814
      %v1816 = vsel %vm1815, 0, %v1814
      %v1817 = vsub.s32 32, %v1816
      %v1818 = vshll.u32 %v1809, %v1816
      %v1819 = vshrl.u32 %v1801, %v1817
      %v1820 = vor.u32 %v1818, %v1819
      %v1821 = vsub.s32 4294967266, %v1816
      %v1822 = vadd.s32 %v1821, 127
      %v1823 = vshll.u32 %v1822, 23
      %v1824 = vor.u32 4788187, %v1823
      %v1825 = vand.u32 2147483647, %v1824
      %v1827 = vcvt.s32.f32 %v1820
      %v1828 = vmul.f32 %v1827, %v1825
      %v1829 = vxor.u32 %v1828, 2147483648
      %v1830 = vsel %vm1709, %v1829, %v1828
      %v1831 = vsub.s32 4, %v1807
      %v1832 = vsel %vm1709, %v1831, %v1807
      %v1833 = vsel %vm1708, %v292, %v1830
      %v1834 = vsel %vm1708, 0, %v1832
      %v1835 = vmul.f32 %v1833, %v1833
      %v1836 = vmul.f32 %v1835, -0.001358992
      %v1837 = vadd.f32 %v1836, 0.041655596
      %v1838 = vmul.f32 %v1835, %v1837
      %v1839 = vadd.f32 %v1838, -0.4999988
      %v1840 = vmul.f32 %v1835, %v1839
      %v1841 = vadd.f32 1.0, %v1840
      %v1842 = vmul.f32 %v1833, %v1833
      %v1843 = vmul.f32 %v1842, -0.00019511016
      %v1844 = vadd.f32 %v1843, 0.008332121
      %v1845 = vmul.f32 %v1842, %v1844
      %v1846 = vadd.f32 %v1845, -0.16666654
      %v1847 = vmul.f32 %v1842, %v1846
      %v1848 = vadd.f32 %v1847, 1.0
      %v1849 = vmul.f32 %v1848, %v1833
      %vm1850 = vweird.f32 %v292
      %v1851 = vadd.s32 %v1834, 3
      %v1852 = vand.u32 %v1851, 3
      %vm1853 = vcmp.lt.s32.totalorder %v1852, 2
      %vm1854 = vcmp.eq.s32.totalorder %v1852, 0
      %v1855 = vxor.u32 %v1849, 2147483648
      %v1856 = vsel %vm1854, %v1841, %v1855
      %vm1857 = vcmp.eq.s32.totalorder %v1852, 2
      %v1858 = vxor.u32 %v1841, 2147483648
      %v1859 = vsel %vm1857, %v1858, %v1849
      %v1860 = vsel %vm1853, %v1856, %v1859
      %v1861 = vsel %vm1850, nan, %v1860
      %v1862 = vand.u32 2147483647, %v295
      %vm1863 = vcmp.le.f32.partialorder %v1862, 0.7853982
      %vm1864 = vcmp.lt.s32.totalorder %v295, 0
      %v1865 = vand.u32 %v295, 2139095040
      %v1866 = vshrl.u32 %v1865, 23
      %v1867 = vsub.s32 %v1866, 127
      %v1868 = vand.u32 2147483647, %v295
      %v1869 = vand.u32 %v1868, 8388607
      %v1870 = vor.u32 %v1869, 8388608
      %v1871 = vsub.s32 0, %v1870
      %v1872 = vadd.s32 %v1867, 1
      %vm1873 = vcmp.gt.s32.totalorder %v1872, 0
      %v1874 = vsel %vm1873, %v1872, 0
      %v1875 = vshrl.u32 %v1874, 5
      %v1876 = vand.u32 %v1874, 31
      %v1877 = vsub.s32 32, %v1876
      %v1878 = vshrl.u32 683565275, %v1877
      %v1879 = vshll.u32 683565275, %v1876
      %v1880 = vshrl.u32 2475754826, %v1877
      %v1881 = vor.u32 %v1879, %v1880
      %v1882 = vshll.u32 2475754826, %v1876
      %v1883 = vshrl.u32 2131351028, %v1877
      %v1884 = vor.u32 %v1882, %v1883
      %v1885 = vshll.u32 2131351028, %v1876
      %v1886 = vshrl.u32 2102212464, %v1877
      %v1887 = vor.u32 %v1885, %v1886
      %v1888 = vshll.u32 2102212464, %v1876
      %v1889 = vshrl.u32 920167782, %v1877
      %v1890 = vor.u32 %v1888, %v1889
      %v1891 = vshll.u32 920167782, %v1876
      %v1892 = vshrl.u32 1326507024, %v1877
      %v1893 = vor.u32 %v1891, %v1892
      %vm1894 = vcmp.lt.s32.totalorder %v1875, 1
      %vm1895 = vcmp.lt.s32.totalorder %v1875, 2
      %vm1896 = vcmp.lt.s32.totalorder %v1875, 3
      %vm1897 = vcmp.lt.s32.totalorder %v1875, 4
      %v1898 = vsel %vm1894, %v1878, %v1881
      %v1899 = vsel %vm1897, %v1887, 2102212464
      %v1900 = vsel %vm1896, %v1884, %v1899
      %v1901 = vsel %vm1895, %v1898, %v1900
      %v1902 = vsel %vm1894, %v1881, %v1884
      %v1903 = vsel %vm1897, %v1890, 920167782
      %v1904 = vsel %vm1896, %v1887, %v1903
      %v1905 = vsel %vm1895, %v1902, %v1904
      %v1906 = vsel %vm1894, %v1884, %v1887
      %v1907 = vsel %vm1897, %v1893, 1326507024
      %v1908 = vsel %vm1896, %v1890, %v1907
      %v1909 = vsel %vm1895, %v1906, %v1908
      %v1910 = vshll.u32 %v1870, 8
      %v1911 = vand.u32 %v1910, 65535
      %v1912 = vshrl.u32 %v1910, 16
      %v1913 = vand.u32 %v1909, 65535
      %v1914 = vshrl.u32 %v1909, 16
      %v1915 = vmul.u32 %v1911, %v1913
      %v1916 = vmul.u32 %v1911, %v1914
      %v1917 = vmul.u32 %v1912, %v1913
      %v1918 = vmul.u32 %v1912, %v1914
      %v1919 = vshll.u32 %v1916, 16
      %v1920 = vshrl.u32 %v1916, 16
      %v1921 = vshll.u32 %v1917, 16
      %v1922 = vshrl.u32 %v1917, 16
      %vm1923 = vc.u32 %v1915, %v1919
      %v1924 = vsel %vm1923, 1, 0
      %v1925 = vadd.s32 %v1915, %v1919
      %v1926 = vadd.s32 %v1918, %v1924
      %vm1927 = vc.u32 %v1925, %v1921
      %v1928 = vsel %vm1927, 1, 0
      %v1929 = vadd.s32 %v1925, %v1921
      %v1930 = vadd.s32 %v1926, %v1928
      %v1931 = vadd.s32 %v1930, %v1920
      %v1932 = vadd.s32 %v1931, %v1922
      %v1933 = vand.u32 %v1910, 65535
      %v1934 = vshrl.u32 %v1910, 16
      %v1935 = vand.u32 %v1905, 65535
      %v1936 = vshrl.u32 %v1905, 16
      %v1937 = vmul.u32 %v1933, %v1935
      %v1938 = vmul.u32 %v1933, %v1936
      %v1939 = vmul.u32 %v1934, %v1935
      %v1940 = vmul.u32 %v1934, %v1936
      %v1941 = vshll.u32 %v1938, 16
      %v1942 = vshrl.u32 %v1938, 16
      %v1943 = vshll.u32 %v1939, 16
      %v1944 = vshrl.u32 %v1939, 16
      %vm1945 = vc.u32 %v1937, %v1941
      %v1946 = vsel %vm1945, 1, 0
      %v1947 = vadd.s32 %v1937, %v1941
      %v1948 = vadd.s32 %v1940, %v1946
      %vm1949 = vc.u32 %v1947, %v1943
      %v1950 = vsel %vm1949, 1, 0
      %v1951 = vadd.s32 %v1947, %v1943
      %v1952 = vadd.s32 %v1948, %v1950
      %v1953 = vadd.s32 %v1952, %v1942
      %v1954 = vadd.s32 %v1953, %v1944
      %v1955 = vmul.u32 %v1910, %v1901
      %v1956 = vadd.s32 %v1932, %v1951
      %vm1957 = vc.u32 %v1932, %v1951
      %v1958 = vadd.s32 %v1954, 1
      %v1959 = vsel %vm1957, %v1958, %v1954
      %v1960 = vadd.s32 %v1955, %v1959
      %v1961 = vadd.s32 %v1960, 536870912
      %v1962 = vshrl.u32 %v1961, 30
      %v1963 = vshll.u32 %v1962, 30
      %v1964 = vsub.s32 %v1960, %v1963
      %vm1965 = vcmp.lt.s32.totalorder %v1964, 0
      %v1966 = vsub.s32 0, %v1964
      %v1967 = vsel %vm1965, %v1966, %v1964
      %v1968 = vclz %v1967
      %v1969 = vsub.s32 %v1968, 2
      %vm1970 = vcmp.gt.s32.totalorder 0, %v1969
      %v1971 = vsel %vm1970, 0, %v1969
      %v1972 = vsub.s32 32, %v1971
      %v1973 = vshll.u32 %v1964, %v1971
      %v1974 = vshrl.u32 %v1956, %v1972
      %v1975 = vor.u32 %v1973, %v1974
      %v1976 = vsub.s32 4294967266, %v1971
      %v1977 = vadd.s32 %v1976, 127
      %v1978 = vshll.u32 %v1977, 23
      %v1979 = vor.u32 4788187, %v1978
      %v1980 = vand.u32 2147483647, %v1979
      %v1982 = vcvt.s32.f32 %v1975
      %v1983 = vmul.f32 %v1982, %v1980
      %v1984 = vxor.u32 %v1983, 2147483648
      %v1985 = vsel %vm1864, %v1984, %v1983
      %v1986 = vsub.s32 4, %v1962
      %v1987 = vsel %vm1864, %v1986, %v1962
      %v1988 = vsel %vm1863, %v295, %v1985
      %v1989 = vsel %vm1863, 0, %v1987
      %v1990 = vmul.f32 %v1988, %v1988
      %v1991 = vmul.f32 %v1990, -0.001358992
      %v1992 = vadd.f32 %v1991, 0.041655596
      %v1993 = vmul.f32 %v1990, %v1992
      %v1994 = vadd.f32 %v1993, -0.4999988
      %v1995 = vmul.f32 %v1990, %v1994
      %v1996 = vadd.f32 1.0, %v1995
      %v1997 = vmul.f32 %v1988, %v1988
      %v1998 = vmul.f32 %v1997, -0.00019511016
      %v1999 = vadd.f32 %v1998, 0.008332121
      %v2000 = vmul.f32 %v1997, %v1999
      %v2001 = vadd.f32 %v2000, -0.16666654
      %v2002 = vmul.f32 %v1997, %v2001
      %v2003 = vadd.f32 %v2002, 1.0
      %v2004 = vmul.f32 %v2003, %v1988
      %vm2005 = vweird.f32 %v295
      %v2006 = vadd.s32 %v1989, 3
      %v2007 = vand.u32 %v2006, 3
      %vm2008 = vcmp.lt.s32.totalorder %v2007, 2
      %vm2009 = vcmp.eq.s32.totalorder %v2007, 0
      %v2010 = vxor.u32 %v2004, 2147483648
      %v2011 = vsel %vm2009, %v1996, %v2010
      %vm2012 = vcmp.eq.s32.totalorder %v2007, 2
      %v2013 = vxor.u32 %v1996, 2147483648
      %v2014 = vsel %vm2012, %v2013, %v2004
      %v2015 = vsel %vm2008, %v2011, %v2014
      %v2016 = vsel %vm2005, nan, %v2015
      %v2017 = vand.u32 2147483647, %v298
      %vm2018 = vcmp.le.f32.partialorder %v2017, 0.7853982
      %vm2019 = vcmp.lt.s32.totalorder %v298, 0
      %v2020 = vand.u32 %v298, 2139095040
      %v2021 = vshrl.u32 %v2020, 23
      %v2022 = vsub.s32 %v2021, 127
      %v2023 = vand.u32 2147483647, %v298
      %v2024 = vand.u32 %v2023, 8388607
      %v2025 = vor.u32 %v2024, 8388608
      %v2026 = vsub.s32 0, %v2025
      %v2027 = vadd.s32 %v2022, 1
      %vm2028 = vcmp.gt.s32.totalorder %v2027, 0
      %v2029 = vsel %vm2028, %v2027, 0
      %v2030 = vshrl.u32 %v2029, 5
      %v2031 = vand.u32 %v2029, 31
      %v2032 = vsub.s32 32, %v2031
      %v2033 = vshrl.u32 683565275, %v2032
      %v2034 = vshll.u32 683565275, %v2031
      %v2035 = vshrl.u32 2475754826, %v2032
      %v2036 = vor.u32 %v2034, %v2035
      %v2037 = vshll.u32 2475754826, %v2031
      %v2038 = vshrl.u32 2131351028, %v2032
      %v2039 = vor.u32 %v2037, %v2038
      %v2040 = vshll.u32 2131351028, %v2031
      %v2041 = vshrl.u32 2102212464, %v2032
      %v2042 = vor.u32 %v2040, %v2041
      %v2043 = vshll.u32 2102212464, %v2031
      %v2044 = vshrl.u32 920167782, %v2032
      %v2045 = vor.u32 %v2043, %v2044
      %v2046 = vshll.u32 920167782, %v2031
      %v2047 = vshrl.u32 1326507024, %v2032
      %v2048 = vor.u32 %v2046, %v2047
      %vm2049 = vcmp.lt.s32.totalorder %v2030, 1
      %vm2050 = vcmp.lt.s32.totalorder %v2030, 2
      %vm2051 = vcmp.lt.s32.totalorder %v2030, 3
      %vm2052 = vcmp.lt.s32.totalorder %v2030, 4
      %v2053 = vsel %vm2049, %v2033, %v2036
      %v2054 = vsel %vm2052, %v2042, 2102212464
      %v2055 = vsel %vm2051, %v2039, %v2054
      %v2056 = vsel %vm2050, %v2053, %v2055
      %v2057 = vsel %vm2049, %v2036, %v2039
      %v2058 = vsel %vm2052, %v2045, 920167782
      %v2059 = vsel %vm2051, %v2042, %v2058
      %v2060 = vsel %vm2050, %v2057, %v2059
      %v2061 = vsel %vm2049, %v2039, %v2042
      %v2062 = vsel %vm2052, %v2048, 1326507024
      %v2063 = vsel %vm2051, %v2045, %v2062
      %v2064 = vsel %vm2050, %v2061, %v2063
      %v2065 = vshll.u32 %v2025, 8
      %v2066 = vand.u32 %v2065, 65535
      %v2067 = vshrl.u32 %v2065, 16
      %v2068 = vand.u32 %v2064, 65535
      %v2069 = vshrl.u32 %v2064, 16
      %v2070 = vmul.u32 %v2066, %v2068
      %v2071 = vmul.u32 %v2066, %v2069
      %v2072 = vmul.u32 %v2067, %v2068
      %v2073 = vmul.u32 %v2067, %v2069
      %v2074 = vshll.u32 %v2071, 16
      %v2075 = vshrl.u32 %v2071, 16
      %v2076 = vshll.u32 %v2072, 16
      %v2077 = vshrl.u32 %v2072, 16
      %vm2078 = vc.u32 %v2070, %v2074
      %v2079 = vsel %vm2078, 1, 0
      %v2080 = vadd.s32 %v2070, %v2074
      %v2081 = vadd.s32 %v2073, %v2079
      %vm2082 = vc.u32 %v2080, %v2076
      %v2083 = vsel %vm2082, 1, 0
      %v2084 = vadd.s32 %v2080, %v2076
      %v2085 = vadd.s32 %v2081, %v2083
      %v2086 = vadd.s32 %v2085, %v2075
      %v2087 = vadd.s32 %v2086, %v2077
      %v2088 = vand.u32 %v2065, 65535
      %v2089 = vshrl.u32 %v2065, 16
      %v2090 = vand.u32 %v2060, 65535
      %v2091 = vshrl.u32 %v2060, 16
      %v2092 = vmul.u32 %v2088, %v2090
      %v2093 = vmul.u32 %v2088, %v2091
      %v2094 = vmul.u32 %v2089, %v2090
      %v2095 = vmul.u32 %v2089, %v2091
      %v2096 = vshll.u32 %v2093, 16
      %v2097 = vshrl.u32 %v2093, 16
      %v2098 = vshll.u32 %v2094, 16
      %v2099 = vshrl.u32 %v2094, 16
      %vm2100 = vc.u32 %v2092, %v2096
      %v2101 = vsel %vm2100, 1, 0
      %v2102 = vadd.s32 %v2092, %v2096
      %v2103 = vadd.s32 %v2095, %v2101
      %vm2104 = vc.u32 %v2102, %v2098
      %v2105 = vsel %vm2104, 1, 0
      %v2106 = vadd.s32 %v2102, %v2098
      %v2107 = vadd.s32 %v2103, %v2105
      %v2108 = vadd.s32 %v2107, %v2097
      %v2109 = vadd.s32 %v2108, %v2099
      %v2110 = vmul.u32 %v2065, %v2056
      %v2111 = vadd.s32 %v2087, %v2106
      %vm2112 = vc.u32 %v2087, %v2106
      %v2113 = vadd.s32 %v2109, 1
      %v2114 = vsel %vm2112, %v2113, %v2109
      %v2115 = vadd.s32 %v2110, %v2114
      %v2116 = vadd.s32 %v2115, 536870912
      %v2117 = vshrl.u32 %v2116, 30
      %v2118 = vshll.u32 %v2117, 30
      %v2119 = vsub.s32 %v2115, %v2118
      %vm2120 = vcmp.lt.s32.totalorder %v2119, 0
      %v2121 = vsub.s32 0, %v2119
      %v2122 = vsel %vm2120, %v2121, %v2119
      %v2123 = vclz %v2122
      %v2124 = vsub.s32 %v2123, 2
      %vm2125 = vcmp.gt.s32.totalorder 0, %v2124
      %v2126 = vsel %vm2125, 0, %v2124
      %v2127 = vsub.s32 32, %v2126
      %v2128 = vshll.u32 %v2119, %v2126
      %v2129 = vshrl.u32 %v2111, %v2127
      %v2130 = vor.u32 %v2128, %v2129
      %v2131 = vsub.s32 4294967266, %v2126
      %v2132 = vadd.s32 %v2131, 127
      %v2133 = vshll.u32 %v2132, 23
      %v2134 = vor.u32 4788187, %v2133
      %v2135 = vand.u32 2147483647, %v2134
      %v2137 = vcvt.s32.f32 %v2130
      %v2138 = vmul.f32 %v2137, %v2135
      %v2139 = vxor.u32 %v2138, 2147483648
      %v2140 = vsel %vm2019, %v2139, %v2138
      %v2141 = vsub.s32 4, %v2117
      %v2142 = vsel %vm2019, %v2141, %v2117
      %v2143 = vsel %vm2018, %v298, %v2140
      %v2144 = vsel %vm2018, 0, %v2142
      %v2145 = vmul.f32 %v2143, %v2143
      %v2146 = vmul.f32 %v2145, -0.001358992
      %v2147 = vadd.f32 %v2146, 0.041655596
      %v2148 = vmul.f32 %v2145, %v2147
      %v2149 = vadd.f32 %v2148, -0.4999988
      %v2150 = vmul.f32 %v2145, %v2149
      %v2151 = vadd.f32 1.0, %v2150
      %v2152 = vmul.f32 %v2143, %v2143
      %v2153 = vmul.f32 %v2152, -0.00019511016
      %v2154 = vadd.f32 %v2153, 0.008332121
      %v2155 = vmul.f32 %v2152, %v2154
      %v2156 = vadd.f32 %v2155, -0.16666654
      %v2157 = vmul.f32 %v2152, %v2156
      %v2158 = vadd.f32 %v2157, 1.0
      %v2159 = vmul.f32 %v2158, %v2143
      %vm2160 = vweird.f32 %v298
      %v2161 = vadd.s32 %v2144, 3
      %v2162 = vand.u32 %v2161, 3
      %vm2163 = vcmp.lt.s32.totalorder %v2162, 2
      %vm2164 = vcmp.eq.s32.totalorder %v2162, 0
      %v2165 = vxor.u32 %v2159, 2147483648
      %v2166 = vsel %vm2164, %v2151, %v2165
      %vm2167 = vcmp.eq.s32.totalorder %v2162, 2
      %v2168 = vxor.u32 %v2151, 2147483648
      %v2169 = vsel %vm2167, %v2168, %v2159
      %v2170 = vsel %vm2163, %v2166, %v2169
      %v2171 = vsel %vm2160, nan, %v2170
      %v2172 = vand.u32 2147483647, %v301
      %vm2173 = vcmp.le.f32.partialorder %v2172, 0.7853982
      %vm2174 = vcmp.lt.s32.totalorder %v301, 0
      %v2175 = vand.u32 %v301, 2139095040
      %v2176 = vshrl.u32 %v2175, 23
      %v2177 = vsub.s32 %v2176, 127
      %v2178 = vand.u32 2147483647, %v301
      %v2179 = vand.u32 %v2178, 8388607
      %v2180 = vor.u32 %v2179, 8388608
      %v2181 = vsub.s32 0, %v2180
      %v2182 = vadd.s32 %v2177, 1
      %vm2183 = vcmp.gt.s32.totalorder %v2182, 0
      %v2184 = vsel %vm2183, %v2182, 0
      %v2185 = vshrl.u32 %v2184, 5
      %v2186 = vand.u32 %v2184, 31
      %v2187 = vsub.s32 32, %v2186
      %v2188 = vshrl.u32 683565275, %v2187
      %v2189 = vshll.u32 683565275, %v2186
      %v2190 = vshrl.u32 2475754826, %v2187
      %v2191 = vor.u32 %v2189, %v2190
      %v2192 = vshll.u32 2475754826, %v2186
      %v2193 = vshrl.u32 2131351028, %v2187
      %v2194 = vor.u32 %v2192, %v2193
      %v2195 = vshll.u32 2131351028, %v2186
      %v2196 = vshrl.u32 2102212464, %v2187
      %v2197 = vor.u32 %v2195, %v2196
      %v2198 = vshll.u32 2102212464, %v2186
      %v2199 = vshrl.u32 920167782, %v2187
      %v2200 = vor.u32 %v2198, %v2199
      %v2201 = vshll.u32 920167782, %v2186
      %v2202 = vshrl.u32 1326507024, %v2187
      %v2203 = vor.u32 %v2201, %v2202
      %vm2204 = vcmp.lt.s32.totalorder %v2185, 1
      %vm2205 = vcmp.lt.s32.totalorder %v2185, 2
      %vm2206 = vcmp.lt.s32.totalorder %v2185, 3
      %vm2207 = vcmp.lt.s32.totalorder %v2185, 4
      %v2208 = vsel %vm2204, %v2188, %v2191
      %v2209 = vsel %vm2207, %v2197, 2102212464
      %v2210 = vsel %vm2206, %v2194, %v2209
      %v2211 = vsel %vm2205, %v2208, %v2210
      %v2212 = vsel %vm2204, %v2191, %v2194
      %v2213 = vsel %vm2207, %v2200, 920167782
      %v2214 = vsel %vm2206, %v2197, %v2213
      %v2215 = vsel %vm2205, %v2212, %v2214
      %v2216 = vsel %vm2204, %v2194, %v2197
      %v2217 = vsel %vm2207, %v2203, 1326507024
      %v2218 = vsel %vm2206, %v2200, %v2217
      %v2219 = vsel %vm2205, %v2216, %v2218
      %v2220 = vshll.u32 %v2180, 8
      %v2221 = vand.u32 %v2220, 65535
      %v2222 = vshrl.u32 %v2220, 16
      %v2223 = vand.u32 %v2219, 65535
      %v2224 = vshrl.u32 %v2219, 16
      %v2225 = vmul.u32 %v2221, %v2223
      %v2226 = vmul.u32 %v2221, %v2224
      %v2227 = vmul.u32 %v2222, %v2223
      %v2228 = vmul.u32 %v2222, %v2224
      %v2229 = vshll.u32 %v2226, 16
      %v2230 = vshrl.u32 %v2226, 16
      %v2231 = vshll.u32 %v2227, 16
      %v2232 = vshrl.u32 %v2227, 16
      %vm2233 = vc.u32 %v2225, %v2229
      %v2234 = vsel %vm2233, 1, 0
      %v2235 = vadd.s32 %v2225, %v2229
      %v2236 = vadd.s32 %v2228, %v2234
      %vm2237 = vc.u32 %v2235, %v2231
      %v2238 = vsel %vm2237, 1, 0
      %v2239 = vadd.s32 %v2235, %v2231
      %v2240 = vadd.s32 %v2236, %v2238
      %v2241 = vadd.s32 %v2240, %v2230
      %v2242 = vadd.s32 %v2241, %v2232
      %v2243 = vand.u32 %v2220, 65535
      %v2244 = vshrl.u32 %v2220, 16
      %v2245 = vand.u32 %v2215, 65535
      %v2246 = vshrl.u32 %v2215, 16
      %v2247 = vmul.u32 %v2243, %v2245
      %v2248 = vmul.u32 %v2243, %v2246
      %v2249 = vmul.u32 %v2244, %v2245
      %v2250 = vmul.u32 %v2244, %v2246
      %v2251 = vshll.u32 %v2248, 16
      %v2252 = vshrl.u32 %v2248, 16
      %v2253 = vshll.u32 %v2249, 16
      %v2254 = vshrl.u32 %v2249, 16
      %vm2255 = vc.u32 %v2247, %v2251
      %v2256 = vsel %vm2255, 1, 0
      %v2257 = vadd.s32 %v2247, %v2251
      %v2258 = vadd.s32 %v2250, %v2256
      %vm2259 = vc.u32 %v2257, %v2253
      %v2260 = vsel %vm2259, 1, 0
      %v2261 = vadd.s32 %v2257, %v2253
      %v2262 = vadd.s32 %v2258, %v2260
      %v2263 = vadd.s32 %v2262, %v2252
      %v2264 = vadd.s32 %v2263, %v2254
      %v2265 = vmul.u32 %v2220, %v2211
      %v2266 = vadd.s32 %v2242, %v2261
      %vm2267 = vc.u32 %v2242, %v2261
      %v2268 = vadd.s32 %v2264, 1
      %v2269 = vsel %vm2267, %v2268, %v2264
      %v2270 = vadd.s32 %v2265, %v2269
      %v2271 = vadd.s32 %v2270, 536870912
      %v2272 = vshrl.u32 %v2271, 30
      %v2273 = vshll.u32 %v2272, 30
      %v2274 = vsub.s32 %v2270, %v2273
      %vm2275 = vcmp.lt.s32.totalorder %v2274, 0
      %v2276 = vsub.s32 0, %v2274
      %v2277 = vsel %vm2275, %v2276, %v2274
      %v2278 = vclz %v2277
      %v2279 = vsub.s32 %v2278, 2
      %vm2280 = vcmp.gt.s32.totalorder 0, %v2279
      %v2281 = vsel %vm2280, 0, %v2279
      %v2282 = vsub.s32 32, %v2281
      %v2283 = vshll.u32 %v2274, %v2281
      %v2284 = vshrl.u32 %v2266, %v2282
      %v2285 = vor.u32 %v2283, %v2284
      %v2286 = vsub.s32 4294967266, %v2281
      %v2287 = vadd.s32 %v2286, 127
      %v2288 = vshll.u32 %v2287, 23
      %v2289 = vor.u32 4788187, %v2288
      %v2290 = vand.u32 2147483647, %v2289
      %v2292 = vcvt.s32.f32 %v2285
      %v2293 = vmul.f32 %v2292, %v2290
      %v2294 = vxor.u32 %v2293, 2147483648
      %v2295 = vsel %vm2174, %v2294, %v2293
      %v2296 = vsub.s32 4, %v2272
      %v2297 = vsel %vm2174, %v2296, %v2272
      %v2298 = vsel %vm2173, %v301, %v2295
      %v2299 = vsel %vm2173, 0, %v2297
      %v2300 = vmul.f32 %v2298, %v2298
      %v2301 = vmul.f32 %v2300, -0.001358992
      %v2302 = vadd.f32 %v2301, 0.041655596
      %v2303 = vmul.f32 %v2300, %v2302
      %v2304 = vadd.f32 %v2303, -0.4999988
      %v2305 = vmul.f32 %v2300, %v2304
      %v2306 = vadd.f32 1.0, %v2305
      %v2307 = vmul.f32 %v2298, %v2298
      %v2308 = vmul.f32 %v2307, -0.00019511016
      %v2309 = vadd.f32 %v2308, 0.008332121
      %v2310 = vmul.f32 %v2307, %v2309
      %v2311 = vadd.f32 %v2310, -0.16666654
      %v2312 = vmul.f32 %v2307, %v2311
      %v2313 = vadd.f32 %v2312, 1.0
      %v2314 = vmul.f32 %v2313, %v2298
      %vm2315 = vweird.f32 %v301
      %v2316 = vadd.s32 %v2299, 3
      %v2317 = vand.u32 %v2316, 3
      %vm2318 = vcmp.lt.s32.totalorder %v2317, 2
      %vm2319 = vcmp.eq.s32.totalorder %v2317, 0
      %v2320 = vxor.u32 %v2314, 2147483648
      %v2321 = vsel %vm2319, %v2306, %v2320
      %vm2322 = vcmp.eq.s32.totalorder %v2317, 2
      %v2323 = vxor.u32 %v2306, 2147483648
      %v2324 = vsel %vm2322, %v2323, %v2314
      %v2325 = vsel %vm2318, %v2321, %v2324
      %v2326 = vsel %vm2315, nan, %v2325
      %v2327 = vand.u32 2147483647, %v304
      %vm2328 = vcmp.le.f32.partialorder %v2327, 0.7853982
      %vm2329 = vcmp.lt.s32.totalorder %v304, 0
      %v2330 = vand.u32 %v304, 2139095040
      %v2331 = vshrl.u32 %v2330, 23
      %v2332 = vsub.s32 %v2331, 127
      %v2333 = vand.u32 2147483647, %v304
      %v2334 = vand.u32 %v2333, 8388607
      %v2335 = vor.u32 %v2334, 8388608
      %v2336 = vsub.s32 0, %v2335
      %v2337 = vadd.s32 %v2332, 1
      %vm2338 = vcmp.gt.s32.totalorder %v2337, 0
      %v2339 = vsel %vm2338, %v2337, 0
      %v2340 = vshrl.u32 %v2339, 5
      %v2341 = vand.u32 %v2339, 31
      %v2342 = vsub.s32 32, %v2341
      %v2343 = vshrl.u32 683565275, %v2342
      %v2344 = vshll.u32 683565275, %v2341
      %v2345 = vshrl.u32 2475754826, %v2342
      %v2346 = vor.u32 %v2344, %v2345
      %v2347 = vshll.u32 2475754826, %v2341
      %v2348 = vshrl.u32 2131351028, %v2342
      %v2349 = vor.u32 %v2347, %v2348
      %v2350 = vshll.u32 2131351028, %v2341
      %v2351 = vshrl.u32 2102212464, %v2342
      %v2352 = vor.u32 %v2350, %v2351
      %v2353 = vshll.u32 2102212464, %v2341
      %v2354 = vshrl.u32 920167782, %v2342
      %v2355 = vor.u32 %v2353, %v2354
      %v2356 = vshll.u32 920167782, %v2341
      %v2357 = vshrl.u32 1326507024, %v2342
      %v2358 = vor.u32 %v2356, %v2357
      %vm2359 = vcmp.lt.s32.totalorder %v2340, 1
      %vm2360 = vcmp.lt.s32.totalorder %v2340, 2
      %vm2361 = vcmp.lt.s32.totalorder %v2340, 3
      %vm2362 = vcmp.lt.s32.totalorder %v2340, 4
      %v2363 = vsel %vm2359, %v2343, %v2346
      %v2364 = vsel %vm2362, %v2352, 2102212464
      %v2365 = vsel %vm2361, %v2349, %v2364
      %v2366 = vsel %vm2360, %v2363, %v2365
      %v2367 = vsel %vm2359, %v2346, %v2349
      %v2368 = vsel %vm2362, %v2355, 920167782
      %v2369 = vsel %vm2361, %v2352, %v2368
      %v2370 = vsel %vm2360, %v2367, %v2369
      %v2371 = vsel %vm2359, %v2349, %v2352
      %v2372 = vsel %vm2362, %v2358, 1326507024
      %v2373 = vsel %vm2361, %v2355, %v2372
      %v2374 = vsel %vm2360, %v2371, %v2373
      %v2375 = vshll.u32 %v2335, 8
      %v2376 = vand.u32 %v2375, 65535
      %v2377 = vshrl.u32 %v2375, 16
      %v2378 = vand.u32 %v2374, 65535
      %v2379 = vshrl.u32 %v2374, 16
      %v2380 = vmul.u32 %v2376, %v2378
      %v2381 = vmul.u32 %v2376, %v2379
      %v2382 = vmul.u32 %v2377, %v2378
      %v2383 = vmul.u32 %v2377, %v2379
      %v2384 = vshll.u32 %v2381, 16
      %v2385 = vshrl.u32 %v2381, 16
      %v2386 = vshll.u32 %v2382, 16
      %v2387 = vshrl.u32 %v2382, 16
      %vm2388 = vc.u32 %v2380, %v2384
      %v2389 = vsel %vm2388, 1, 0
      %v2390 = vadd.s32 %v2380, %v2384
      %v2391 = vadd.s32 %v2383, %v2389
      %vm2392 = vc.u32 %v2390, %v2386
      %v2393 = vsel %vm2392, 1, 0
      %v2394 = vadd.s32 %v2390, %v2386
      %v2395 = vadd.s32 %v2391, %v2393
      %v2396 = vadd.s32 %v2395, %v2385
      %v2397 = vadd.s32 %v2396, %v2387
      %v2398 = vand.u32 %v2375, 65535
      %v2399 = vshrl.u32 %v2375, 16
      %v2400 = vand.u32 %v2370, 65535
      %v2401 = vshrl.u32 %v2370, 16
      %v2402 = vmul.u32 %v2398, %v2400
      %v2403 = vmul.u32 %v2398, %v2401
      %v2404 = vmul.u32 %v2399, %v2400
      %v2405 = vmul.u32 %v2399, %v2401
      %v2406 = vshll.u32 %v2403, 16
      %v2407 = vshrl.u32 %v2403, 16
      %v2408 = vshll.u32 %v2404, 16
      %v2409 = vshrl.u32 %v2404, 16
      %vm2410 = vc.u32 %v2402, %v2406
      %v2411 = vsel %vm2410, 1, 0
      %v2412 = vadd.s32 %v2402, %v2406
      %v2413 = vadd.s32 %v2405, %v2411
      %vm2414 = vc.u32 %v2412, %v2408
      %v2415 = vsel %vm2414, 1, 0
      %v2416 = vadd.s32 %v2412, %v2408
      %v2417 = vadd.s32 %v2413, %v2415
      %v2418 = vadd.s32 %v2417, %v2407
      %v2419 = vadd.s32 %v2418, %v2409
      %v2420 = vmul.u32 %v2375, %v2366
      %v2421 = vadd.s32 %v2397, %v2416
      %vm2422 = vc.u32 %v2397, %v2416
      %v2423 = vadd.s32 %v2419, 1
      %v2424 = vsel %vm2422, %v2423, %v2419
      %v2425 = vadd.s32 %v2420, %v2424
      %v2426 = vadd.s32 %v2425, 536870912
      %v2427 = vshrl.u32 %v2426, 30
      %v2428 = vshll.u32 %v2427, 30
      %v2429 = vsub.s32 %v2425, %v2428
      %vm2430 = vcmp.lt.s32.totalorder %v2429, 0
      %v2431 = vsub.s32 0, %v2429
      %v2432 = vsel %vm2430, %v2431, %v2429
      %v2433 = vclz %v2432
      %v2434 = vsub.s32 %v2433, 2
      %vm2435 = vcmp.gt.s32.totalorder 0, %v2434
      %v2436 = vsel %vm2435, 0, %v2434
      %v2437 = vsub.s32 32, %v2436
      %v2438 = vshll.u32 %v2429, %v2436
      %v2439 = vshrl.u32 %v2421, %v2437
      %v2440 = vor.u32 %v2438, %v2439
      %v2441 = vsub.s32 4294967266, %v2436
      %v2442 = vadd.s32 %v2441, 127
      %v2443 = vshll.u32 %v2442, 23
      %v2444 = vor.u32 4788187, %v2443
      %v2445 = vand.u32 2147483647, %v2444
      %v2447 = vcvt.s32.f32 %v2440
      %v2448 = vmul.f32 %v2447, %v2445
      %v2449 = vxor.u32 %v2448, 2147483648
      %v2450 = vsel %vm2329, %v2449, %v2448
      %v2451 = vsub.s32 4, %v2427
      %v2452 = vsel %vm2329, %v2451, %v2427
      %v2453 = vsel %vm2328, %v304, %v2450
      %v2454 = vsel %vm2328, 0, %v2452
      %v2455 = vmul.f32 %v2453, %v2453
      %v2456 = vmul.f32 %v2455, -0.001358992
      %v2457 = vadd.f32 %v2456, 0.041655596
      %v2458 = vmul.f32 %v2455, %v2457
      %v2459 = vadd.f32 %v2458, -0.4999988
      %v2460 = vmul.f32 %v2455, %v2459
      %v2461 = vadd.f32 1.0, %v2460
      %v2462 = vmul.f32 %v2453, %v2453
      %v2463 = vmul.f32 %v2462, -0.00019511016
      %v2464 = vadd.f32 %v2463, 0.008332121
      %v2465 = vmul.f32 %v2462, %v2464
      %v2466 = vadd.f32 %v2465, -0.16666654
      %v2467 = vmul.f32 %v2462, %v2466
      %v2468 = vadd.f32 %v2467, 1.0
      %v2469 = vmul.f32 %v2468, %v2453
      %vm2470 = vweird.f32 %v304
      %v2471 = vadd.s32 %v2454, 3
      %v2472 = vand.u32 %v2471, 3
      %vm2473 = vcmp.lt.s32.totalorder %v2472, 2
      %vm2474 = vcmp.eq.s32.totalorder %v2472, 0
      %v2475 = vxor.u32 %v2469, 2147483648
      %v2476 = vsel %vm2474, %v2461, %v2475
      %vm2477 = vcmp.eq.s32.totalorder %v2472, 2
      %v2478 = vxor.u32 %v2461, 2147483648
      %v2479 = vsel %vm2477, %v2478, %v2469
      %v2480 = vsel %vm2473, %v2476, %v2479
      %v2481 = vsel %vm2470, nan, %v2480
      %v2482 = vand.u32 2147483647, %v307
      %vm2483 = vcmp.le.f32.partialorder %v2482, 0.7853982
      %vm2484 = vcmp.lt.s32.totalorder %v307, 0
      %v2485 = vand.u32 %v307, 2139095040
      %v2486 = vshrl.u32 %v2485, 23
      %v2487 = vsub.s32 %v2486, 127
      %v2488 = vand.u32 2147483647, %v307
      %v2489 = vand.u32 %v2488, 8388607
      %v2490 = vor.u32 %v2489, 8388608
      %v2491 = vsub.s32 0, %v2490
      %v2492 = vadd.s32 %v2487, 1
      %vm2493 = vcmp.gt.s32.totalorder %v2492, 0
      %v2494 = vsel %vm2493, %v2492, 0
      %v2495 = vshrl.u32 %v2494, 5
      %v2496 = vand.u32 %v2494, 31
      %v2497 = vsub.s32 32, %v2496
      %v2498 = vshrl.u32 683565275, %v2497
      %v2499 = vshll.u32 683565275, %v2496
      %v2500 = vshrl.u32 2475754826, %v2497
      %v2501 = vor.u32 %v2499, %v2500
      %v2502 = vshll.u32 2475754826, %v2496
      %v2503 = vshrl.u32 2131351028, %v2497
      %v2504 = vor.u32 %v2502, %v2503
      %v2505 = vshll.u32 2131351028, %v2496
      %v2506 = vshrl.u32 2102212464, %v2497
      %v2507 = vor.u32 %v2505, %v2506
      %v2508 = vshll.u32 2102212464, %v2496
      %v2509 = vshrl.u32 920167782, %v2497
      %v2510 = vor.u32 %v2508, %v2509
      %v2511 = vshll.u32 920167782, %v2496
      %v2512 = vshrl.u32 1326507024, %v2497
      %v2513 = vor.u32 %v2511, %v2512
      %vm2514 = vcmp.lt.s32.totalorder %v2495, 1
      %vm2515 = vcmp.lt.s32.totalorder %v2495, 2
      %vm2516 = vcmp.lt.s32.totalorder %v2495, 3
      %vm2517 = vcmp.lt.s32.totalorder %v2495, 4
      %v2518 = vsel %vm2514, %v2498, %v2501
      %v2519 = vsel %vm2517, %v2507, 2102212464
      %v2520 = vsel %vm2516, %v2504, %v2519
      %v2521 = vsel %vm2515, %v2518, %v2520
      %v2522 = vsel %vm2514, %v2501, %v2504
      %v2523 = vsel %vm2517, %v2510, 920167782
      %v2524 = vsel %vm2516, %v2507, %v2523
      %v2525 = vsel %vm2515, %v2522, %v2524
      %v2526 = vsel %vm2514, %v2504, %v2507
      %v2527 = vsel %vm2517, %v2513, 1326507024
      %v2528 = vsel %vm2516, %v2510, %v2527
      %v2529 = vsel %vm2515, %v2526, %v2528
      %v2530 = vshll.u32 %v2490, 8
      %v2531 = vand.u32 %v2530, 65535
      %v2532 = vshrl.u32 %v2530, 16
      %v2533 = vand.u32 %v2529, 65535
      %v2534 = vshrl.u32 %v2529, 16
      %v2535 = vmul.u32 %v2531, %v2533
      %v2536 = vmul.u32 %v2531, %v2534
      %v2537 = vmul.u32 %v2532, %v2533
      %v2538 = vmul.u32 %v2532, %v2534
      %v2539 = vshll.u32 %v2536, 16
      %v2540 = vshrl.u32 %v2536, 16
      %v2541 = vshll.u32 %v2537, 16
      %v2542 = vshrl.u32 %v2537, 16
      %vm2543 = vc.u32 %v2535, %v2539
      %v2544 = vsel %vm2543, 1, 0
      %v2545 = vadd.s32 %v2535, %v2539
      %v2546 = vadd.s32 %v2538, %v2544
      %vm2547 = vc.u32 %v2545, %v2541
      %v2548 = vsel %vm2547, 1, 0
      %v2549 = vadd.s32 %v2545, %v2541
      %v2550 = vadd.s32 %v2546, %v2548
      %v2551 = vadd.s32 %v2550, %v2540
      %v2552 = vadd.s32 %v2551, %v2542
      %v2553 = vand.u32 %v2530, 65535
      %v2554 = vshrl.u32 %v2530, 16
      %v2555 = vand.u32 %v2525, 65535
      %v2556 = vshrl.u32 %v2525, 16
      %v2557 = vmul.u32 %v2553, %v2555
      %v2558 = vmul.u32 %v2553, %v2556
      %v2559 = vmul.u32 %v2554, %v2555
      %v2560 = vmul.u32 %v2554, %v2556
      %v2561 = vshll.u32 %v2558, 16
      %v2562 = vshrl.u32 %v2558, 16
      %v2563 = vshll.u32 %v2559, 16
      %v2564 = vshrl.u32 %v2559, 16
      %vm2565 = vc.u32 %v2557, %v2561
      %v2566 = vsel %vm2565, 1, 0
      %v2567 = vadd.s32 %v2557, %v2561
      %v2568 = vadd.s32 %v2560, %v2566
      %vm2569 = vc.u32 %v2567, %v2563
      %v2570 = vsel %vm2569, 1, 0
      %v2571 = vadd.s32 %v2567, %v2563
      %v2572 = vadd.s32 %v2568, %v2570
      %v2573 = vadd.s32 %v2572, %v2562
      %v2574 = vadd.s32 %v2573, %v2564
      %v2575 = vmul.u32 %v2530, %v2521
      %v2576 = vadd.s32 %v2552, %v2571
      %vm2577 = vc.u32 %v2552, %v2571
      %v2578 = vadd.s32 %v2574, 1
      %v2579 = vsel %vm2577, %v2578, %v2574
      %v2580 = vadd.s32 %v2575, %v2579
      %v2581 = vadd.s32 %v2580, 536870912
      %v2582 = vshrl.u32 %v2581, 30
      %v2583 = vshll.u32 %v2582, 30
      %v2584 = vsub.s32 %v2580, %v2583
      %vm2585 = vcmp.lt.s32.totalorder %v2584, 0
      %v2586 = vsub.s32 0, %v2584
      %v2587 = vsel %vm2585, %v2586, %v2584
      %v2588 = vclz %v2587
      %v2589 = vsub.s32 %v2588, 2
      %vm2590 = vcmp.gt.s32.totalorder 0, %v2589
      %v2591 = vsel %vm2590, 0, %v2589
      %v2592 = vsub.s32 32, %v2591
      %v2593 = vshll.u32 %v2584, %v2591
      %v2594 = vshrl.u32 %v2576, %v2592
      %v2595 = vor.u32 %v2593, %v2594
      %v2596 = vsub.s32 4294967266, %v2591
      %v2597 = vadd.s32 %v2596, 127
      %v2598 = vshll.u32 %v2597, 23
      %v2599 = vor.u32 4788187, %v2598
      %v2600 = vand.u32 2147483647, %v2599
      %v2602 = vcvt.s32.f32 %v2595
      %v2603 = vmul.f32 %v2602, %v2600
      %v2604 = vxor.u32 %v2603, 2147483648
      %v2605 = vsel %vm2484, %v2604, %v2603
      %v2606 = vsub.s32 4, %v2582
      %v2607 = vsel %vm2484, %v2606, %v2582
      %v2608 = vsel %vm2483, %v307, %v2605
      %v2609 = vsel %vm2483, 0, %v2607
      %v2610 = vmul.f32 %v2608, %v2608
      %v2611 = vmul.f32 %v2610, -0.001358992
      %v2612 = vadd.f32 %v2611, 0.041655596
      %v2613 = vmul.f32 %v2610, %v2612
      %v2614 = vadd.f32 %v2613, -0.4999988
      %v2615 = vmul.f32 %v2610, %v2614
      %v2616 = vadd.f32 1.0, %v2615
      %v2617 = vmul.f32 %v2608, %v2608
      %v2618 = vmul.f32 %v2617, -0.00019511016
      %v2619 = vadd.f32 %v2618, 0.008332121
      %v2620 = vmul.f32 %v2617, %v2619
      %v2621 = vadd.f32 %v2620, -0.16666654
      %v2622 = vmul.f32 %v2617, %v2621
      %v2623 = vadd.f32 %v2622, 1.0
      %v2624 = vmul.f32 %v2623, %v2608
      %vm2625 = vweird.f32 %v307
      %v2626 = vadd.s32 %v2609, 3
      %v2627 = vand.u32 %v2626, 3
      %vm2628 = vcmp.lt.s32.totalorder %v2627, 2
      %vm2629 = vcmp.eq.s32.totalorder %v2627, 0
      %v2630 = vxor.u32 %v2624, 2147483648
      %v2631 = vsel %vm2629, %v2616, %v2630
      %vm2632 = vcmp.eq.s32.totalorder %v2627, 2
      %v2633 = vxor.u32 %v2616, 2147483648
      %v2634 = vsel %vm2632, %v2633, %v2624
      %v2635 = vsel %vm2628, %v2631, %v2634
      %v2636 = vsel %vm2625, nan, %v2635
      %v2637 = vand.u32 2147483647, %v310
      %vm2638 = vcmp.le.f32.partialorder %v2637, 0.7853982
      %vm2639 = vcmp.lt.s32.totalorder %v310, 0
      %v2640 = vand.u32 %v310, 2139095040
      %v2641 = vshrl.u32 %v2640, 23
      %v2642 = vsub.s32 %v2641, 127
      %v2643 = vand.u32 2147483647, %v310
      %v2644 = vand.u32 %v2643, 8388607
      %v2645 = vor.u32 %v2644, 8388608
      %v2646 = vsub.s32 0, %v2645
      %v2647 = vadd.s32 %v2642, 1
      %vm2648 = vcmp.gt.s32.totalorder %v2647, 0
      %v2649 = vsel %vm2648, %v2647, 0
      %v2650 = vshrl.u32 %v2649, 5
      %v2651 = vand.u32 %v2649, 31
      %v2652 = vsub.s32 32, %v2651
      %v2653 = vshrl.u32 683565275, %v2652
      %v2654 = vshll.u32 683565275, %v2651
      %v2655 = vshrl.u32 2475754826, %v2652
      %v2656 = vor.u32 %v2654, %v2655
      %v2657 = vshll.u32 2475754826, %v2651
      %v2658 = vshrl.u32 2131351028, %v2652
      %v2659 = vor.u32 %v2657, %v2658
      %v2660 = vshll.u32 2131351028, %v2651
      %v2661 = vshrl.u32 2102212464, %v2652
      %v2662 = vor.u32 %v2660, %v2661
      %v2663 = vshll.u32 2102212464, %v2651
      %v2664 = vshrl.u32 920167782, %v2652
      %v2665 = vor.u32 %v2663, %v2664
      %v2666 = vshll.u32 920167782, %v2651
      %v2667 = vshrl.u32 1326507024, %v2652
      %v2668 = vor.u32 %v2666, %v2667
      %vm2669 = vcmp.lt.s32.totalorder %v2650, 1
      %vm2670 = vcmp.lt.s32.totalorder %v2650, 2
      %vm2671 = vcmp.lt.s32.totalorder %v2650, 3
      %vm2672 = vcmp.lt.s32.totalorder %v2650, 4
      %v2673 = vsel %vm2669, %v2653, %v2656
      %v2674 = vsel %vm2672, %v2662, 2102212464
      %v2675 = vsel %vm2671, %v2659, %v2674
      %v2676 = vsel %vm2670, %v2673, %v2675
      %v2677 = vsel %vm2669, %v2656, %v2659
      %v2678 = vsel %vm2672, %v2665, 920167782
      %v2679 = vsel %vm2671, %v2662, %v2678
      %v2680 = vsel %vm2670, %v2677, %v2679
      %v2681 = vsel %vm2669, %v2659, %v2662
      %v2682 = vsel %vm2672, %v2668, 1326507024
      %v2683 = vsel %vm2671, %v2665, %v2682
      %v2684 = vsel %vm2670, %v2681, %v2683
      %v2685 = vshll.u32 %v2645, 8
      %v2686 = vand.u32 %v2685, 65535
      %v2687 = vshrl.u32 %v2685, 16
      %v2688 = vand.u32 %v2684, 65535
      %v2689 = vshrl.u32 %v2684, 16
      %v2690 = vmul.u32 %v2686, %v2688
      %v2691 = vmul.u32 %v2686, %v2689
      %v2692 = vmul.u32 %v2687, %v2688
      %v2693 = vmul.u32 %v2687, %v2689
      %v2694 = vshll.u32 %v2691, 16
      %v2695 = vshrl.u32 %v2691, 16
      %v2696 = vshll.u32 %v2692, 16
      %v2697 = vshrl.u32 %v2692, 16
      %vm2698 = vc.u32 %v2690, %v2694
      %v2699 = vsel %vm2698, 1, 0
      %v2700 = vadd.s32 %v2690, %v2694
      %v2701 = vadd.s32 %v2693, %v2699
      %vm2702 = vc.u32 %v2700, %v2696
      %v2703 = vsel %vm2702, 1, 0
      %v2704 = vadd.s32 %v2700, %v2696
      %v2705 = vadd.s32 %v2701, %v2703
      %v2706 = vadd.s32 %v2705, %v2695
      %v2707 = vadd.s32 %v2706, %v2697
      %v2708 = vand.u32 %v2685, 65535
      %v2709 = vshrl.u32 %v2685, 16
      %v2710 = vand.u32 %v2680, 65535
      %v2711 = vshrl.u32 %v2680, 16
      %v2712 = vmul.u32 %v2708, %v2710
      %v2713 = vmul.u32 %v2708, %v2711
      %v2714 = vmul.u32 %v2709, %v2710
      %v2715 = vmul.u32 %v2709, %v2711
      %v2716 = vshll.u32 %v2713, 16
      %v2717 = vshrl.u32 %v2713, 16
      %v2718 = vshll.u32 %v2714, 16
      %v2719 = vshrl.u32 %v2714, 16
      %vm2720 = vc.u32 %v2712, %v2716
      %v2721 = vsel %vm2720, 1, 0
      %v2722 = vadd.s32 %v2712, %v2716
      %v2723 = vadd.s32 %v2715, %v2721
      %vm2724 = vc.u32 %v2722, %v2718
      %v2725 = vsel %vm2724, 1, 0
      %v2726 = vadd.s32 %v2722, %v2718
      %v2727 = vadd.s32 %v2723, %v2725
      %v2728 = vadd.s32 %v2727, %v2717
      %v2729 = vadd.s32 %v2728, %v2719
      %v2730 = vmul.u32 %v2685, %v2676
      %v2731 = vadd.s32 %v2707, %v2726
      %vm2732 = vc.u32 %v2707, %v2726
      %v2733 = vadd.s32 %v2729, 1
      %v2734 = vsel %vm2732, %v2733, %v2729
      %v2735 = vadd.s32 %v2730, %v2734
      %v2736 = vadd.s32 %v2735, 536870912
      %v2737 = vshrl.u32 %v2736, 30
      %v2738 = vshll.u32 %v2737, 30
      %v2739 = vsub.s32 %v2735, %v2738
      %vm2740 = vcmp.lt.s32.totalorder %v2739, 0
      %v2741 = vsub.s32 0, %v2739
      %v2742 = vsel %vm2740, %v2741, %v2739
      %v2743 = vclz %v2742
      %v2744 = vsub.s32 %v2743, 2
      %vm2745 = vcmp.gt.s32.totalorder 0, %v2744
      %v2746 = vsel %vm2745, 0, %v2744
      %v2747 = vsub.s32 32, %v2746
      %v2748 = vshll.u32 %v2739, %v2746
      %v2749 = vshrl.u32 %v2731, %v2747
      %v2750 = vor.u32 %v2748, %v2749
      %v2751 = vsub.s32 4294967266, %v2746
      %v2752 = vadd.s32 %v2751, 127
      %v2753 = vshll.u32 %v2752, 23
      %v2754 = vor.u32 4788187, %v2753
      %v2755 = vand.u32 2147483647, %v2754
      %v2757 = vcvt.s32.f32 %v2750
      %v2758 = vmul.f32 %v2757, %v2755
      %v2759 = vxor.u32 %v2758, 2147483648
      %v2760 = vsel %vm2639, %v2759, %v2758
      %v2761 = vsub.s32 4, %v2737
      %v2762 = vsel %vm2639, %v2761, %v2737
      %v2763 = vsel %vm2638, %v310, %v2760
      %v2764 = vsel %vm2638, 0, %v2762
      %v2765 = vmul.f32 %v2763, %v2763
      %v2766 = vmul.f32 %v2765, -0.001358992
      %v2767 = vadd.f32 %v2766, 0.041655596
      %v2768 = vmul.f32 %v2765, %v2767
      %v2769 = vadd.f32 %v2768, -0.4999988
      %v2770 = vmul.f32 %v2765, %v2769
      %v2771 = vadd.f32 1.0, %v2770
      %v2772 = vmul.f32 %v2763, %v2763
      %v2773 = vmul.f32 %v2772, -0.00019511016
      %v2774 = vadd.f32 %v2773, 0.008332121
      %v2775 = vmul.f32 %v2772, %v2774
      %v2776 = vadd.f32 %v2775, -0.16666654
      %v2777 = vmul.f32 %v2772, %v2776
      %v2778 = vadd.f32 %v2777, 1.0
      %v2779 = vmul.f32 %v2778, %v2763
      %vm2780 = vweird.f32 %v310
      %v2781 = vadd.s32 %v2764, 3
      %v2782 = vand.u32 %v2781, 3
      %vm2783 = vcmp.lt.s32.totalorder %v2782, 2
      %vm2784 = vcmp.eq.s32.totalorder %v2782, 0
      %v2785 = vxor.u32 %v2779, 2147483648
      %v2786 = vsel %vm2784, %v2771, %v2785
      %vm2787 = vcmp.eq.s32.totalorder %v2782, 2
      %v2788 = vxor.u32 %v2771, 2147483648
      %v2789 = vsel %vm2787, %v2788, %v2779
      %v2790 = vsel %vm2783, %v2786, %v2789
      %v2791 = vsel %vm2780, nan, %v2790
      %2792 = vst.msk [vmem:[%s172] sm:$0xff] %vm198, %v466
      %2793 = vst.msk [vmem:[%s172 + $0x8] sm:$0xff] %vm198, %v621
      %2794 = vst.msk [vmem:[%s172 + $0x10] sm:$0xff] %vm198, %v776
      %2795 = vst.msk [vmem:[%s172 + $0x18] sm:$0xff] %vm198, %v931
      %2796 = vst.msk [vmem:[%s172 + $0x20] sm:$0xff] %vm198, %v1086
      %2797 = vst.msk [vmem:[%s172 + $0x28] sm:$0xff] %vm198, %v1241
      %2798 = vst.msk [vmem:[%s172 + $0x30] sm:$0xff] %vm198, %v1396
      %2799 = vst.msk [vmem:[%s172 + $0x38] sm:$0xff] %vm198, %v1551
      %2800 = vst.msk [vmem:[%s172 + $0x40] sm:$0xff] %vm198, %v1706
      %2801 = vst.msk [vmem:[%s172 + $0x48] sm:$0xff] %vm198, %v1861
      %2802 = vst.msk [vmem:[%s172 + $0x50] sm:$0xff] %vm198, %v2016
      %2803 = vst.msk [vmem:[%s172 + $0x58] sm:$0xff] %vm198, %v2171
      %2804 = vst.msk [vmem:[%s172 + $0x60] sm:$0xff] %vm198, %v2326
      %2805 = vst.msk [vmem:[%s172 + $0x68] sm:$0xff] %vm198, %v2481
      %2806 = vst.msk [vmem:[%s172 + $0x70] sm:$0xff] %vm198, %v2636
      %2807 = vst.msk [vmem:[%s172 + $0x78] sm:$0xff] %vm198, %v2791
      %s2808 = smul.u32 16, %s14
      %p2809 = scmp.lt.s32.totalorder %s2808, 127
      %s2810 = scalar_select %p2809, %s2808, 127
      %s2811 = smul.addr %s2810, 8
      %s2812 = scalar_lea.vmem %s3, %s2811
      // Predicated region
      $region33: #{tpu_custom_call.1} parent=31 // pred_check
        %p2813 = pneg %p100
      $region34: #{tpu_custom_call.1} parent=31 // pred_check_branch
        %2815 = sbr.rel (%p2813) target = $region36
      $region35: #{tpu_custom_call.1} parent=31 // pred_region
        %s2816 = smul.u32 16, %s14
      $region36: #{tpu_custom_call.1} parent=31 // pred_fallthru
        _
    $region32: #{tpu_custom_call.1} parent=5 // pred_fallthru
      _
    %p2817 = scmp.le.s32.totalorder 2, %s9
    // Predicated region
    $region37: #{tpu_custom_call.1} parent=5 // pred_check
      %p2818 = pneg %p2817
    $region38: #{tpu_custom_call.1} parent=5 // pred_check_branch
      %2820 = sbr.rel (%p2818) target = $region40
    $region39: #{tpu_custom_call.1} parent=5 // pred_region
      %s2821 = ssub.s32 %s9, 2
      // Predicated region
      $region41: #{tpu_custom_call.1} parent=39 // pred_check
        %p2822 = pneg %p106
      $region42: #{tpu_custom_call.1} parent=39 // pred_check_branch
        %2824 = sbr.rel (%p2822) target = $region44
      $region43: #{tpu_custom_call.1} parent=39 // pred_region
        %s2825 = smul.u32 16, %s15
        %p2826 = scmp.lt.s32.totalorder %s2825, 127
        %s2827 = scalar_select %p2826, %s2825, 127
        %s2828 = smul.addr %s2827, 8
        %s2829 = scalar_lea.vmem %s3, %s2828
      $region44: #{tpu_custom_call.1} parent=39 // pred_fallthru
        _
    $region40: #{tpu_custom_call.1} parent=5 // pred_fallthru
      _
  $region6: #{tpu_custom_call.1} parent=0 // loop_footer
    %s13 = sadd.s32 1, %s9
  $region7: #{tpu_custom_call.1} parent=0 // loop_footer_branch
    %8 = sbr.rel target = $region3
  $region8: #{tpu_custom_call.1} parent=0 // loop_exit
    _

// kernel: tpu_custom_call.1
$region0: #{tpu_custom_call.1}
  #allocation0 [shape = 'u32[]', space=smem, size = 0x4, offset = 0x4, fixed_abs, tag = 'smem constant byte address 0x4 - core index']
  #allocation1 [shape = 'u32[72,128]{1,0:T(1,128)}', space=vmem, size = 0x9000, scoped, tag = 'internal scratch']
  %s0 = inlined_call_operand.vmem [shape: f32[1024,32], index: 0, kind: input, shape index: {}]
  %s1 = inlined_call_operand.vmem [shape: f32[32,32], index: 1, kind: input, shape index: {}]
  %s2 = inlined_call_operand.vmem [shape: f32[1,32], index: 2, kind: input, shape index: {}]
  %s3 = inlined_call_operand.vmem [shape: f32[1024,32], index: 3, kind: output, shape index: {}]
  %s4 = sld [smem:[#allocation0]]
  $region45: #{tpu_custom_call.1} parent=0
    _
  %s6 = ssub.s32 1, %s4
  %s7 = scalar_select 0, %s6, %s4
  loop: start=0, step=1, limit=10
  $region2: #{tpu_custom_call.1} parent=0 // loop_pre_header
    _
  $region3: #{tpu_custom_call.1} parent=0 // loop_header
    %s9 = sphi 0, %s13
    %p10 = scmp.ge.s32.totalorder %s9, 10
    %s19 = sphi 0, %s21
    %s22 = sphi 0, %s19
    %s23 = sphi 0, %s22
    %s39 = sphi 0, %s23
    %s43 = sphi 0, %s43
    %s45 = sphi 0, %s43
    %s46 = sphi 0, %s45
    %s60 = sphi 0, %s46
    %s64 = sphi 0, %s64
    %s66 = sphi 0, %s64
    %s67 = sphi 0, %s66
    %s81 = sphi 0, %s67
    %s87 = sphi 0, %s89
    %s90 = sphi 0, %s87
    %s91 = sphi 0, %s90
    %s107 = sphi 0, %s91
  $region4: #{tpu_custom_call.1} parent=0 // loop_header_branch
    %12 = sbr.rel (%p10) target = $region8
  $region5: #{tpu_custom_call.1} parent=0 // loop_body
    %s14 = ssub.s32 %s9, 1
    %s15 = ssub.s32 %s9, 2
    %s16 = sadd.s32 %s9, 1
    %s17 = ssub.s32 %s9, %s16
    %p18 = scmp.eq.s32.totalorder %s17, 0
    %s20 = sadd.s32 %s19, 1
    %s21 = scalar_select %p18, %s19, %s20
    %p24 = pneg %p18
    %p25 = scmp.eq.s32.totalorder %s9, 7
    %p26 = por %p24, %p25
    %p27 = scmp.ne.s32.totalorder %s19, %s22
    %p28 = scmp.eq.s32.totalorder %s9, 0
    %p29 = por %p27, %p28
    %p30 = scmp.ne.s32.totalorder %s19, %s22
    %p31 = scmp.eq.s32.totalorder %s14, 7
    %p32 = por %p30, %p31
    %p33 = scmp.ne.s32.totalorder %s22, %s23
    %p34 = scmp.eq.s32.totalorder %s14, 0
    %p35 = por %p33, %p34
    %p36 = scmp.ne.s32.totalorder %s22, %s23
    %p37 = scmp.eq.s32.totalorder %s15, 7
    %p38 = por %p36, %p37
    %p40 = scmp.ne.s32.totalorder %s23, %s39
    %p41 = scmp.eq.s32.totalorder %s15, 0
    %p42 = por %p40, %p41
    %s44 = sadd.s32 %s43, 1
    %p47 = scmp.eq.s32.totalorder %s9, 7
    %p48 = scmp.ne.s32.totalorder %s43, %s45
    %p49 = scmp.eq.s32.totalorder %s9, 0
    %p50 = por %p48, %p49
    %p51 = scmp.ne.s32.totalorder %s43, %s45
    %p52 = scmp.eq.s32.totalorder %s14, 7
    %p53 = por %p51, %p52
    %p54 = scmp.ne.s32.totalorder %s45, %s46
    %p55 = scmp.eq.s32.totalorder %s14, 0
    %p56 = por %p54, %p55
    %p57 = scmp.ne.s32.totalorder %s45, %s46
    %p58 = scmp.eq.s32.totalorder %s15, 7
    %p59 = por %p57, %p58
    %p61 = scmp.ne.s32.totalorder %s46, %s60
    %p62 = scmp.eq.s32.totalorder %s15, 0
    %p63 = por %p61, %p62
    %s65 = sadd.s32 %s64, 1
    %p68 = scmp.eq.s32.totalorder %s9, 7
    %p69 = scmp.ne.s32.totalorder %s64, %s66
    %p70 = scmp.eq.s32.totalorder %s9, 0
    %p71 = por %p69, %p70
    %p72 = scmp.ne.s32.totalorder %s64, %s66
    %p73 = scmp.eq.s32.totalorder %s14, 7
    %p74 = por %p72, %p73
    %p75 = scmp.ne.s32.totalorder %s66, %s67
    %p76 = scmp.eq.s32.totalorder %s14, 0
    %p77 = por %p75, %p76
    %p78 = scmp.ne.s32.totalorder %s66, %s67
    %p79 = scmp.eq.s32.totalorder %s15, 7
    %p80 = por %p78, %p79
    %p82 = scmp.ne.s32.totalorder %s67, %s81
    %p83 = scmp.eq.s32.totalorder %s15, 0
    %p84 = por %p82, %p83
    %s85 = ssub.s32 %s9, %s16
    %p86 = scmp.eq.s32.totalorder %s85, 0
    %s88 = sadd.s32 %s87, 1
    %s89 = scalar_select %p86, %s87, %s88
    %p92 = pneg %p86
    %p93 = scmp.eq.s32.totalorder %s9, 7
    %p94 = por %p92, %p93
    %p95 = scmp.ne.s32.totalorder %s87, %s90
    %p96 = scmp.eq.s32.totalorder %s9, 0
    %p97 = por %p95, %p96
    %p98 = scmp.ne.s32.totalorder %s87, %s90
    %p99 = scmp.eq.s32.totalorder %s14, 7
    %p100 = por %p98, %p99
    %p101 = scmp.ne.s32.totalorder %s90, %s91
    %p102 = scmp.eq.s32.totalorder %s14, 0
    %p103 = por %p101, %p102
    %p104 = scmp.ne.s32.totalorder %s90, %s91
    %p105 = scmp.eq.s32.totalorder %s15, 7
    %p106 = por %p104, %p105
    %p108 = scmp.ne.s32.totalorder %s91, %s107
    %p109 = scmp.eq.s32.totalorder %s15, 0
    %p110 = por %p108, %p109
    %p111 = scmp.le.s32.totalorder 1, %s9
    %p112 = scmp.lt.s32.totalorder %s9, 9
    %p113 = pnand %p111, %p112
    %p114 = pneg %p113
    // Predicated region
    $region9: #{tpu_custom_call.1} parent=5 // pred_check
      _
    $region10: #{tpu_custom_call.1} parent=5 // pred_check_branch
      %116 = sbr.rel (%p113) target = $region12
    $region11: #{tpu_custom_call.1} parent=5 // pred_region
      %s117 = ssub.s32 %s9, 1
      // Predicated region
      $region13: #{tpu_custom_call.1} parent=11 // pred_check
        %p118 = pneg %p56
      $region14: #{tpu_custom_call.1} parent=11 // pred_check_branch
        %120 = sbr.rel (%p118) target = $region16
      $region15: #{tpu_custom_call.1} parent=11 // pred_region
        _
      $region16: #{tpu_custom_call.1} parent=11 // pred_fallthru
        _
      // Predicated region
      $region17: #{tpu_custom_call.1} parent=11 // pred_check
        %p121 = pneg %p77
      $region18: #{tpu_custom_call.1} parent=11 // pred_check_branch
        %123 = sbr.rel (%p121) target = $region20
      $region19: #{tpu_custom_call.1} parent=11 // pred_region
        _
      $region20: #{tpu_custom_call.1} parent=11 // pred_fallthru
        _
    $region12: #{tpu_custom_call.1} parent=5 // pred_fallthru
      _
    %p124 = scmp.lt.s32.totalorder %s9, 8
    // Predicated region
    $region21: #{tpu_custom_call.1} parent=5 // pred_check
      %p125 = pneg %p124
    $region22: #{tpu_custom_call.1} parent=5 // pred_check_branch
      %127 = sbr.rel (%p125) target = $region24
    $region23: #{tpu_custom_call.1} parent=5 // pred_region
      // Predicated region
      $region25: #{tpu_custom_call.1} parent=23 // pred_check
        %p128 = pneg %p29
      $region26: #{tpu_custom_call.1} parent=23 // pred_check_branch
        %130 = sbr.rel (%p128) target = $region28
      $region27: #{tpu_custom_call.1} parent=23 // pred_region
        %s131 = smul.u32 16, %s9
        %p132 = scmp.lt.s32.totalorder %s131, 127
        %s133 = scalar_select %p132, %s131, 127
        %s134 = smul.addr %s133, 8
        %s135 = scalar_lea.vmem %s0, %s134
        %s136 = smul.u32 16, %s9
      $region28: #{tpu_custom_call.1} parent=23 // pred_fallthru
        _
    $region24: #{tpu_custom_call.1} parent=5 // pred_fallthru
      _
    %p137 = scmp.le.s32.totalorder 1, %s9
    %p138 = scmp.lt.s32.totalorder %s9, 9
    %p139 = pnand %p137, %p138
    %p140 = pneg %p139
    // Predicated region
    $region29: #{tpu_custom_call.1} parent=5 // pred_check
      _
    $region30: #{tpu_custom_call.1} parent=5 // pred_check_branch
      %142 = sbr.rel (%p139) target = $region32
    $region31: #{tpu_custom_call.1} parent=5 // pred_region
      %s143 = ssub.s32 %s9, 1
      %s144 = smul.u32 16, %s14
      %p145 = scmp.lt.s32.totalorder %s144, 127
      %s146 = scalar_select %p145, %s144, 127
      %s147 = smul.addr %s146, 8
      %s148 = scalar_lea.vmem %s0, %s147
      %p149 = pneg %p35
      %p150 = pneg %p32
      %p151 = pneg %p56
      %p152 = pneg %p53
      %p153 = pneg %p77
      %p154 = pneg %p74
      %p155 = pneg %p103
      %p156 = pneg %p100
      %s157 = smul.u32 16, %s14
      %p158 = scmp.lt.s32.totalorder %s157, 127
      %s159 = scalar_select %p158, %s157, 127
      %s160 = smul.addr %s159, 8
      %s161 = scalar_lea.vmem %s3, %s160
      %s162 = smul.u32 16, %s14
      %p163 = scmp.lt.s32.totalorder %s162, 127
      %s164 = scalar_select %p163, %s162, 127
      %s165 = smul.addr %s164, 8
      %s166 = scalar_lea.vmem %s0, %s165
      %s167 = smul.u32 16, %s14
      %s168 = smul.u32 16, %s14
      %p169 = scmp.lt.s32.totalorder %s168, 127
      %s170 = scalar_select %p169, %s168, 127
      %s171 = smul.addr %s170, 8
      %s172 = scalar_lea.vmem %s3, %s171
      %s173 = smul.u32 16, %s14
      %v174 = vld [vmem:[%s166] sm:$0xff]
      %v175 = vld [vmem:[%s166 + $0x8] sm:$0xff]
      %v176 = vld [vmem:[%s166 + $0x10] sm:$0xff]
      %v177 = vld [vmem:[%s166 + $0x18] sm:$0xff]
      %v178 = vld [vmem:[%s166 + $0x20] sm:$0xff]
      %v179 = vld [vmem:[%s166 + $0x28] sm:$0xff]
      %v180 = vld [vmem:[%s166 + $0x30] sm:$0xff]
      %v181 = vld [vmem:[%s166 + $0x38] sm:$0xff]
      %v182 = vld [vmem:[%s166 + $0x40] sm:$0xff]
      %v183 = vld [vmem:[%s166 + $0x48] sm:$0xff]
      %v184 = vld [vmem:[%s166 + $0x50] sm:$0xff]
      %v185 = vld [vmem:[%s166 + $0x58] sm:$0xff]
      %v186 = vld [vmem:[%s166 + $0x60] sm:$0xff]
      %v187 = vld [vmem:[%s166 + $0x68] sm:$0xff]
      %v188 = vld [vmem:[%s166 + $0x70] sm:$0xff]
      %v189 = vld [vmem:[%s166 + $0x78] sm:$0xff]
      %v190 = vld [vmem:[%s1] sm:$0xff]
      %v191 = vld [vmem:[%s1 + $0x8] sm:$0xff]
      %v192 = vld [vmem:[%s1 + $0x10] sm:$0xff]
      %v193 = vld [vmem:[%s1 + $0x18] sm:$0xff]
      %v194 = vld [vmem:[%s2] sm:$0x1]
      %v196 = vperm.slane %v194, 0
      %vm198 = vcmask 261120
      %v200 = vsel %vm198, %v174, 0
      %v203 = vsel %vm198, %v175, 0
      %v206 = vsel %vm198, %v176, 0
      %v209 = vsel %vm198, %v177, 0
      %v212 = vsel %vm198, %v178, 0
      %v215 = vsel %vm198, %v179, 0
      %v218 = vsel %vm198, %v180, 0
      %v221 = vsel %vm198, %v181, 0
      %v224 = vsel %vm198, %v182, 0
      %v227 = vsel %vm198, %v183, 0
      %v230 = vsel %vm198, %v184, 0
      %v233 = vsel %vm198, %v185, 0
      %v236 = vsel %vm198, %v186, 0
      %v239 = vsel %vm198, %v187, 0
      %v242 = vsel %vm198, %v188, 0
      %v245 = vsel %vm198, %v189, 0
      %247 = vmatpush.msra.mxu0 0.0
      %248 = vmatpush.msra.mxu0 0.0
      %249 = vmatpush.msra.mxu0 0.0
      %250 = vmatpush.msra.mxu0 0.0
      %251 = vmatpush.msra.mxu0 0.0
      %252 = vmatpush.msra.mxu0 0.0
      %253 = vmatpush.msra.mxu0 0.0
      %254 = vmatpush.msra.mxu0 0.0
      %255 = vmatpush.msra.mxu0 0.0
      %256 = vmatpush.msra.mxu0 0.0
      %257 = vmatpush.msra.mxu0 0.0
      %258 = vmatpush.msra.mxu0 0.0
      %259 = vmatpush.msra.mxu0 %v193
      %260 = vmatpush.msra.mxu0 %v192
      %261 = vmatpush.msra.mxu0 %v191
      %262 = vmatpush.msra.mxu0 %v190
      %263 = vmatmul.f32.gmra.mxu0 %v200
      %v264 = vpop.f32.mrf.mxu0
      %v265 = vadd.f32 %v196, %v264
      %266 = vmatmul.f32.gmra.mxu0 %v203
      %v267 = vpop.f32.mrf.mxu0
      %v268 = vadd.f32 %v196, %v267
      %269 = vmatmul.f32.gmra.mxu0 %v206
      %v270 = vpop.f32.mrf.mxu0
      %v271 = vadd.f32 %v196, %v270
      %272 = vmatmul.f32.gmra.mxu0 %v209
      %v273 = vpop.f32.mrf.mxu0
      %v274 = vadd.f32 %v196, %v273
      %275 = vmatmul.f32.gmra.mxu0 %v212
      %v276 = vpop.f32.mrf.mxu0
      %v277 = vadd.f32 %v196, %v276
      %278 = vmatmul.f32.gmra.mxu0 %v215
      %v279 = vpop.f32.mrf.mxu0
      %v280 = vadd.f32 %v196, %v279
      %281 = vmatmul.f32.gmra.mxu0 %v218
      %v282 = vpop.f32.mrf.mxu0
      %v283 = vadd.f32 %v196, %v282
      %284 = vmatmul.f32.gmra.mxu0 %v221
      %v285 = vpop.f32.mrf.mxu0
      %v286 = vadd.f32 %v196, %v285
      %287 = vmatmul.f32.gmra.mxu0 %v224
      %v288 = vpop.f32.mrf.mxu0
      %v289 = vadd.f32 %v196, %v288
      %290 = vmatmul.f32.gmra.mxu0 %v227
      %v291 = vpop.f32.mrf.mxu0
      %v292 = vadd.f32 %v196, %v291
      %293 = vmatmul.f32.gmra.mxu0 %v230
      %v294 = vpop.f32.mrf.mxu0
      %v295 = vadd.f32 %v196, %v294
      %296 = vmatmul.f32.gmra.mxu0 %v233
      %v297 = vpop.f32.mrf.mxu0
      %v298 = vadd.f32 %v196, %v297
      %299 = vmatmul.f32.gmra.mxu0 %v236
      %v300 = vpop.f32.mrf.mxu0
      %v301 = vadd.f32 %v196, %v300
      %302 = vmatmul.f32.gmra.mxu0 %v239
      %v303 = vpop.f32.mrf.mxu0
      %v304 = vadd.f32 %v196, %v303
      %305 = vmatmul.f32.gmra.mxu0 %v242
      %v306 = vpop.f32.mrf.mxu0
      %v307 = vadd.f32 %v196, %v306
      %308 = vmatmul.f32.gmra.mxu0 %v245
      %v309 = vpop.f32.mrf.mxu0
      %v310 = vadd.f32 %v196, %v309
      %311 = vdwg.mxu0
      %v312 = vand.u32 2147483647, %v265
      %vm313 = vcmp.le.f32.partialorder %v312, 0.7853982
      %vm314 = vcmp.lt.s32.totalorder %v265, 0
      %v315 = vand.u32 %v265, 2139095040
      %v316 = vshrl.u32 %v315, 23
      %v317 = vsub.s32 %v316, 127
      %v318 = vand.u32 2147483647, %v265
      %v319 = vand.u32 %v318, 8388607
      %v320 = vor.u32 %v319, 8388608
      %v321 = vsub.s32 0, %v320
      %v322 = vadd.s32 %v317, 1
      %vm323 = vcmp.gt.s32.totalorder %v322, 0
      %v324 = vsel %vm323, %v322, 0
      %v325 = vshrl.u32 %v324, 5
      %v326 = vand.u32 %v324, 31
      %v327 = vsub.s32 32, %v326
      %v328 = vshrl.u32 683565275, %v327
      %v329 = vshll.u32 683565275, %v326
      %v330 = vshrl.u32 2475754826, %v327
      %v331 = vor.u32 %v329, %v330
      %v332 = vshll.u32 2475754826, %v326
      %v333 = vshrl.u32 2131351028, %v327
      %v334 = vor.u32 %v332, %v333
      %v335 = vshll.u32 2131351028, %v326
      %v336 = vshrl.u32 2102212464, %v327
      %v337 = vor.u32 %v335, %v336
      %v338 = vshll.u32 2102212464, %v326
      %v339 = vshrl.u32 920167782, %v327
      %v340 = vor.u32 %v338, %v339
      %v341 = vshll.u32 920167782, %v326
      %v342 = vshrl.u32 1326507024, %v327
      %v343 = vor.u32 %v341, %v342
      %vm344 = vcmp.lt.s32.totalorder %v325, 1
      %vm345 = vcmp.lt.s32.totalorder %v325, 2
      %vm346 = vcmp.lt.s32.totalorder %v325, 3
      %vm347 = vcmp.lt.s32.totalorder %v325, 4
      %v348 = vsel %vm344, %v328, %v331
      %v349 = vsel %vm347, %v337, 2102212464
      %v350 = vsel %vm346, %v334, %v349
      %v351 = vsel %vm345, %v348, %v350
      %v352 = vsel %vm344, %v331, %v334
      %v353 = vsel %vm347, %v340, 920167782
      %v354 = vsel %vm346, %v337, %v353
      %v355 = vsel %vm345, %v352, %v354
      %v356 = vsel %vm344, %v334, %v337
      %v357 = vsel %vm347, %v343, 1326507024
      %v358 = vsel %vm346, %v340, %v357
      %v359 = vsel %vm345, %v356, %v358
      %v360 = vshll.u32 %v320, 8
      %v361 = vand.u32 %v360, 65535
      %v362 = vshrl.u32 %v360, 16
      %v363 = vand.u32 %v359, 65535
      %v364 = vshrl.u32 %v359, 16
      %v365 = vmul.u32 %v361, %v363
      %v366 = vmul.u32 %v361, %v364
      %v367 = vmul.u32 %v362, %v363
      %v368 = vmul.u32 %v362, %v364
      %v369 = vshll.u32 %v366, 16
      %v370 = vshrl.u32 %v366, 16
      %v371 = vshll.u32 %v367, 16
      %v372 = vshrl.u32 %v367, 16
      %vm373 = vc.u32 %v365, %v369
      %v374 = vsel %vm373, 1, 0
      %v375 = vadd.s32 %v365, %v369
      %v376 = vadd.s32 %v368, %v374
      %vm377 = vc.u32 %v375, %v371
      %v378 = vsel %vm377, 1, 0
      %v379 = vadd.s32 %v375, %v371
      %v380 = vadd.s32 %v376, %v378
      %v381 = vadd.s32 %v380, %v370
      %v382 = vadd.s32 %v381, %v372
      %v383 = vand.u32 %v360, 65535
      %v384 = vshrl.u32 %v360, 16
      %v385 = vand.u32 %v355, 65535
      %v386 = vshrl.u32 %v355, 16
      %v387 = vmul.u32 %v383, %v385
      %v388 = vmul.u32 %v383, %v386
      %v389 = vmul.u32 %v384, %v385
      %v390 = vmul.u32 %v384, %v386
      %v391 = vshll.u32 %v388, 16
      %v392 = vshrl.u32 %v388, 16
      %v393 = vshll.u32 %v389, 16
      %v394 = vshrl.u32 %v389, 16
      %vm395 = vc.u32 %v387, %v391
      %v396 = vsel %vm395, 1, 0
      %v397 = vadd.s32 %v387, %v391
      %v398 = vadd.s32 %v390, %v396
      %vm399 = vc.u32 %v397, %v393
      %v400 = vsel %vm399, 1, 0
      %v401 = vadd.s32 %v397, %v393
      %v402 = vadd.s32 %v398, %v400
      %v403 = vadd.s32 %v402, %v392
      %v404 = vadd.s32 %v403, %v394
      %v405 = vmul.u32 %v360, %v351
      %v406 = vadd.s32 %v382, %v401
      %vm407 = vc.u32 %v382, %v401
      %v408 = vadd.s32 %v404, 1
      %v409 = vsel %vm407, %v408, %v404
      %v410 = vadd.s32 %v405, %v409
      %v411 = vadd.s32 %v410, 536870912
      %v412 = vshrl.u32 %v411, 30
      %v413 = vshll.u32 %v412, 30
      %v414 = vsub.s32 %v410, %v413
      %vm415 = vcmp.lt.s32.totalorder %v414, 0
      %v416 = vsub.s32 0, %v414
      %v417 = vsel %vm415, %v416, %v414
      %v418 = vclz %v417
      %v419 = vsub.s32 %v418, 2
      %vm420 = vcmp.gt.s32.totalorder 0, %v419
      %v421 = vsel %vm420, 0, %v419
      %v422 = vsub.s32 32, %v421
      %v423 = vshll.u32 %v414, %v421
      %v424 = vshrl.u32 %v406, %v422
      %v425 = vor.u32 %v423, %v424
      %v426 = vsub.s32 4294967266, %v421
      %v427 = vadd.s32 %v426, 127
      %v428 = vshll.u32 %v427, 23
      %v429 = vor.u32 4788187, %v428
      %v430 = vand.u32 2147483647, %v429
      %v432 = vcvt.s32.f32 %v425
      %v433 = vmul.f32 %v432, %v430
      %v434 = vxor.u32 %v433, 2147483648
      %v435 = vsel %vm314, %v434, %v433
      %v436 = vsub.s32 4, %v412
      %v437 = vsel %vm314, %v436, %v412
      %v438 = vsel %vm313, %v265, %v435
      %v439 = vsel %vm313, 0, %v437
      %v440 = vmul.f32 %v438, %v438
      %v441 = vmul.f32 %v440, -0.001358992
      %v442 = vadd.f32 %v441, 0.041655596
      %v443 = vmul.f32 %v440, %v442
      %v444 = vadd.f32 %v443, -0.4999988
      %v445 = vmul.f32 %v440, %v444
      %v446 = vadd.f32 1.0, %v445
      %v447 = vmul.f32 %v438, %v438
      %v448 = vmul.f32 %v447, -0.00019511016
      %v449 = vadd.f32 %v448, 0.008332121
      %v450 = vmul.f32 %v447, %v449
      %v451 = vadd.f32 %v450, -0.16666654
      %v452 = vmul.f32 %v447, %v451
      %v453 = vadd.f32 %v452, 1.0
      %v454 = vmul.f32 %v453, %v438
      %vm455 = vweird.f32 %v265
      %v456 = vadd.s32 %v439, 3
      %v457 = vand.u32 %v456, 3
      %vm458 = vcmp.lt.s32.totalorder %v457, 2
      %vm459 = vcmp.eq.s32.totalorder %v457, 0
      %v460 = vxor.u32 %v454, 2147483648
      %v461 = vsel %vm459, %v446, %v460
      %vm462 = vcmp.eq.s32.totalorder %v457, 2
      %v463 = vxor.u32 %v446, 2147483648
      %v464 = vsel %vm462, %v463, %v454
      %v465 = vsel %vm458, %v461, %v464
      %v466 = vsel %vm455, nan, %v465
      %v467 = vand.u32 2147483647, %v268
      %vm468 = vcmp.le.f32.partialorder %v467, 0.7853982
      %vm469 = vcmp.lt.s32.totalorder %v268, 0
      %v470 = vand.u32 %v268, 2139095040
      %v471 = vshrl.u32 %v470, 23
      %v472 = vsub.s32 %v471, 127
      %v473 = vand.u32 2147483647, %v268
      %v474 = vand.u32 %v473, 8388607
      %v475 = vor.u32 %v474, 8388608
      %v476 = vsub.s32 0, %v475
      %v477 = vadd.s32 %v472, 1
      %vm478 = vcmp.gt.s32.totalorder %v477, 0
      %v479 = vsel %vm478, %v477, 0
      %v480 = vshrl.u32 %v479, 5
      %v481 = vand.u32 %v479, 31
      %v482 = vsub.s32 32, %v481
      %v483 = vshrl.u32 683565275, %v482
      %v484 = vshll.u32 683565275, %v481
      %v485 = vshrl.u32 2475754826, %v482
      %v486 = vor.u32 %v484, %v485
      %v487 = vshll.u32 2475754826, %v481
      %v488 = vshrl.u32 2131351028, %v482
      %v489 = vor.u32 %v487, %v488
      %v490 = vshll.u32 2131351028, %v481
      %v491 = vshrl.u32 2102212464, %v482
      %v492 = vor.u32 %v490, %v491
      %v493 = vshll.u32 2102212464, %v481
      %v494 = vshrl.u32 920167782, %v482
      %v495 = vor.u32 %v493, %v494
      %v496 = vshll.u32 920167782, %v481
      %v497 = vshrl.u32 1326507024, %v482
      %v498 = vor.u32 %v496, %v497
      %vm499 = vcmp.lt.s32.totalorder %v480, 1
      %vm500 = vcmp.lt.s32.totalorder %v480, 2
      %vm501 = vcmp.lt.s32.totalorder %v480, 3
      %vm502 = vcmp.lt.s32.totalorder %v480, 4
      %v503 = vsel %vm499, %v483, %v486
      %v504 = vsel %vm502, %v492, 2102212464
      %v505 = vsel %vm501, %v489, %v504
      %v506 = vsel %vm500, %v503, %v505
      %v507 = vsel %vm499, %v486, %v489
      %v508 = vsel %vm502, %v495, 920167782
      %v509 = vsel %vm501, %v492, %v508
      %v510 = vsel %vm500, %v507, %v509
      %v511 = vsel %vm499, %v489, %v492
      %v512 = vsel %vm502, %v498, 1326507024
      %v513 = vsel %vm501, %v495, %v512
      %v514 = vsel %vm500, %v511, %v513
      %v515 = vshll.u32 %v475, 8
      %v516 = vand.u32 %v515, 65535
      %v517 = vshrl.u32 %v515, 16
      %v518 = vand.u32 %v514, 65535
      %v519 = vshrl.u32 %v514, 16
      %v520 = vmul.u32 %v516, %v518
      %v521 = vmul.u32 %v516, %v519
      %v522 = vmul.u32 %v517, %v518
      %v523 = vmul.u32 %v517, %v519
      %v524 = vshll.u32 %v521, 16
      %v525 = vshrl.u32 %v521, 16
      %v526 = vshll.u32 %v522, 16
      %v527 = vshrl.u32 %v522, 16
      %vm528 = vc.u32 %v520, %v524
      %v529 = vsel %vm528, 1, 0
      %v530 = vadd.s32 %v520, %v524
      %v531 = vadd.s32 %v523, %v529
      %vm532 = vc.u32 %v530, %v526
      %v533 = vsel %vm532, 1, 0
      %v534 = vadd.s32 %v530, %v526
      %v535 = vadd.s32 %v531, %v533
      %v536 = vadd.s32 %v535, %v525
      %v537 = vadd.s32 %v536, %v527
      %v538 = vand.u32 %v515, 65535
      %v539 = vshrl.u32 %v515, 16
      %v540 = vand.u32 %v510, 65535
      %v541 = vshrl.u32 %v510, 16
      %v542 = vmul.u32 %v538, %v540
      %v543 = vmul.u32 %v538, %v541
      %v544 = vmul.u32 %v539, %v540
      %v545 = vmul.u32 %v539, %v541
      %v546 = vshll.u32 %v543, 16
      %v547 = vshrl.u32 %v543, 16
      %v548 = vshll.u32 %v544, 16
      %v549 = vshrl.u32 %v544, 16
      %vm550 = vc.u32 %v542, %v546
      %v551 = vsel %vm550, 1, 0
      %v552 = vadd.s32 %v542, %v546
      %v553 = vadd.s32 %v545, %v551
      %vm554 = vc.u32 %v552, %v548
      %v555 = vsel %vm554, 1, 0
      %v556 = vadd.s32 %v552, %v548
      %v557 = vadd.s32 %v553, %v555
      %v558 = vadd.s32 %v557, %v547
      %v559 = vadd.s32 %v558, %v549
      %v560 = vmul.u32 %v515, %v506
      %v561 = vadd.s32 %v537, %v556
      %vm562 = vc.u32 %v537, %v556
      %v563 = vadd.s32 %v559, 1
      %v564 = vsel %vm562, %v563, %v559
      %v565 = vadd.s32 %v560, %v564
      %v566 = vadd.s32 %v565, 536870912
      %v567 = vshrl.u32 %v566, 30
      %v568 = vshll.u32 %v567, 30
      %v569 = vsub.s32 %v565, %v568
      %vm570 = vcmp.lt.s32.totalorder %v569, 0
      %v571 = vsub.s32 0, %v569
      %v572 = vsel %vm570, %v571, %v569
      %v573 = vclz %v572
      %v574 = vsub.s32 %v573, 2
      %vm575 = vcmp.gt.s32.totalorder 0, %v574
      %v576 = vsel %vm575, 0, %v574
      %v577 = vsub.s32 32, %v576
      %v578 = vshll.u32 %v569, %v576
      %v579 = vshrl.u32 %v561, %v577
      %v580 = vor.u32 %v578, %v579
      %v581 = vsub.s32 4294967266, %v576
      %v582 = vadd.s32 %v581, 127
      %v583 = vshll.u32 %v582, 23
      %v584 = vor.u32 4788187, %v583
      %v585 = vand.u32 2147483647, %v584
      %v587 = vcvt.s32.f32 %v580
      %v588 = vmul.f32 %v587, %v585
      %v589 = vxor.u32 %v588, 2147483648
      %v590 = vsel %vm469, %v589, %v588
      %v591 = vsub.s32 4, %v567
      %v592 = vsel %vm469, %v591, %v567
      %v593 = vsel %vm468, %v268, %v590
      %v594 = vsel %vm468, 0, %v592
      %v595 = vmul.f32 %v593, %v593
      %v596 = vmul.f32 %v595, -0.001358992
      %v597 = vadd.f32 %v596, 0.041655596
      %v598 = vmul.f32 %v595, %v597
      %v599 = vadd.f32 %v598, -0.4999988
      %v600 = vmul.f32 %v595, %v599
      %v601 = vadd.f32 1.0, %v600
      %v602 = vmul.f32 %v593, %v593
      %v603 = vmul.f32 %v602, -0.00019511016
      %v604 = vadd.f32 %v603, 0.008332121
      %v605 = vmul.f32 %v602, %v604
      %v606 = vadd.f32 %v605, -0.16666654
      %v607 = vmul.f32 %v602, %v606
      %v608 = vadd.f32 %v607, 1.0
      %v609 = vmul.f32 %v608, %v593
      %vm610 = vweird.f32 %v268
      %v611 = vadd.s32 %v594, 3
      %v612 = vand.u32 %v611, 3
      %vm613 = vcmp.lt.s32.totalorder %v612, 2
      %vm614 = vcmp.eq.s32.totalorder %v612, 0
      %v615 = vxor.u32 %v609, 2147483648
      %v616 = vsel %vm614, %v601, %v615
      %vm617 = vcmp.eq.s32.totalorder %v612, 2
      %v618 = vxor.u32 %v601, 2147483648
      %v619 = vsel %vm617, %v618, %v609
      %v620 = vsel %vm613, %v616, %v619
      %v621 = vsel %vm610, nan, %v620
      %v622 = vand.u32 2147483647, %v271
      %vm623 = vcmp.le.f32.partialorder %v622, 0.7853982
      %vm624 = vcmp.lt.s32.totalorder %v271, 0
      %v625 = vand.u32 %v271, 2139095040
      %v626 = vshrl.u32 %v625, 23
      %v627 = vsub.s32 %v626, 127
      %v628 = vand.u32 2147483647, %v271
      %v629 = vand.u32 %v628, 8388607
      %v630 = vor.u32 %v629, 8388608
      %v631 = vsub.s32 0, %v630
      %v632 = vadd.s32 %v627, 1
      %vm633 = vcmp.gt.s32.totalorder %v632, 0
      %v634 = vsel %vm633, %v632, 0
      %v635 = vshrl.u32 %v634, 5
      %v636 = vand.u32 %v634, 31
      %v637 = vsub.s32 32, %v636
      %v638 = vshrl.u32 683565275, %v637
      %v639 = vshll.u32 683565275, %v636
      %v640 = vshrl.u32 2475754826, %v637
      %v641 = vor.u32 %v639, %v640
      %v642 = vshll.u32 2475754826, %v636
      %v643 = vshrl.u32 2131351028, %v637
      %v644 = vor.u32 %v642, %v643
      %v645 = vshll.u32 2131351028, %v636
      %v646 = vshrl.u32 2102212464, %v637
      %v647 = vor.u32 %v645, %v646
      %v648 = vshll.u32 2102212464, %v636
      %v649 = vshrl.u32 920167782, %v637
      %v650 = vor.u32 %v648, %v649
      %v651 = vshll.u32 920167782, %v636
      %v652 = vshrl.u32 1326507024, %v637
      %v653 = vor.u32 %v651, %v652
      %vm654 = vcmp.lt.s32.totalorder %v635, 1
      %vm655 = vcmp.lt.s32.totalorder %v635, 2
      %vm656 = vcmp.lt.s32.totalorder %v635, 3
      %vm657 = vcmp.lt.s32.totalorder %v635, 4
      %v658 = vsel %vm654, %v638, %v641
      %v659 = vsel %vm657, %v647, 2102212464
      %v660 = vsel %vm656, %v644, %v659
      %v661 = vsel %vm655, %v658, %v660
      %v662 = vsel %vm654, %v641, %v644
      %v663 = vsel %vm657, %v650, 920167782
      %v664 = vsel %vm656, %v647, %v663
      %v665 = vsel %vm655, %v662, %v664
      %v666 = vsel %vm654, %v644, %v647
      %v667 = vsel %vm657, %v653, 1326507024
      %v668 = vsel %vm656, %v650, %v667
      %v669 = vsel %vm655, %v666, %v668
      %v670 = vshll.u32 %v630, 8
      %v671 = vand.u32 %v670, 65535
      %v672 = vshrl.u32 %v670, 16
      %v673 = vand.u32 %v669, 65535
      %v674 = vshrl.u32 %v669, 16
      %v675 = vmul.u32 %v671, %v673
      %v676 = vmul.u32 %v671, %v674
      %v677 = vmul.u32 %v672, %v673
      %v678 = vmul.u32 %v672, %v674
      %v679 = vshll.u32 %v676, 16
      %v680 = vshrl.u32 %v676, 16
      %v681 = vshll.u32 %v677, 16
      %v682 = vshrl.u32 %v677, 16
      %vm683 = vc.u32 %v675, %v679
      %v684 = vsel %vm683, 1, 0
      %v685 = vadd.s32 %v675, %v679
      %v686 = vadd.s32 %v678, %v684
      %vm687 = vc.u32 %v685, %v681
      %v688 = vsel %vm687, 1, 0
      %v689 = vadd.s32 %v685, %v681
      %v690 = vadd.s32 %v686, %v688
      %v691 = vadd.s32 %v690, %v680
      %v692 = vadd.s32 %v691, %v682
      %v693 = vand.u32 %v670, 65535
      %v694 = vshrl.u32 %v670, 16
      %v695 = vand.u32 %v665, 65535
      %v696 = vshrl.u32 %v665, 16
      %v697 = vmul.u32 %v693, %v695
      %v698 = vmul.u32 %v693, %v696
      %v699 = vmul.u32 %v694, %v695
      %v700 = vmul.u32 %v694, %v696
      %v701 = vshll.u32 %v698, 16
      %v702 = vshrl.u32 %v698, 16
      %v703 = vshll.u32 %v699, 16
      %v704 = vshrl.u32 %v699, 16
      %vm705 = vc.u32 %v697, %v701
      %v706 = vsel %vm705, 1, 0
      %v707 = vadd.s32 %v697, %v701
      %v708 = vadd.s32 %v700, %v706
      %vm709 = vc.u32 %v707, %v703
      %v710 = vsel %vm709, 1, 0
      %v711 = vadd.s32 %v707, %v703
      %v712 = vadd.s32 %v708, %v710
      %v713 = vadd.s32 %v712, %v702
      %v714 = vadd.s32 %v713, %v704
      %v715 = vmul.u32 %v670, %v661
      %v716 = vadd.s32 %v692, %v711
      %vm717 = vc.u32 %v692, %v711
      %v718 = vadd.s32 %v714, 1
      %v719 = vsel %vm717, %v718, %v714
      %v720 = vadd.s32 %v715, %v719
      %v721 = vadd.s32 %v720, 536870912
      %v722 = vshrl.u32 %v721, 30
      %v723 = vshll.u32 %v722, 30
      %v724 = vsub.s32 %v720, %v723
      %vm725 = vcmp.lt.s32.totalorder %v724, 0
      %v726 = vsub.s32 0, %v724
      %v727 = vsel %vm725, %v726, %v724
      %v728 = vclz %v727
      %v729 = vsub.s32 %v728, 2
      %vm730 = vcmp.gt.s32.totalorder 0, %v729
      %v731 = vsel %vm730, 0, %v729
      %v732 = vsub.s32 32, %v731
      %v733 = vshll.u32 %v724, %v731
      %v734 = vshrl.u32 %v716, %v732
      %v735 = vor.u32 %v733, %v734
      %v736 = vsub.s32 4294967266, %v731
      %v737 = vadd.s32 %v736, 127
      %v738 = vshll.u32 %v737, 23
      %v739 = vor.u32 4788187, %v738
      %v740 = vand.u32 2147483647, %v739
      %v742 = vcvt.s32.f32 %v735
      %v743 = vmul.f32 %v742, %v740
      %v744 = vxor.u32 %v743, 2147483648
      %v745 = vsel %vm624, %v744, %v743
      %v746 = vsub.s32 4, %v722
      %v747 = vsel %vm624, %v746, %v722
      %v748 = vsel %vm623, %v271, %v745
      %v749 = vsel %vm623, 0, %v747
      %v750 = vmul.f32 %v748, %v748
      %v751 = vmul.f32 %v750, -0.001358992
      %v752 = vadd.f32 %v751, 0.041655596
      %v753 = vmul.f32 %v750, %v752
      %v754 = vadd.f32 %v753, -0.4999988
      %v755 = vmul.f32 %v750, %v754
      %v756 = vadd.f32 1.0, %v755
      %v757 = vmul.f32 %v748, %v748
      %v758 = vmul.f32 %v757, -0.00019511016
      %v759 = vadd.f32 %v758, 0.008332121
      %v760 = vmul.f32 %v757, %v759
      %v761 = vadd.f32 %v760, -0.16666654
      %v762 = vmul.f32 %v757, %v761
      %v763 = vadd.f32 %v762, 1.0
      %v764 = vmul.f32 %v763, %v748
      %vm765 = vweird.f32 %v271
      %v766 = vadd.s32 %v749, 3
      %v767 = vand.u32 %v766, 3
      %vm768 = vcmp.lt.s32.totalorder %v767, 2
      %vm769 = vcmp.eq.s32.totalorder %v767, 0
      %v770 = vxor.u32 %v764, 2147483648
      %v771 = vsel %vm769, %v756, %v770
      %vm772 = vcmp.eq.s32.totalorder %v767, 2
      %v773 = vxor.u32 %v756, 2147483648
      %v774 = vsel %vm772, %v773, %v764
      %v775 = vsel %vm768, %v771, %v774
      %v776 = vsel %vm765, nan, %v775
      %v777 = vand.u32 2147483647, %v274
      %vm778 = vcmp.le.f32.partialorder %v777, 0.7853982
      %vm779 = vcmp.lt.s32.totalorder %v274, 0
      %v780 = vand.u32 %v274, 2139095040
      %v781 = vshrl.u32 %v780, 23
      %v782 = vsub.s32 %v781, 127
      %v783 = vand.u32 2147483647, %v274
      %v784 = vand.u32 %v783, 8388607
      %v785 = vor.u32 %v784, 8388608
      %v786 = vsub.s32 0, %v785
      %v787 = vadd.s32 %v782, 1
      %vm788 = vcmp.gt.s32.totalorder %v787, 0
      %v789 = vsel %vm788, %v787, 0
      %v790 = vshrl.u32 %v789, 5
      %v791 = vand.u32 %v789, 31
      %v792 = vsub.s32 32, %v791
      %v793 = vshrl.u32 683565275, %v792
      %v794 = vshll.u32 683565275, %v791
      %v795 = vshrl.u32 2475754826, %v792
      %v796 = vor.u32 %v794, %v795
      %v797 = vshll.u32 2475754826, %v791
      %v798 = vshrl.u32 2131351028, %v792
      %v799 = vor.u32 %v797, %v798
      %v800 = vshll.u32 2131351028, %v791
      %v801 = vshrl.u32 2102212464, %v792
      %v802 = vor.u32 %v800, %v801
      %v803 = vshll.u32 2102212464, %v791
      %v804 = vshrl.u32 920167782, %v792
      %v805 = vor.u32 %v803, %v804
      %v806 = vshll.u32 920167782, %v791
      %v807 = vshrl.u32 1326507024, %v792
      %v808 = vor.u32 %v806, %v807
      %vm809 = vcmp.lt.s32.totalorder %v790, 1
      %vm810 = vcmp.lt.s32.totalorder %v790, 2
      %vm811 = vcmp.lt.s32.totalorder %v790, 3
      %vm812 = vcmp.lt.s32.totalorder %v790, 4
      %v813 = vsel %vm809, %v793, %v796
      %v814 = vsel %vm812, %v802, 2102212464
      %v815 = vsel %vm811, %v799, %v814
      %v816 = vsel %vm810, %v813, %v815
      %v817 = vsel %vm809, %v796, %v799
      %v818 = vsel %vm812, %v805, 920167782
      %v819 = vsel %vm811, %v802, %v818
      %v820 = vsel %vm810, %v817, %v819
      %v821 = vsel %vm809, %v799, %v802
      %v822 = vsel %vm812, %v808, 1326507024
      %v823 = vsel %vm811, %v805, %v822
      %v824 = vsel %vm810, %v821, %v823
      %v825 = vshll.u32 %v785, 8
      %v826 = vand.u32 %v825, 65535
      %v827 = vshrl.u32 %v825, 16
      %v828 = vand.u32 %v824, 65535
      %v829 = vshrl.u32 %v824, 16
      %v830 = vmul.u32 %v826, %v828
      %v831 = vmul.u32 %v826, %v829
      %v832 = vmul.u32 %v827, %v828
      %v833 = vmul.u32 %v827, %v829
      %v834 = vshll.u32 %v831, 16
      %v835 = vshrl.u32 %v831, 16
      %v836 = vshll.u32 %v832, 16
      %v837 = vshrl.u32 %v832, 16
      %vm838 = vc.u32 %v830, %v834
      %v839 = vsel %vm838, 1, 0
      %v840 = vadd.s32 %v830, %v834
      %v841 = vadd.s32 %v833, %v839
      %vm842 = vc.u32 %v840, %v836
      %v843 = vsel %vm842, 1, 0
      %v844 = vadd.s32 %v840, %v836
      %v845 = vadd.s32 %v841, %v843
      %v846 = vadd.s32 %v845, %v835
      %v847 = vadd.s32 %v846, %v837
      %v848 = vand.u32 %v825, 65535
      %v849 = vshrl.u32 %v825, 16
      %v850 = vand.u32 %v820, 65535
      %v851 = vshrl.u32 %v820, 16
      %v852 = vmul.u32 %v848, %v850
      %v853 = vmul.u32 %v848, %v851
      %v854 = vmul.u32 %v849, %v850
      %v855 = vmul.u32 %v849, %v851
      %v856 = vshll.u32 %v853, 16
      %v857 = vshrl.u32 %v853, 16
      %v858 = vshll.u32 %v854, 16
      %v859 = vshrl.u32 %v854, 16
      %vm860 = vc.u32 %v852, %v856
      %v861 = vsel %vm860, 1, 0
      %v862 = vadd.s32 %v852, %v856
      %v863 = vadd.s32 %v855, %v861
      %vm864 = vc.u32 %v862, %v858
      %v865 = vsel %vm864, 1, 0
      %v866 = vadd.s32 %v862, %v858
      %v867 = vadd.s32 %v863, %v865
      %v868 = vadd.s32 %v867, %v857
      %v869 = vadd.s32 %v868, %v859
      %v870 = vmul.u32 %v825, %v816
      %v871 = vadd.s32 %v847, %v866
      %vm872 = vc.u32 %v847, %v866
      %v873 = vadd.s32 %v869, 1
      %v874 = vsel %vm872, %v873, %v869
      %v875 = vadd.s32 %v870, %v874
      %v876 = vadd.s32 %v875, 536870912
      %v877 = vshrl.u32 %v876, 30
      %v878 = vshll.u32 %v877, 30
      %v879 = vsub.s32 %v875, %v878
      %vm880 = vcmp.lt.s32.totalorder %v879, 0
      %v881 = vsub.s32 0, %v879
      %v882 = vsel %vm880, %v881, %v879
      %v883 = vclz %v882
      %v884 = vsub.s32 %v883, 2
      %vm885 = vcmp.gt.s32.totalorder 0, %v884
      %v886 = vsel %vm885, 0, %v884
      %v887 = vsub.s32 32, %v886
      %v888 = vshll.u32 %v879, %v886
      %v889 = vshrl.u32 %v871, %v887
      %v890 = vor.u32 %v888, %v889
      %v891 = vsub.s32 4294967266, %v886
      %v892 = vadd.s32 %v891, 127
      %v893 = vshll.u32 %v892, 23
      %v894 = vor.u32 4788187, %v893
      %v895 = vand.u32 2147483647, %v894
      %v897 = vcvt.s32.f32 %v890
      %v898 = vmul.f32 %v897, %v895
      %v899 = vxor.u32 %v898, 2147483648
      %v900 = vsel %vm779, %v899, %v898
      %v901 = vsub.s32 4, %v877
      %v902 = vsel %vm779, %v901, %v877
      %v903 = vsel %vm778, %v274, %v900
      %v904 = vsel %vm778, 0, %v902
      %v905 = vmul.f32 %v903, %v903
      %v906 = vmul.f32 %v905, -0.001358992
      %v907 = vadd.f32 %v906, 0.041655596
      %v908 = vmul.f32 %v905, %v907
      %v909 = vadd.f32 %v908, -0.4999988
      %v910 = vmul.f32 %v905, %v909
      %v911 = vadd.f32 1.0, %v910
      %v912 = vmul.f32 %v903, %v903
      %v913 = vmul.f32 %v912, -0.00019511016
      %v914 = vadd.f32 %v913, 0.008332121
      %v915 = vmul.f32 %v912, %v914
      %v916 = vadd.f32 %v915, -0.16666654
      %v917 = vmul.f32 %v912, %v916
      %v918 = vadd.f32 %v917, 1.0
      %v919 = vmul.f32 %v918, %v903
      %vm920 = vweird.f32 %v274
      %v921 = vadd.s32 %v904, 3
      %v922 = vand.u32 %v921, 3
      %vm923 = vcmp.lt.s32.totalorder %v922, 2
      %vm924 = vcmp.eq.s32.totalorder %v922, 0
      %v925 = vxor.u32 %v919, 2147483648
      %v926 = vsel %vm924, %v911, %v925
      %vm927 = vcmp.eq.s32.totalorder %v922, 2
      %v928 = vxor.u32 %v911, 2147483648
      %v929 = vsel %vm927, %v928, %v919
      %v930 = vsel %vm923, %v926, %v929
      %v931 = vsel %vm920, nan, %v930
      %v932 = vand.u32 2147483647, %v277
      %vm933 = vcmp.le.f32.partialorder %v932, 0.7853982
      %vm934 = vcmp.lt.s32.totalorder %v277, 0
      %v935 = vand.u32 %v277, 2139095040
      %v936 = vshrl.u32 %v935, 23
      %v937 = vsub.s32 %v936, 127
      %v938 = vand.u32 2147483647, %v277
      %v939 = vand.u32 %v938, 8388607
      %v940 = vor.u32 %v939, 8388608
      %v941 = vsub.s32 0, %v940
      %v942 = vadd.s32 %v937, 1
      %vm943 = vcmp.gt.s32.totalorder %v942, 0
      %v944 = vsel %vm943, %v942, 0
      %v945 = vshrl.u32 %v944, 5
      %v946 = vand.u32 %v944, 31
      %v947 = vsub.s32 32, %v946
      %v948 = vshrl.u32 683565275, %v947
      %v949 = vshll.u32 683565275, %v946
      %v950 = vshrl.u32 2475754826, %v947
      %v951 = vor.u32 %v949, %v950
      %v952 = vshll.u32 2475754826, %v946
      %v953 = vshrl.u32 2131351028, %v947
      %v954 = vor.u32 %v952, %v953
      %v955 = vshll.u32 2131351028, %v946
      %v956 = vshrl.u32 2102212464, %v947
      %v957 = vor.u32 %v955, %v956
      %v958 = vshll.u32 2102212464, %v946
      %v959 = vshrl.u32 920167782, %v947
      %v960 = vor.u32 %v958, %v959
      %v961 = vshll.u32 920167782, %v946
      %v962 = vshrl.u32 1326507024, %v947
      %v963 = vor.u32 %v961, %v962
      %vm964 = vcmp.lt.s32.totalorder %v945, 1
      %vm965 = vcmp.lt.s32.totalorder %v945, 2
      %vm966 = vcmp.lt.s32.totalorder %v945, 3
      %vm967 = vcmp.lt.s32.totalorder %v945, 4
      %v968 = vsel %vm964, %v948, %v951
      %v969 = vsel %vm967, %v957, 2102212464
      %v970 = vsel %vm966, %v954, %v969
      %v971 = vsel %vm965, %v968, %v970
      %v972 = vsel %vm964, %v951, %v954
      %v973 = vsel %vm967, %v960, 920167782
      %v974 = vsel %vm966, %v957, %v973
      %v975 = vsel %vm965, %v972, %v974
      %v976 = vsel %vm964, %v954, %v957
      %v977 = vsel %vm967, %v963, 1326507024
      %v978 = vsel %vm966, %v960, %v977
      %v979 = vsel %vm965, %v976, %v978
      %v980 = vshll.u32 %v940, 8
      %v981 = vand.u32 %v980, 65535
      %v982 = vshrl.u32 %v980, 16
      %v983 = vand.u32 %v979, 65535
      %v984 = vshrl.u32 %v979, 16
      %v985 = vmul.u32 %v981, %v983
      %v986 = vmul.u32 %v981, %v984
      %v987 = vmul.u32 %v982, %v983
      %v988 = vmul.u32 %v982, %v984
      %v989 = vshll.u32 %v986, 16
      %v990 = vshrl.u32 %v986, 16
      %v991 = vshll.u32 %v987, 16
      %v992 = vshrl.u32 %v987, 16
      %vm993 = vc.u32 %v985, %v989
      %v994 = vsel %vm993, 1, 0
      %v995 = vadd.s32 %v985, %v989
      %v996 = vadd.s32 %v988, %v994
      %vm997 = vc.u32 %v995, %v991
      %v998 = vsel %vm997, 1, 0
      %v999 = vadd.s32 %v995, %v991
      %v1000 = vadd.s32 %v996, %v998
      %v1001 = vadd.s32 %v1000, %v990
      %v1002 = vadd.s32 %v1001, %v992
      %v1003 = vand.u32 %v980, 65535
      %v1004 = vshrl.u32 %v980, 16
      %v1005 = vand.u32 %v975, 65535
      %v1006 = vshrl.u32 %v975, 16
      %v1007 = vmul.u32 %v1003, %v1005
      %v1008 = vmul.u32 %v1003, %v1006
      %v1009 = vmul.u32 %v1004, %v1005
      %v1010 = vmul.u32 %v1004, %v1006
      %v1011 = vshll.u32 %v1008, 16
      %v1012 = vshrl.u32 %v1008, 16
      %v1013 = vshll.u32 %v1009, 16
      %v1014 = vshrl.u32 %v1009, 16
      %vm1015 = vc.u32 %v1007, %v1011
      %v1016 = vsel %vm1015, 1, 0
      %v1017 = vadd.s32 %v1007, %v1011
      %v1018 = vadd.s32 %v1010, %v1016
      %vm1019 = vc.u32 %v1017, %v1013
      %v1020 = vsel %vm1019, 1, 0
      %v1021 = vadd.s32 %v1017, %v1013
      %v1022 = vadd.s32 %v1018, %v1020
      %v1023 = vadd.s32 %v1022, %v1012
      %v1024 = vadd.s32 %v1023, %v1014
      %v1025 = vmul.u32 %v980, %v971
      %v1026 = vadd.s32 %v1002, %v1021
      %vm1027 = vc.u32 %v1002, %v1021
      %v1028 = vadd.s32 %v1024, 1
      %v1029 = vsel %vm1027, %v1028, %v1024
      %v1030 = vadd.s32 %v1025, %v1029
      %v1031 = vadd.s32 %v1030, 536870912
      %v1032 = vshrl.u32 %v1031, 30
      %v1033 = vshll.u32 %v1032, 30
      %v1034 = vsub.s32 %v1030, %v1033
      %vm1035 = vcmp.lt.s32.totalorder %v1034, 0
      %v1036 = vsub.s32 0, %v1034
      %v1037 = vsel %vm1035, %v1036, %v1034
      %v1038 = vclz %v1037
      %v1039 = vsub.s32 %v1038, 2
      %vm1040 = vcmp.gt.s32.totalorder 0, %v1039
      %v1041 = vsel %vm1040, 0, %v1039
      %v1042 = vsub.s32 32, %v1041
      %v1043 = vshll.u32 %v1034, %v1041
      %v1044 = vshrl.u32 %v1026, %v1042
      %v1045 = vor.u32 %v1043, %v1044
      %v1046 = vsub.s32 4294967266, %v1041
      %v1047 = vadd.s32 %v1046, 127
      %v1048 = vshll.u32 %v1047, 23
      %v1049 = vor.u32 4788187, %v1048
      %v1050 = vand.u32 2147483647, %v1049
      %v1052 = vcvt.s32.f32 %v1045
      %v1053 = vmul.f32 %v1052, %v1050
      %v1054 = vxor.u32 %v1053, 2147483648
      %v1055 = vsel %vm934, %v1054, %v1053
      %v1056 = vsub.s32 4, %v1032
      %v1057 = vsel %vm934, %v1056, %v1032
      %v1058 = vsel %vm933, %v277, %v1055
      %v1059 = vsel %vm933, 0, %v1057
      %v1060 = vmul.f32 %v1058, %v1058
      %v1061 = vmul.f32 %v1060, -0.001358992
      %v1062 = vadd.f32 %v1061, 0.041655596
      %v1063 = vmul.f32 %v1060, %v1062
      %v1064 = vadd.f32 %v1063, -0.4999988
      %v1065 = vmul.f32 %v1060, %v1064
      %v1066 = vadd.f32 1.0, %v1065
      %v1067 = vmul.f32 %v1058, %v1058
      %v1068 = vmul.f32 %v1067, -0.00019511016
      %v1069 = vadd.f32 %v1068, 0.008332121
      %v1070 = vmul.f32 %v1067, %v1069
      %v1071 = vadd.f32 %v1070, -0.16666654
      %v1072 = vmul.f32 %v1067, %v1071
      %v1073 = vadd.f32 %v1072, 1.0
      %v1074 = vmul.f32 %v1073, %v1058
      %vm1075 = vweird.f32 %v277
      %v1076 = vadd.s32 %v1059, 3
      %v1077 = vand.u32 %v1076, 3
      %vm1078 = vcmp.lt.s32.totalorder %v1077, 2
      %vm1079 = vcmp.eq.s32.totalorder %v1077, 0
      %v1080 = vxor.u32 %v1074, 2147483648
      %v1081 = vsel %vm1079, %v1066, %v1080
      %vm1082 = vcmp.eq.s32.totalorder %v1077, 2
      %v1083 = vxor.u32 %v1066, 2147483648
      %v1084 = vsel %vm1082, %v1083, %v1074
      %v1085 = vsel %vm1078, %v1081, %v1084
      %v1086 = vsel %vm1075, nan, %v1085
      %v1087 = vand.u32 2147483647, %v280
      %vm1088 = vcmp.le.f32.partialorder %v1087, 0.7853982
      %vm1089 = vcmp.lt.s32.totalorder %v280, 0
      %v1090 = vand.u32 %v280, 2139095040
      %v1091 = vshrl.u32 %v1090, 23
      %v1092 = vsub.s32 %v1091, 127
      %v1093 = vand.u32 2147483647, %v280
      %v1094 = vand.u32 %v1093, 8388607
      %v1095 = vor.u32 %v1094, 8388608
      %v1096 = vsub.s32 0, %v1095
      %v1097 = vadd.s32 %v1092, 1
      %vm1098 = vcmp.gt.s32.totalorder %v1097, 0
      %v1099 = vsel %vm1098, %v1097, 0
      %v1100 = vshrl.u32 %v1099, 5
      %v1101 = vand.u32 %v1099, 31
      %v1102 = vsub.s32 32, %v1101
      %v1103 = vshrl.u32 683565275, %v1102
      %v1104 = vshll.u32 683565275, %v1101
      %v1105 = vshrl.u32 2475754826, %v1102
      %v1106 = vor.u32 %v1104, %v1105
      %v1107 = vshll.u32 2475754826, %v1101
      %v1108 = vshrl.u32 2131351028, %v1102
      %v1109 = vor.u32 %v1107, %v1108
      %v1110 = vshll.u32 2131351028, %v1101
      %v1111 = vshrl.u32 2102212464, %v1102
      %v1112 = vor.u32 %v1110, %v1111
      %v1113 = vshll.u32 2102212464, %v1101
      %v1114 = vshrl.u32 920167782, %v1102
      %v1115 = vor.u32 %v1113, %v1114
      %v1116 = vshll.u32 920167782, %v1101
      %v1117 = vshrl.u32 1326507024, %v1102
      %v1118 = vor.u32 %v1116, %v1117
      %vm1119 = vcmp.lt.s32.totalorder %v1100, 1
      %vm1120 = vcmp.lt.s32.totalorder %v1100, 2
      %vm1121 = vcmp.lt.s32.totalorder %v1100, 3
      %vm1122 = vcmp.lt.s32.totalorder %v1100, 4
      %v1123 = vsel %vm1119, %v1103, %v1106
      %v1124 = vsel %vm1122, %v1112, 2102212464
      %v1125 = vsel %vm1121, %v1109, %v1124
      %v1126 = vsel %vm1120, %v1123, %v1125
      %v1127 = vsel %vm1119, %v1106, %v1109
      %v1128 = vsel %vm1122, %v1115, 920167782
      %v1129 = vsel %vm1121, %v1112, %v1128
      %v1130 = vsel %vm1120, %v1127, %v1129
      %v1131 = vsel %vm1119, %v1109, %v1112
      %v1132 = vsel %vm1122, %v1118, 1326507024
      %v1133 = vsel %vm1121, %v1115, %v1132
      %v1134 = vsel %vm1120, %v1131, %v1133
      %v1135 = vshll.u32 %v1095, 8
      %v1136 = vand.u32 %v1135, 65535
      %v1137 = vshrl.u32 %v1135, 16
      %v1138 = vand.u32 %v1134, 65535
      %v1139 = vshrl.u32 %v1134, 16
      %v1140 = vmul.u32 %v1136, %v1138
      %v1141 = vmul.u32 %v1136, %v1139
      %v1142 = vmul.u32 %v1137, %v1138
      %v1143 = vmul.u32 %v1137, %v1139
      %v1144 = vshll.u32 %v1141, 16
      %v1145 = vshrl.u32 %v1141, 16
      %v1146 = vshll.u32 %v1142, 16
      %v1147 = vshrl.u32 %v1142, 16
      %vm1148 = vc.u32 %v1140, %v1144
      %v1149 = vsel %vm1148, 1, 0
      %v1150 = vadd.s32 %v1140, %v1144
      %v1151 = vadd.s32 %v1143, %v1149
      %vm1152 = vc.u32 %v1150, %v1146
      %v1153 = vsel %vm1152, 1, 0
      %v1154 = vadd.s32 %v1150, %v1146
      %v1155 = vadd.s32 %v1151, %v1153
      %v1156 = vadd.s32 %v1155, %v1145
      %v1157 = vadd.s32 %v1156, %v1147
      %v1158 = vand.u32 %v1135, 65535
      %v1159 = vshrl.u32 %v1135, 16
      %v1160 = vand.u32 %v1130, 65535
      %v1161 = vshrl.u32 %v1130, 16
      %v1162 = vmul.u32 %v1158, %v1160
      %v1163 = vmul.u32 %v1158, %v1161
      %v1164 = vmul.u32 %v1159, %v1160
      %v1165 = vmul.u32 %v1159, %v1161
      %v1166 = vshll.u32 %v1163, 16
      %v1167 = vshrl.u32 %v1163, 16
      %v1168 = vshll.u32 %v1164, 16
      %v1169 = vshrl.u32 %v1164, 16
      %vm1170 = vc.u32 %v1162, %v1166
      %v1171 = vsel %vm1170, 1, 0
      %v1172 = vadd.s32 %v1162, %v1166
      %v1173 = vadd.s32 %v1165, %v1171
      %vm1174 = vc.u32 %v1172, %v1168
      %v1175 = vsel %vm1174, 1, 0
      %v1176 = vadd.s32 %v1172, %v1168
      %v1177 = vadd.s32 %v1173, %v1175
      %v1178 = vadd.s32 %v1177, %v1167
      %v1179 = vadd.s32 %v1178, %v1169
      %v1180 = vmul.u32 %v1135, %v1126
      %v1181 = vadd.s32 %v1157, %v1176
      %vm1182 = vc.u32 %v1157, %v1176
      %v1183 = vadd.s32 %v1179, 1
      %v1184 = vsel %vm1182, %v1183, %v1179
      %v1185 = vadd.s32 %v1180, %v1184
      %v1186 = vadd.s32 %v1185, 536870912
      %v1187 = vshrl.u32 %v1186, 30
      %v1188 = vshll.u32 %v1187, 30
      %v1189 = vsub.s32 %v1185, %v1188
      %vm1190 = vcmp.lt.s32.totalorder %v1189, 0
      %v1191 = vsub.s32 0, %v1189
      %v1192 = vsel %vm1190, %v1191, %v1189
      %v1193 = vclz %v1192
      %v1194 = vsub.s32 %v1193, 2
      %vm1195 = vcmp.gt.s32.totalorder 0, %v1194
      %v1196 = vsel %vm1195, 0, %v1194
      %v1197 = vsub.s32 32, %v1196
      %v1198 = vshll.u32 %v1189, %v1196
      %v1199 = vshrl.u32 %v1181, %v1197
      %v1200 = vor.u32 %v1198, %v1199
      %v1201 = vsub.s32 4294967266, %v1196
      %v1202 = vadd.s32 %v1201, 127
      %v1203 = vshll.u32 %v1202, 23
      %v1204 = vor.u32 4788187, %v1203
      %v1205 = vand.u32 2147483647, %v1204
      %v1207 = vcvt.s32.f32 %v1200
      %v1208 = vmul.f32 %v1207, %v1205
      %v1209 = vxor.u32 %v1208, 2147483648
      %v1210 = vsel %vm1089, %v1209, %v1208
      %v1211 = vsub.s32 4, %v1187
      %v1212 = vsel %vm1089, %v1211, %v1187
      %v1213 = vsel %vm1088, %v280, %v1210
      %v1214 = vsel %vm1088, 0, %v1212
      %v1215 = vmul.f32 %v1213, %v1213
      %v1216 = vmul.f32 %v1215, -0.001358992
      %v1217 = vadd.f32 %v1216, 0.041655596
      %v1218 = vmul.f32 %v1215, %v1217
      %v1219 = vadd.f32 %v1218, -0.4999988
      %v1220 = vmul.f32 %v1215, %v1219
      %v1221 = vadd.f32 1.0, %v1220
      %v1222 = vmul.f32 %v1213, %v1213
      %v1223 = vmul.f32 %v1222, -0.00019511016
      %v1224 = vadd.f32 %v1223, 0.008332121
      %v1225 = vmul.f32 %v1222, %v1224
      %v1226 = vadd.f32 %v1225, -0.16666654
      %v1227 = vmul.f32 %v1222, %v1226
      %v1228 = vadd.f32 %v1227, 1.0
      %v1229 = vmul.f32 %v1228, %v1213
      %vm1230 = vweird.f32 %v280
      %v1231 = vadd.s32 %v1214, 3
      %v1232 = vand.u32 %v1231, 3
      %vm1233 = vcmp.lt.s32.totalorder %v1232, 2
      %vm1234 = vcmp.eq.s32.totalorder %v1232, 0
      %v1235 = vxor.u32 %v1229, 2147483648
      %v1236 = vsel %vm1234, %v1221, %v1235
      %vm1237 = vcmp.eq.s32.totalorder %v1232, 2
      %v1238 = vxor.u32 %v1221, 2147483648
      %v1239 = vsel %vm1237, %v1238, %v1229
      %v1240 = vsel %vm1233, %v1236, %v1239
      %v1241 = vsel %vm1230, nan, %v1240
      %v1242 = vand.u32 2147483647, %v283
      %vm1243 = vcmp.le.f32.partialorder %v1242, 0.7853982
      %vm1244 = vcmp.lt.s32.totalorder %v283, 0
      %v1245 = vand.u32 %v283, 2139095040
      %v1246 = vshrl.u32 %v1245, 23
      %v1247 = vsub.s32 %v1246, 127
      %v1248 = vand.u32 2147483647, %v283
      %v1249 = vand.u32 %v1248, 8388607
      %v1250 = vor.u32 %v1249, 8388608
      %v1251 = vsub.s32 0, %v1250
      %v1252 = vadd.s32 %v1247, 1
      %vm1253 = vcmp.gt.s32.totalorder %v1252, 0
      %v1254 = vsel %vm1253, %v1252, 0
      %v1255 = vshrl.u32 %v1254, 5
      %v1256 = vand.u32 %v1254, 31
      %v1257 = vsub.s32 32, %v1256
      %v1258 = vshrl.u32 683565275, %v1257
      %v1259 = vshll.u32 683565275, %v1256
      %v1260 = vshrl.u32 2475754826, %v1257
      %v1261 = vor.u32 %v1259, %v1260
      %v1262 = vshll.u32 2475754826, %v1256
      %v1263 = vshrl.u32 2131351028, %v1257
      %v1264 = vor.u32 %v1262, %v1263
      %v1265 = vshll.u32 2131351028, %v1256
      %v1266 = vshrl.u32 2102212464, %v1257
      %v1267 = vor.u32 %v1265, %v1266
      %v1268 = vshll.u32 2102212464, %v1256
      %v1269 = vshrl.u32 920167782, %v1257
      %v1270 = vor.u32 %v1268, %v1269
      %v1271 = vshll.u32 920167782, %v1256
      %v1272 = vshrl.u32 1326507024, %v1257
      %v1273 = vor.u32 %v1271, %v1272
      %vm1274 = vcmp.lt.s32.totalorder %v1255, 1
      %vm1275 = vcmp.lt.s32.totalorder %v1255, 2
      %vm1276 = vcmp.lt.s32.totalorder %v1255, 3
      %vm1277 = vcmp.lt.s32.totalorder %v1255, 4
      %v1278 = vsel %vm1274, %v1258, %v1261
      %v1279 = vsel %vm1277, %v1267, 2102212464
      %v1280 = vsel %vm1276, %v1264, %v1279
      %v1281 = vsel %vm1275, %v1278, %v1280
      %v1282 = vsel %vm1274, %v1261, %v1264
      %v1283 = vsel %vm1277, %v1270, 920167782
      %v1284 = vsel %vm1276, %v1267, %v1283
      %v1285 = vsel %vm1275, %v1282, %v1284
      %v1286 = vsel %vm1274, %v1264, %v1267
      %v1287 = vsel %vm1277, %v1273, 1326507024
      %v1288 = vsel %vm1276, %v1270, %v1287
      %v1289 = vsel %vm1275, %v1286, %v1288
      %v1290 = vshll.u32 %v1250, 8
      %v1291 = vand.u32 %v1290, 65535
      %v1292 = vshrl.u32 %v1290, 16
      %v1293 = vand.u32 %v1289, 65535
      %v1294 = vshrl.u32 %v1289, 16
      %v1295 = vmul.u32 %v1291, %v1293
      %v1296 = vmul.u32 %v1291, %v1294
      %v1297 = vmul.u32 %v1292, %v1293
      %v1298 = vmul.u32 %v1292, %v1294
      %v1299 = vshll.u32 %v1296, 16
      %v1300 = vshrl.u32 %v1296, 16
      %v1301 = vshll.u32 %v1297, 16
      %v1302 = vshrl.u32 %v1297, 16
      %vm1303 = vc.u32 %v1295, %v1299
      %v1304 = vsel %vm1303, 1, 0
      %v1305 = vadd.s32 %v1295, %v1299
      %v1306 = vadd.s32 %v1298, %v1304
      %vm1307 = vc.u32 %v1305, %v1301
      %v1308 = vsel %vm1307, 1, 0
      %v1309 = vadd.s32 %v1305, %v1301
      %v1310 = vadd.s32 %v1306, %v1308
      %v1311 = vadd.s32 %v1310, %v1300
      %v1312 = vadd.s32 %v1311, %v1302
      %v1313 = vand.u32 %v1290, 65535
      %v1314 = vshrl.u32 %v1290, 16
      %v1315 = vand.u32 %v1285, 65535
      %v1316 = vshrl.u32 %v1285, 16
      %v1317 = vmul.u32 %v1313, %v1315
      %v1318 = vmul.u32 %v1313, %v1316
      %v1319 = vmul.u32 %v1314, %v1315
      %v1320 = vmul.u32 %v1314, %v1316
      %v1321 = vshll.u32 %v1318, 16
      %v1322 = vshrl.u32 %v1318, 16
      %v1323 = vshll.u32 %v1319, 16
      %v1324 = vshrl.u32 %v1319, 16
      %vm1325 = vc.u32 %v1317, %v1321
      %v1326 = vsel %vm1325, 1, 0
      %v1327 = vadd.s32 %v1317, %v1321
      %v1328 = vadd.s32 %v1320, %v1326
      %vm1329 = vc.u32 %v1327, %v1323
      %v1330 = vsel %vm1329, 1, 0
      %v1331 = vadd.s32 %v1327, %v1323
      %v1332 = vadd.s32 %v1328, %v1330
      %v1333 = vadd.s32 %v1332, %v1322
      %v1334 = vadd.s32 %v1333, %v1324
      %v1335 = vmul.u32 %v1290, %v1281
      %v1336 = vadd.s32 %v1312, %v1331
      %vm1337 = vc.u32 %v1312, %v1331
      %v1338 = vadd.s32 %v1334, 1
      %v1339 = vsel %vm1337, %v1338, %v1334
      %v1340 = vadd.s32 %v1335, %v1339
      %v1341 = vadd.s32 %v1340, 536870912
      %v1342 = vshrl.u32 %v1341, 30
      %v1343 = vshll.u32 %v1342, 30
      %v1344 = vsub.s32 %v1340, %v1343
      %vm1345 = vcmp.lt.s32.totalorder %v1344, 0
      %v1346 = vsub.s32 0, %v1344
      %v1347 = vsel %vm1345, %v1346, %v1344
      %v1348 = vclz %v1347
      %v1349 = vsub.s32 %v1348, 2
      %vm1350 = vcmp.gt.s32.totalorder 0, %v1349
      %v1351 = vsel %vm1350, 0, %v1349
      %v1352 = vsub.s32 32, %v1351
      %v1353 = vshll.u32 %v1344, %v1351
      %v1354 = vshrl.u32 %v1336, %v1352
      %v1355 = vor.u32 %v1353, %v1354
      %v1356 = vsub.s32 4294967266, %v1351
      %v1357 = vadd.s32 %v1356, 127
      %v1358 = vshll.u32 %v1357, 23
      %v1359 = vor.u32 4788187, %v1358
      %v1360 = vand.u32 2147483647, %v1359
      %v1362 = vcvt.s32.f32 %v1355
      %v1363 = vmul.f32 %v1362, %v1360
      %v1364 = vxor.u32 %v1363, 2147483648
      %v1365 = vsel %vm1244, %v1364, %v1363
      %v1366 = vsub.s32 4, %v1342
      %v1367 = vsel %vm1244, %v1366, %v1342
      %v1368 = vsel %vm1243, %v283, %v1365
      %v1369 = vsel %vm1243, 0, %v1367
      %v1370 = vmul.f32 %v1368, %v1368
      %v1371 = vmul.f32 %v1370, -0.001358992
      %v1372 = vadd.f32 %v1371, 0.041655596
      %v1373 = vmul.f32 %v1370, %v1372
      %v1374 = vadd.f32 %v1373, -0.4999988
      %v1375 = vmul.f32 %v1370, %v1374
      %v1376 = vadd.f32 1.0, %v1375
      %v1377 = vmul.f32 %v1368, %v1368
      %v1378 = vmul.f32 %v1377, -0.00019511016
      %v1379 = vadd.f32 %v1378, 0.008332121
      %v1380 = vmul.f32 %v1377, %v1379
      %v1381 = vadd.f32 %v1380, -0.16666654
      %v1382 = vmul.f32 %v1377, %v1381
      %v1383 = vadd.f32 %v1382, 1.0
      %v1384 = vmul.f32 %v1383, %v1368
      %vm1385 = vweird.f32 %v283
      %v1386 = vadd.s32 %v1369, 3
      %v1387 = vand.u32 %v1386, 3
      %vm1388 = vcmp.lt.s32.totalorder %v1387, 2
      %vm1389 = vcmp.eq.s32.totalorder %v1387, 0
      %v1390 = vxor.u32 %v1384, 2147483648
      %v1391 = vsel %vm1389, %v1376, %v1390
      %vm1392 = vcmp.eq.s32.totalorder %v1387, 2
      %v1393 = vxor.u32 %v1376, 2147483648
      %v1394 = vsel %vm1392, %v1393, %v1384
      %v1395 = vsel %vm1388, %v1391, %v1394
      %v1396 = vsel %vm1385, nan, %v1395
      %v1397 = vand.u32 2147483647, %v286
      %vm1398 = vcmp.le.f32.partialorder %v1397, 0.7853982
      %vm1399 = vcmp.lt.s32.totalorder %v286, 0
      %v1400 = vand.u32 %v286, 2139095040
      %v1401 = vshrl.u32 %v1400, 23
      %v1402 = vsub.s32 %v1401, 127
      %v1403 = vand.u32 2147483647, %v286
      %v1404 = vand.u32 %v1403, 8388607
      %v1405 = vor.u32 %v1404, 8388608
      %v1406 = vsub.s32 0, %v1405
      %v1407 = vadd.s32 %v1402, 1
      %vm1408 = vcmp.gt.s32.totalorder %v1407, 0
      %v1409 = vsel %vm1408, %v1407, 0
      %v1410 = vshrl.u32 %v1409, 5
      %v1411 = vand.u32 %v1409, 31
      %v1412 = vsub.s32 32, %v1411
      %v1413 = vshrl.u32 683565275, %v1412
      %v1414 = vshll.u32 683565275, %v1411
      %v1415 = vshrl.u32 2475754826, %v1412
      %v1416 = vor.u32 %v1414, %v1415
      %v1417 = vshll.u32 2475754826, %v1411
      %v1418 = vshrl.u32 2131351028, %v1412
      %v1419 = vor.u32 %v1417, %v1418
      %v1420 = vshll.u32 2131351028, %v1411
      %v1421 = vshrl.u32 2102212464, %v1412
      %v1422 = vor.u32 %v1420, %v1421
      %v1423 = vshll.u32 2102212464, %v1411
      %v1424 = vshrl.u32 920167782, %v1412
      %v1425 = vor.u32 %v1423, %v1424
      %v1426 = vshll.u32 920167782, %v1411
      %v1427 = vshrl.u32 1326507024, %v1412
      %v1428 = vor.u32 %v1426, %v1427
      %vm1429 = vcmp.lt.s32.totalorder %v1410, 1
      %vm1430 = vcmp.lt.s32.totalorder %v1410, 2
      %vm1431 = vcmp.lt.s32.totalorder %v1410, 3
      %vm1432 = vcmp.lt.s32.totalorder %v1410, 4
      %v1433 = vsel %vm1429, %v1413, %v1416
      %v1434 = vsel %vm1432, %v1422, 2102212464
      %v1435 = vsel %vm1431, %v1419, %v1434
      %v1436 = vsel %vm1430, %v1433, %v1435
      %v1437 = vsel %vm1429, %v1416, %v1419
      %v1438 = vsel %vm1432, %v1425, 920167782
      %v1439 = vsel %vm1431, %v1422, %v1438
      %v1440 = vsel %vm1430, %v1437, %v1439
      %v1441 = vsel %vm1429, %v1419, %v1422
      %v1442 = vsel %vm1432, %v1428, 1326507024
      %v1443 = vsel %vm1431, %v1425, %v1442
      %v1444 = vsel %vm1430, %v1441, %v1443
      %v1445 = vshll.u32 %v1405, 8
      %v1446 = vand.u32 %v1445, 65535
      %v1447 = vshrl.u32 %v1445, 16
      %v1448 = vand.u32 %v1444, 65535
      %v1449 = vshrl.u32 %v1444, 16
      %v1450 = vmul.u32 %v1446, %v1448
      %v1451 = vmul.u32 %v1446, %v1449
      %v1452 = vmul.u32 %v1447, %v1448
      %v1453 = vmul.u32 %v1447, %v1449
      %v1454 = vshll.u32 %v1451, 16
      %v1455 = vshrl.u32 %v1451, 16
      %v1456 = vshll.u32 %v1452, 16
      %v1457 = vshrl.u32 %v1452, 16
      %vm1458 = vc.u32 %v1450, %v1454
      %v1459 = vsel %vm1458, 1, 0
      %v1460 = vadd.s32 %v1450, %v1454
      %v1461 = vadd.s32 %v1453, %v1459
      %vm1462 = vc.u32 %v1460, %v1456
      %v1463 = vsel %vm1462, 1, 0
      %v1464 = vadd.s32 %v1460, %v1456
      %v1465 = vadd.s32 %v1461, %v1463
      %v1466 = vadd.s32 %v1465, %v1455
      %v1467 = vadd.s32 %v1466, %v1457
      %v1468 = vand.u32 %v1445, 65535
      %v1469 = vshrl.u32 %v1445, 16
      %v1470 = vand.u32 %v1440, 65535
      %v1471 = vshrl.u32 %v1440, 16
      %v1472 = vmul.u32 %v1468, %v1470
      %v1473 = vmul.u32 %v1468, %v1471
      %v1474 = vmul.u32 %v1469, %v1470
      %v1475 = vmul.u32 %v1469, %v1471
      %v1476 = vshll.u32 %v1473, 16
      %v1477 = vshrl.u32 %v1473, 16
      %v1478 = vshll.u32 %v1474, 16
      %v1479 = vshrl.u32 %v1474, 16
      %vm1480 = vc.u32 %v1472, %v1476
      %v1481 = vsel %vm1480, 1, 0
      %v1482 = vadd.s32 %v1472, %v1476
      %v1483 = vadd.s32 %v1475, %v1481
      %vm1484 = vc.u32 %v1482, %v1478
      %v1485 = vsel %vm1484, 1, 0
      %v1486 = vadd.s32 %v1482, %v1478
      %v1487 = vadd.s32 %v1483, %v1485
      %v1488 = vadd.s32 %v1487, %v1477
      %v1489 = vadd.s32 %v1488, %v1479
      %v1490 = vmul.u32 %v1445, %v1436
      %v1491 = vadd.s32 %v1467, %v1486
      %vm1492 = vc.u32 %v1467, %v1486
      %v1493 = vadd.s32 %v1489, 1
      %v1494 = vsel %vm1492, %v1493, %v1489
      %v1495 = vadd.s32 %v1490, %v1494
      %v1496 = vadd.s32 %v1495, 536870912
      %v1497 = vshrl.u32 %v1496, 30
      %v1498 = vshll.u32 %v1497, 30
      %v1499 = vsub.s32 %v1495, %v1498
      %vm1500 = vcmp.lt.s32.totalorder %v1499, 0
      %v1501 = vsub.s32 0, %v1499
      %v1502 = vsel %vm1500, %v1501, %v1499
      %v1503 = vclz %v1502
      %v1504 = vsub.s32 %v1503, 2
      %vm1505 = vcmp.gt.s32.totalorder 0, %v1504
      %v1506 = vsel %vm1505, 0, %v1504
      %v1507 = vsub.s32 32, %v1506
      %v1508 = vshll.u32 %v1499, %v1506
      %v1509 = vshrl.u32 %v1491, %v1507
      %v1510 = vor.u32 %v1508, %v1509
      %v1511 = vsub.s32 4294967266, %v1506
      %v1512 = vadd.s32 %v1511, 127
      %v1513 = vshll.u32 %v1512, 23
      %v1514 = vor.u32 4788187, %v1513
      %v1515 = vand.u32 2147483647, %v1514
      %v1517 = vcvt.s32.f32 %v1510
      %v1518 = vmul.f32 %v1517, %v1515
      %v1519 = vxor.u32 %v1518, 2147483648
      %v1520 = vsel %vm1399, %v1519, %v1518
      %v1521 = vsub.s32 4, %v1497
      %v1522 = vsel %vm1399, %v1521, %v1497
      %v1523 = vsel %vm1398, %v286, %v1520
      %v1524 = vsel %vm1398, 0, %v1522
      %v1525 = vmul.f32 %v1523, %v1523
      %v1526 = vmul.f32 %v1525, -0.001358992
      %v1527 = vadd.f32 %v1526, 0.041655596
      %v1528 = vmul.f32 %v1525, %v1527
      %v1529 = vadd.f32 %v1528, -0.4999988
      %v1530 = vmul.f32 %v1525, %v1529
      %v1531 = vadd.f32 1.0, %v1530
      %v1532 = vmul.f32 %v1523, %v1523
      %v1533 = vmul.f32 %v1532, -0.00019511016
      %v1534 = vadd.f32 %v1533, 0.008332121
      %v1535 = vmul.f32 %v1532, %v1534
      %v1536 = vadd.f32 %v1535, -0.16666654
      %v1537 = vmul.f32 %v1532, %v1536
      %v1538 = vadd.f32 %v1537, 1.0
      %v1539 = vmul.f32 %v1538, %v1523
      %vm1540 = vweird.f32 %v286
      %v1541 = vadd.s32 %v1524, 3
      %v1542 = vand.u32 %v1541, 3
      %vm1543 = vcmp.lt.s32.totalorder %v1542, 2
      %vm1544 = vcmp.eq.s32.totalorder %v1542, 0
      %v1545 = vxor.u32 %v1539, 2147483648
      %v1546 = vsel %vm1544, %v1531, %v1545
      %vm1547 = vcmp.eq.s32.totalorder %v1542, 2
      %v1548 = vxor.u32 %v1531, 2147483648
      %v1549 = vsel %vm1547, %v1548, %v1539
      %v1550 = vsel %vm1543, %v1546, %v1549
      %v1551 = vsel %vm1540, nan, %v1550
      %v1552 = vand.u32 2147483647, %v289
      %vm1553 = vcmp.le.f32.partialorder %v1552, 0.7853982
      %vm1554 = vcmp.lt.s32.totalorder %v289, 0
      %v1555 = vand.u32 %v289, 2139095040
      %v1556 = vshrl.u32 %v1555, 23
      %v1557 = vsub.s32 %v1556, 127
      %v1558 = vand.u32 2147483647, %v289
      %v1559 = vand.u32 %v1558, 8388607
      %v1560 = vor.u32 %v1559, 8388608
      %v1561 = vsub.s32 0, %v1560
      %v1562 = vadd.s32 %v1557, 1
      %vm1563 = vcmp.gt.s32.totalorder %v1562, 0
      %v1564 = vsel %vm1563, %v1562, 0
      %v1565 = vshrl.u32 %v1564, 5
      %v1566 = vand.u32 %v1564, 31
      %v1567 = vsub.s32 32, %v1566
      %v1568 = vshrl.u32 683565275, %v1567
      %v1569 = vshll.u32 683565275, %v1566
      %v1570 = vshrl.u32 2475754826, %v1567
      %v1571 = vor.u32 %v1569, %v1570
      %v1572 = vshll.u32 2475754826, %v1566
      %v1573 = vshrl.u32 2131351028, %v1567
      %v1574 = vor.u32 %v1572, %v1573
      %v1575 = vshll.u32 2131351028, %v1566
      %v1576 = vshrl.u32 2102212464, %v1567
      %v1577 = vor.u32 %v1575, %v1576
      %v1578 = vshll.u32 2102212464, %v1566
      %v1579 = vshrl.u32 920167782, %v1567
      %v1580 = vor.u32 %v1578, %v1579
      %v1581 = vshll.u32 920167782, %v1566
      %v1582 = vshrl.u32 1326507024, %v1567
      %v1583 = vor.u32 %v1581, %v1582
      %vm1584 = vcmp.lt.s32.totalorder %v1565, 1
      %vm1585 = vcmp.lt.s32.totalorder %v1565, 2
      %vm1586 = vcmp.lt.s32.totalorder %v1565, 3
      %vm1587 = vcmp.lt.s32.totalorder %v1565, 4
      %v1588 = vsel %vm1584, %v1568, %v1571
      %v1589 = vsel %vm1587, %v1577, 2102212464
      %v1590 = vsel %vm1586, %v1574, %v1589
      %v1591 = vsel %vm1585, %v1588, %v1590
      %v1592 = vsel %vm1584, %v1571, %v1574
      %v1593 = vsel %vm1587, %v1580, 920167782
      %v1594 = vsel %vm1586, %v1577, %v1593
      %v1595 = vsel %vm1585, %v1592, %v1594
      %v1596 = vsel %vm1584, %v1574, %v1577
      %v1597 = vsel %vm1587, %v1583, 1326507024
      %v1598 = vsel %vm1586, %v1580, %v1597
      %v1599 = vsel %vm1585, %v1596, %v1598
      %v1600 = vshll.u32 %v1560, 8
      %v1601 = vand.u32 %v1600, 65535
      %v1602 = vshrl.u32 %v1600, 16
      %v1603 = vand.u32 %v1599, 65535
      %v1604 = vshrl.u32 %v1599, 16
      %v1605 = vmul.u32 %v1601, %v1603
      %v1606 = vmul.u32 %v1601, %v1604
      %v1607 = vmul.u32 %v1602, %v1603
      %v1608 = vmul.u32 %v1602, %v1604
      %v1609 = vshll.u32 %v1606, 16
      %v1610 = vshrl.u32 %v1606, 16
      %v1611 = vshll.u32 %v1607, 16
      %v1612 = vshrl.u32 %v1607, 16
      %vm1613 = vc.u32 %v1605, %v1609
      %v1614 = vsel %vm1613, 1, 0
      %v1615 = vadd.s32 %v1605, %v1609
      %v1616 = vadd.s32 %v1608, %v1614
      %vm1617 = vc.u32 %v1615, %v1611
      %v1618 = vsel %vm1617, 1, 0
      %v1619 = vadd.s32 %v1615, %v1611
      %v1620 = vadd.s32 %v1616, %v1618
      %v1621 = vadd.s32 %v1620, %v1610
      %v1622 = vadd.s32 %v1621, %v1612
      %v1623 = vand.u32 %v1600, 65535
      %v1624 = vshrl.u32 %v1600, 16
      %v1625 = vand.u32 %v1595, 65535
      %v1626 = vshrl.u32 %v1595, 16
      %v1627 = vmul.u32 %v1623, %v1625
      %v1628 = vmul.u32 %v1623, %v1626
      %v1629 = vmul.u32 %v1624, %v1625
      %v1630 = vmul.u32 %v1624, %v1626
      %v1631 = vshll.u32 %v1628, 16
      %v1632 = vshrl.u32 %v1628, 16
      %v1633 = vshll.u32 %v1629, 16
      %v1634 = vshrl.u32 %v1629, 16
      %vm1635 = vc.u32 %v1627, %v1631
      %v1636 = vsel %vm1635, 1, 0
      %v1637 = vadd.s32 %v1627, %v1631
      %v1638 = vadd.s32 %v1630, %v1636
      %vm1639 = vc.u32 %v1637, %v1633
      %v1640 = vsel %vm1639, 1, 0
      %v1641 = vadd.s32 %v1637, %v1633
      %v1642 = vadd.s32 %v1638, %v1640
      %v1643 = vadd.s32 %v1642, %v1632
      %v1644 = vadd.s32 %v1643, %v1634
      %v1645 = vmul.u32 %v1600, %v1591
      %v1646 = vadd.s32 %v1622, %v1641
      %vm1647 = vc.u32 %v1622, %v1641
      %v1648 = vadd.s32 %v1644, 1
      %v1649 = vsel %vm1647, %v1648, %v1644
      %v1650 = vadd.s32 %v1645, %v1649
      %v1651 = vadd.s32 %v1650, 536870912
      %v1652 = vshrl.u32 %v1651, 30
      %v1653 = vshll.u32 %v1652, 30
      %v1654 = vsub.s32 %v1650, %v1653
      %vm1655 = vcmp.lt.s32.totalorder %v1654, 0
      %v1656 = vsub.s32 0, %v1654
      %v1657 = vsel %vm1655, %v1656, %v1654
      %v1658 = vclz %v1657
      %v1659 = vsub.s32 %v1658, 2
      %vm1660 = vcmp.gt.s32.totalorder 0, %v1659
      %v1661 = vsel %vm1660, 0, %v1659
      %v1662 = vsub.s32 32, %v1661
      %v1663 = vshll.u32 %v1654, %v1661
      %v1664 = vshrl.u32 %v1646, %v1662
      %v1665 = vor.u32 %v1663, %v1664
      %v1666 = vsub.s32 4294967266, %v1661
      %v1667 = vadd.s32 %v1666, 127
      %v1668 = vshll.u32 %v1667, 23
      %v1669 = vor.u32 4788187, %v1668
      %v1670 = vand.u32 2147483647, %v1669
      %v1672 = vcvt.s32.f32 %v1665
      %v1673 = vmul.f32 %v1672, %v1670
      %v1674 = vxor.u32 %v1673, 2147483648
      %v1675 = vsel %vm1554, %v1674, %v1673
      %v1676 = vsub.s32 4, %v1652
      %v1677 = vsel %vm1554, %v1676, %v1652
      %v1678 = vsel %vm1553, %v289, %v1675
      %v1679 = vsel %vm1553, 0, %v1677
      %v1680 = vmul.f32 %v1678, %v1678
      %v1681 = vmul.f32 %v1680, -0.001358992
      %v1682 = vadd.f32 %v1681, 0.041655596
      %v1683 = vmul.f32 %v1680, %v1682
      %v1684 = vadd.f32 %v1683, -0.4999988
      %v1685 = vmul.f32 %v1680, %v1684
      %v1686 = vadd.f32 1.0, %v1685
      %v1687 = vmul.f32 %v1678, %v1678
      %v1688 = vmul.f32 %v1687, -0.00019511016
      %v1689 = vadd.f32 %v1688, 0.008332121
      %v1690 = vmul.f32 %v1687, %v1689
      %v1691 = vadd.f32 %v1690, -0.16666654
      %v1692 = vmul.f32 %v1687, %v1691
      %v1693 = vadd.f32 %v1692, 1.0
      %v1694 = vmul.f32 %v1693, %v1678
      %vm1695 = vweird.f32 %v289
      %v1696 = vadd.s32 %v1679, 3
      %v1697 = vand.u32 %v1696, 3
      %vm1698 = vcmp.lt.s32.totalorder %v1697, 2
      %vm1699 = vcmp.eq.s32.totalorder %v1697, 0
      %v1700 = vxor.u32 %v1694, 2147483648
      %v1701 = vsel %vm1699, %v1686, %v1700
      %vm1702 = vcmp.eq.s32.totalorder %v1697, 2
      %v1703 = vxor.u32 %v1686, 2147483648
      %v1704 = vsel %vm1702, %v1703, %v1694
      %v1705 = vsel %vm1698, %v1701, %v1704
      %v1706 = vsel %vm1695, nan, %v1705
      %v1707 = vand.u32 2147483647, %v292
      %vm1708 = vcmp.le.f32.partialorder %v1707, 0.7853982
      %vm1709 = vcmp.lt.s32.totalorder %v292, 0
      %v1710 = vand.u32 %v292, 2139095040
      %v1711 = vshrl.u32 %v1710, 23
      %v1712 = vsub.s32 %v1711, 127
      %v1713 = vand.u32 2147483647, %v292
      %v1714 = vand.u32 %v1713, 8388607
      %v1715 = vor.u32 %v1714, 8388608
      %v1716 = vsub.s32 0, %v1715
      %v1717 = vadd.s32 %v1712, 1
      %vm1718 = vcmp.gt.s32.totalorder %v1717, 0
      %v1719 = vsel %vm1718, %v1717, 0
      %v1720 = vshrl.u32 %v1719, 5
      %v1721 = vand.u32 %v1719, 31
      %v1722 = vsub.s32 32, %v1721
      %v1723 = vshrl.u32 683565275, %v1722
      %v1724 = vshll.u32 683565275, %v1721
      %v1725 = vshrl.u32 2475754826, %v1722
      %v1726 = vor.u32 %v1724, %v1725
      %v1727 = vshll.u32 2475754826, %v1721
      %v1728 = vshrl.u32 2131351028, %v1722
      %v1729 = vor.u32 %v1727, %v1728
      %v1730 = vshll.u32 2131351028, %v1721
      %v1731 = vshrl.u32 2102212464, %v1722
      %v1732 = vor.u32 %v1730, %v1731
      %v1733 = vshll.u32 2102212464, %v1721
      %v1734 = vshrl.u32 920167782, %v1722
      %v1735 = vor.u32 %v1733, %v1734
      %v1736 = vshll.u32 920167782, %v1721
      %v1737 = vshrl.u32 1326507024, %v1722
      %v1738 = vor.u32 %v1736, %v1737
      %vm1739 = vcmp.lt.s32.totalorder %v1720, 1
      %vm1740 = vcmp.lt.s32.totalorder %v1720, 2
      %vm1741 = vcmp.lt.s32.totalorder %v1720, 3
      %vm1742 = vcmp.lt.s32.totalorder %v1720, 4
      %v1743 = vsel %vm1739, %v1723, %v1726
      %v1744 = vsel %vm1742, %v1732, 2102212464
      %v1745 = vsel %vm1741, %v1729, %v1744
      %v1746 = vsel %vm1740, %v1743, %v1745
      %v1747 = vsel %vm1739, %v1726, %v1729
      %v1748 = vsel %vm1742, %v1735, 920167782
      %v1749 = vsel %vm1741, %v1732, %v1748
      %v1750 = vsel %vm1740, %v1747, %v1749
      %v1751 = vsel %vm1739, %v1729, %v1732
      %v1752 = vsel %vm1742, %v1738, 1326507024
      %v1753 = vsel %vm1741, %v1735, %v1752
      %v1754 = vsel %vm1740, %v1751, %v1753
      %v1755 = vshll.u32 %v1715, 8
      %v1756 = vand.u32 %v1755, 65535
      %v1757 = vshrl.u32 %v1755, 16
      %v1758 = vand.u32 %v1754, 65535
      %v1759 = vshrl.u32 %v1754, 16
      %v1760 = vmul.u32 %v1756, %v1758
      %v1761 = vmul.u32 %v1756, %v1759
      %v1762 = vmul.u32 %v1757, %v1758
      %v1763 = vmul.u32 %v1757, %v1759
      %v1764 = vshll.u32 %v1761, 16
      %v1765 = vshrl.u32 %v1761, 16
      %v1766 = vshll.u32 %v1762, 16
      %v1767 = vshrl.u32 %v1762, 16
      %vm1768 = vc.u32 %v1760, %v1764
      %v1769 = vsel %vm1768, 1, 0
      %v1770 = vadd.s32 %v1760, %v1764
      %v1771 = vadd.s32 %v1763, %v1769
      %vm1772 = vc.u32 %v1770, %v1766
      %v1773 = vsel %vm1772, 1, 0
      %v1774 = vadd.s32 %v1770, %v1766
      %v1775 = vadd.s32 %v1771, %v1773
      %v1776 = vadd.s32 %v1775, %v1765
      %v1777 = vadd.s32 %v1776, %v1767
      %v1778 = vand.u32 %v1755, 65535
      %v1779 = vshrl.u32 %v1755, 16
      %v1780 = vand.u32 %v1750, 65535
      %v1781 = vshrl.u32 %v1750, 16
      %v1782 = vmul.u32 %v1778, %v1780
      %v1783 = vmul.u32 %v1778, %v1781
      %v1784 = vmul.u32 %v1779, %v1780
      %v1785 = vmul.u32 %v1779, %v1781
      %v1786 = vshll.u32 %v1783, 16
      %v1787 = vshrl.u32 %v1783, 16
      %v1788 = vshll.u32 %v1784, 16
      %v1789 = vshrl.u32 %v1784, 16
      %vm1790 = vc.u32 %v1782, %v1786
      %v1791 = vsel %vm1790, 1, 0
      %v1792 = vadd.s32 %v1782, %v1786
      %v1793 = vadd.s32 %v1785, %v1791
      %vm1794 = vc.u32 %v1792, %v1788
      %v1795 = vsel %vm1794, 1, 0
      %v1796 = vadd.s32 %v1792, %v1788
      %v1797 = vadd.s32 %v1793, %v1795
      %v1798 = vadd.s32 %v1797, %v1787
      %v1799 = vadd.s32 %v1798, %v1789
      %v1800 = vmul.u32 %v1755, %v1746
      %v1801 = vadd.s32 %v1777, %v1796
      %vm1802 = vc.u32 %v1777, %v1796
      %v1803 = vadd.s32 %v1799, 1
      %v1804 = vsel %vm1802, %v1803, %v1799
      %v1805 = vadd.s32 %v1800, %v1804
      %v1806 = vadd.s32 %v1805, 536870912
      %v1807 = vshrl.u32 %v1806, 30
      %v1808 = vshll.u32 %v1807, 30
      %v1809 = vsub.s32 %v1805, %v1808
      %vm1810 = vcmp.lt.s32.totalorder %v1809, 0
      %v1811 = vsub.s32 0, %v1809
      %v1812 = vsel %vm1810, %v1811, %v1809
      %v1813 = vclz %v1812
      %v1814 = vsub.s32 %v1813, 2
      %vm1815 = vcmp.gt.s32.totalorder 0, %v1814
      %v1816 = vsel %vm1815, 0, %v1814
      %v1817 = vsub.s32 32, %v1816
      %v1818 = vshll.u32 %v1809, %v1816
      %v1819 = vshrl.u32 %v1801, %v1817
      %v1820 = vor.u32 %v1818, %v1819
      %v1821 = vsub.s32 4294967266, %v1816
      %v1822 = vadd.s32 %v1821, 127
      %v1823 = vshll.u32 %v1822, 23
      %v1824 = vor.u32 4788187, %v1823
      %v1825 = vand.u32 2147483647, %v1824
      %v1827 = vcvt.s32.f32 %v1820
      %v1828 = vmul.f32 %v1827, %v1825
      %v1829 = vxor.u32 %v1828, 2147483648
      %v1830 = vsel %vm1709, %v1829, %v1828
      %v1831 = vsub.s32 4, %v1807
      %v1832 = vsel %vm1709, %v1831, %v1807
      %v1833 = vsel %vm1708, %v292, %v1830
      %v1834 = vsel %vm1708, 0, %v1832
      %v1835 = vmul.f32 %v1833, %v1833
      %v1836 = vmul.f32 %v1835, -0.001358992
      %v1837 = vadd.f32 %v1836, 0.041655596
      %v1838 = vmul.f32 %v1835, %v1837
      %v1839 = vadd.f32 %v1838, -0.4999988
      %v1840 = vmul.f32 %v1835, %v1839
      %v1841 = vadd.f32 1.0, %v1840
      %v1842 = vmul.f32 %v1833, %v1833
      %v1843 = vmul.f32 %v1842, -0.00019511016
      %v1844 = vadd.f32 %v1843, 0.008332121
      %v1845 = vmul.f32 %v1842, %v1844
      %v1846 = vadd.f32 %v1845, -0.16666654
      %v1847 = vmul.f32 %v1842, %v1846
      %v1848 = vadd.f32 %v1847, 1.0
      %v1849 = vmul.f32 %v1848, %v1833
      %vm1850 = vweird.f32 %v292
      %v1851 = vadd.s32 %v1834, 3
      %v1852 = vand.u32 %v1851, 3
      %vm1853 = vcmp.lt.s32.totalorder %v1852, 2
      %vm1854 = vcmp.eq.s32.totalorder %v1852, 0
      %v1855 = vxor.u32 %v1849, 2147483648
      %v1856 = vsel %vm1854, %v1841, %v1855
      %vm1857 = vcmp.eq.s32.totalorder %v1852, 2
      %v1858 = vxor.u32 %v1841, 2147483648
      %v1859 = vsel %vm1857, %v1858, %v1849
      %v1860 = vsel %vm1853, %v1856, %v1859
      %v1861 = vsel %vm1850, nan, %v1860
      %v1862 = vand.u32 2147483647, %v295
      %vm1863 = vcmp.le.f32.partialorder %v1862, 0.7853982
      %vm1864 = vcmp.lt.s32.totalorder %v295, 0
      %v1865 = vand.u32 %v295, 2139095040
      %v1866 = vshrl.u32 %v1865, 23
      %v1867 = vsub.s32 %v1866, 127
      %v1868 = vand.u32 2147483647, %v295
      %v1869 = vand.u32 %v1868, 8388607
      %v1870 = vor.u32 %v1869, 8388608
      %v1871 = vsub.s32 0, %v1870
      %v1872 = vadd.s32 %v1867, 1
      %vm1873 = vcmp.gt.s32.totalorder %v1872, 0
      %v1874 = vsel %vm1873, %v1872, 0
      %v1875 = vshrl.u32 %v1874, 5
      %v1876 = vand.u32 %v1874, 31
      %v1877 = vsub.s32 32, %v1876
      %v1878 = vshrl.u32 683565275, %v1877
      %v1879 = vshll.u32 683565275, %v1876
      %v1880 = vshrl.u32 2475754826, %v1877
      %v1881 = vor.u32 %v1879, %v1880
      %v1882 = vshll.u32 2475754826, %v1876
      %v1883 = vshrl.u32 2131351028, %v1877
      %v1884 = vor.u32 %v1882, %v1883
      %v1885 = vshll.u32 2131351028, %v1876
      %v1886 = vshrl.u32 2102212464, %v1877
      %v1887 = vor.u32 %v1885, %v1886
      %v1888 = vshll.u32 2102212464, %v1876
      %v1889 = vshrl.u32 920167782, %v1877
      %v1890 = vor.u32 %v1888, %v1889
      %v1891 = vshll.u32 920167782, %v1876
      %v1892 = vshrl.u32 1326507024, %v1877
      %v1893 = vor.u32 %v1891, %v1892
      %vm1894 = vcmp.lt.s32.totalorder %v1875, 1
      %vm1895 = vcmp.lt.s32.totalorder %v1875, 2
      %vm1896 = vcmp.lt.s32.totalorder %v1875, 3
      %vm1897 = vcmp.lt.s32.totalorder %v1875, 4
      %v1898 = vsel %vm1894, %v1878, %v1881
      %v1899 = vsel %vm1897, %v1887, 2102212464
      %v1900 = vsel %vm1896, %v1884, %v1899
      %v1901 = vsel %vm1895, %v1898, %v1900
      %v1902 = vsel %vm1894, %v1881, %v1884
      %v1903 = vsel %vm1897, %v1890, 920167782
      %v1904 = vsel %vm1896, %v1887, %v1903
      %v1905 = vsel %vm1895, %v1902, %v1904
      %v1906 = vsel %vm1894, %v1884, %v1887
      %v1907 = vsel %vm1897, %v1893, 1326507024
      %v1908 = vsel %vm1896, %v1890, %v1907
      %v1909 = vsel %vm1895, %v1906, %v1908
      %v1910 = vshll.u32 %v1870, 8
      %v1911 = vand.u32 %v1910, 65535
      %v1912 = vshrl.u32 %v1910, 16
      %v1913 = vand.u32 %v1909, 65535
      %v1914 = vshrl.u32 %v1909, 16
      %v1915 = vmul.u32 %v1911, %v1913
      %v1916 = vmul.u32 %v1911, %v1914
      %v1917 = vmul.u32 %v1912, %v1913
      %v1918 = vmul.u32 %v1912, %v1914
      %v1919 = vshll.u32 %v1916, 16
      %v1920 = vshrl.u32 %v1916, 16
      %v1921 = vshll.u32 %v1917, 16
      %v1922 = vshrl.u32 %v1917, 16
      %vm1923 = vc.u32 %v1915, %v1919
      %v1924 = vsel %vm1923, 1, 0
      %v1925 = vadd.s32 %v1915, %v1919
      %v1926 = vadd.s32 %v1918, %v1924
      %vm1927 = vc.u32 %v1925, %v1921
      %v1928 = vsel %vm1927, 1, 0
      %v1929 = vadd.s32 %v1925, %v1921
      %v1930 = vadd.s32 %v1926, %v1928
      %v1931 = vadd.s32 %v1930, %v1920
      %v1932 = vadd.s32 %v1931, %v1922
      %v1933 = vand.u32 %v1910, 65535
      %v1934 = vshrl.u32 %v1910, 16
      %v1935 = vand.u32 %v1905, 65535
      %v1936 = vshrl.u32 %v1905, 16
      %v1937 = vmul.u32 %v1933, %v1935
      %v1938 = vmul.u32 %v1933, %v1936
      %v1939 = vmul.u32 %v1934, %v1935
      %v1940 = vmul.u32 %v1934, %v1936
      %v1941 = vshll.u32 %v1938, 16
      %v1942 = vshrl.u32 %v1938, 16
      %v1943 = vshll.u32 %v1939, 16
      %v1944 = vshrl.u32 %v1939, 16
      %vm1945 = vc.u32 %v1937, %v1941
      %v1946 = vsel %vm1945, 1, 0
      %v1947 = vadd.s32 %v1937, %v1941
      %v1948 = vadd.s32 %v1940, %v1946
      %vm1949 = vc.u32 %v1947, %v1943
      %v1950 = vsel %vm1949, 1, 0
      %v1951 = vadd.s32 %v1947, %v1943
      %v1952 = vadd.s32 %v1948, %v1950
      %v1953 = vadd.s32 %v1952, %v1942
      %v1954 = vadd.s32 %v1953, %v1944
      %v1955 = vmul.u32 %v1910, %v1901
      %v1956 = vadd.s32 %v1932, %v1951
      %vm1957 = vc.u32 %v1932, %v1951
      %v1958 = vadd.s32 %v1954, 1
      %v1959 = vsel %vm1957, %v1958, %v1954
      %v1960 = vadd.s32 %v1955, %v1959
      %v1961 = vadd.s32 %v1960, 536870912
      %v1962 = vshrl.u32 %v1961, 30
      %v1963 = vshll.u32 %v1962, 30
      %v1964 = vsub.s32 %v1960, %v1963
      %vm1965 = vcmp.lt.s32.totalorder %v1964, 0
      %v1966 = vsub.s32 0, %v1964
      %v1967 = vsel %vm1965, %v1966, %v1964
      %v1968 = vclz %v1967
      %v1969 = vsub.s32 %v1968, 2
      %vm1970 = vcmp.gt.s32.totalorder 0, %v1969
      %v1971 = vsel %vm1970, 0, %v1969
      %v1972 = vsub.s32 32, %v1971
      %v1973 = vshll.u32 %v1964, %v1971
      %v1974 = vshrl.u32 %v1956, %v1972
      %v1975 = vor.u32 %v1973, %v1974
      %v1976 = vsub.s32 4294967266, %v1971
      %v1977 = vadd.s32 %v1976, 127
      %v1978 = vshll.u32 %v1977, 23
      %v1979 = vor.u32 4788187, %v1978
      %v1980 = vand.u32 2147483647, %v1979
      %v1982 = vcvt.s32.f32 %v1975
      %v1983 = vmul.f32 %v1982, %v1980
      %v1984 = vxor.u32 %v1983, 2147483648
      %v1985 = vsel %vm1864, %v1984, %v1983
      %v1986 = vsub.s32 4, %v1962
      %v1987 = vsel %vm1864, %v1986, %v1962
      %v1988 = vsel %vm1863, %v295, %v1985
      %v1989 = vsel %vm1863, 0, %v1987
      %v1990 = vmul.f32 %v1988, %v1988
      %v1991 = vmul.f32 %v1990, -0.001358992
      %v1992 = vadd.f32 %v1991, 0.041655596
      %v1993 = vmul.f32 %v1990, %v1992
      %v1994 = vadd.f32 %v1993, -0.4999988
      %v1995 = vmul.f32 %v1990, %v1994
      %v1996 = vadd.f32 1.0, %v1995
      %v1997 = vmul.f32 %v1988, %v1988
      %v1998 = vmul.f32 %v1997, -0.00019511016
      %v1999 = vadd.f32 %v1998, 0.008332121
      %v2000 = vmul.f32 %v1997, %v1999
      %v2001 = vadd.f32 %v2000, -0.16666654
      %v2002 = vmul.f32 %v1997, %v2001
      %v2003 = vadd.f32 %v2002, 1.0
      %v2004 = vmul.f32 %v2003, %v1988
      %vm2005 = vweird.f32 %v295
      %v2006 = vadd.s32 %v1989, 3
      %v2007 = vand.u32 %v2006, 3
      %vm2008 = vcmp.lt.s32.totalorder %v2007, 2
      %vm2009 = vcmp.eq.s32.totalorder %v2007, 0
      %v2010 = vxor.u32 %v2004, 2147483648
      %v2011 = vsel %vm2009, %v1996, %v2010
      %vm2012 = vcmp.eq.s32.totalorder %v2007, 2
      %v2013 = vxor.u32 %v1996, 2147483648
      %v2014 = vsel %vm2012, %v2013, %v2004
      %v2015 = vsel %vm2008, %v2011, %v2014
      %v2016 = vsel %vm2005, nan, %v2015
      %v2017 = vand.u32 2147483647, %v298
      %vm2018 = vcmp.le.f32.partialorder %v2017, 0.7853982
      %vm2019 = vcmp.lt.s32.totalorder %v298, 0
      %v2020 = vand.u32 %v298, 2139095040
      %v2021 = vshrl.u32 %v2020, 23
      %v2022 = vsub.s32 %v2021, 127
      %v2023 = vand.u32 2147483647, %v298
      %v2024 = vand.u32 %v2023, 8388607
      %v2025 = vor.u32 %v2024, 8388608
      %v2026 = vsub.s32 0, %v2025
      %v2027 = vadd.s32 %v2022, 1
      %vm2028 = vcmp.gt.s32.totalorder %v2027, 0
      %v2029 = vsel %vm2028, %v2027, 0
      %v2030 = vshrl.u32 %v2029, 5
      %v2031 = vand.u32 %v2029, 31
      %v2032 = vsub.s32 32, %v2031
      %v2033 = vshrl.u32 683565275, %v2032
      %v2034 = vshll.u32 683565275, %v2031
      %v2035 = vshrl.u32 2475754826, %v2032
      %v2036 = vor.u32 %v2034, %v2035
      %v2037 = vshll.u32 2475754826, %v2031
      %v2038 = vshrl.u32 2131351028, %v2032
      %v2039 = vor.u32 %v2037, %v2038
      %v2040 = vshll.u32 2131351028, %v2031
      %v2041 = vshrl.u32 2102212464, %v2032
      %v2042 = vor.u32 %v2040, %v2041
      %v2043 = vshll.u32 2102212464, %v2031
      %v2044 = vshrl.u32 920167782, %v2032
      %v2045 = vor.u32 %v2043, %v2044
      %v2046 = vshll.u32 920167782, %v2031
      %v2047 = vshrl.u32 1326507024, %v2032
      %v2048 = vor.u32 %v2046, %v2047
      %vm2049 = vcmp.lt.s32.totalorder %v2030, 1
      %vm2050 = vcmp.lt.s32.totalorder %v2030, 2
      %vm2051 = vcmp.lt.s32.totalorder %v2030, 3
      %vm2052 = vcmp.lt.s32.totalorder %v2030, 4
      %v2053 = vsel %vm2049, %v2033, %v2036
      %v2054 = vsel %vm2052, %v2042, 2102212464
      %v2055 = vsel %vm2051, %v2039, %v2054
      %v2056 = vsel %vm2050, %v2053, %v2055
      %v2057 = vsel %vm2049, %v2036, %v2039
      %v2058 = vsel %vm2052, %v2045, 920167782
      %v2059 = vsel %vm2051, %v2042, %v2058
      %v2060 = vsel %vm2050, %v2057, %v2059
      %v2061 = vsel %vm2049, %v2039, %v2042
      %v2062 = vsel %vm2052, %v2048, 1326507024
      %v2063 = vsel %vm2051, %v2045, %v2062
      %v2064 = vsel %vm2050, %v2061, %v2063
      %v2065 = vshll.u32 %v2025, 8
      %v2066 = vand.u32 %v2065, 65535
      %v2067 = vshrl.u32 %v2065, 16
      %v2068 = vand.u32 %v2064, 65535
      %v2069 = vshrl.u32 %v2064, 16
      %v2070 = vmul.u32 %v2066, %v2068
      %v2071 = vmul.u32 %v2066, %v2069
      %v2072 = vmul.u32 %v2067, %v2068
      %v2073 = vmul.u32 %v2067, %v2069
      %v2074 = vshll.u32 %v2071, 16
      %v2075 = vshrl.u32 %v2071, 16
      %v2076 = vshll.u32 %v2072, 16
      %v2077 = vshrl.u32 %v2072, 16
      %vm2078 = vc.u32 %v2070, %v2074
      %v2079 = vsel %vm2078, 1, 0
      %v2080 = vadd.s32 %v2070, %v2074
      %v2081 = vadd.s32 %v2073, %v2079
      %vm2082 = vc.u32 %v2080, %v2076
      %v2083 = vsel %vm2082, 1, 0
      %v2084 = vadd.s32 %v2080, %v2076
      %v2085 = vadd.s32 %v2081, %v2083
      %v2086 = vadd.s32 %v2085, %v2075
      %v2087 = vadd.s32 %v2086, %v2077
      %v2088 = vand.u32 %v2065, 65535
      %v2089 = vshrl.u32 %v2065, 16
      %v2090 = vand.u32 %v2060, 65535
      %v2091 = vshrl.u32 %v2060, 16
      %v2092 = vmul.u32 %v2088, %v2090
      %v2093 = vmul.u32 %v2088, %v2091
      %v2094 = vmul.u32 %v2089, %v2090
      %v2095 = vmul.u32 %v2089, %v2091
      %v2096 = vshll.u32 %v2093, 16
      %v2097 = vshrl.u32 %v2093, 16
      %v2098 = vshll.u32 %v2094, 16
      %v2099 = vshrl.u32 %v2094, 16
      %vm2100 = vc.u32 %v2092, %v2096
      %v2101 = vsel %vm2100, 1, 0
      %v2102 = vadd.s32 %v2092, %v2096
      %v2103 = vadd.s32 %v2095, %v2101
      %vm2104 = vc.u32 %v2102, %v2098
      %v2105 = vsel %vm2104, 1, 0
      %v2106 = vadd.s32 %v2102, %v2098
      %v2107 = vadd.s32 %v2103, %v2105
      %v2108 = vadd.s32 %v2107, %v2097
      %v2109 = vadd.s32 %v2108, %v2099
      %v2110 = vmul.u32 %v2065, %v2056
      %v2111 = vadd.s32 %v2087, %v2106
      %vm2112 = vc.u32 %v2087, %v2106
      %v2113 = vadd.s32 %v2109, 1
      %v2114 = vsel %vm2112, %v2113, %v2109
      %v2115 = vadd.s32 %v2110, %v2114
      %v2116 = vadd.s32 %v2115, 536870912
      %v2117 = vshrl.u32 %v2116, 30
      %v2118 = vshll.u32 %v2117, 30
      %v2119 = vsub.s32 %v2115, %v2118
      %vm2120 = vcmp.lt.s32.totalorder %v2119, 0
      %v2121 = vsub.s32 0, %v2119
      %v2122 = vsel %vm2120, %v2121, %v2119
      %v2123 = vclz %v2122
      %v2124 = vsub.s32 %v2123, 2
      %vm2125 = vcmp.gt.s32.totalorder 0, %v2124
      %v2126 = vsel %vm2125, 0, %v2124
      %v2127 = vsub.s32 32, %v2126
      %v2128 = vshll.u32 %v2119, %v2126
      %v2129 = vshrl.u32 %v2111, %v2127
      %v2130 = vor.u32 %v2128, %v2129
      %v2131 = vsub.s32 4294967266, %v2126
      %v2132 = vadd.s32 %v2131, 127
      %v2133 = vshll.u32 %v2132, 23
      %v2134 = vor.u32 4788187, %v2133
      %v2135 = vand.u32 2147483647, %v2134
      %v2137 = vcvt.s32.f32 %v2130
      %v2138 = vmul.f32 %v2137, %v2135
      %v2139 = vxor.u32 %v2138, 2147483648
      %v2140 = vsel %vm2019, %v2139, %v2138
      %v2141 = vsub.s32 4, %v2117
      %v2142 = vsel %vm2019, %v2141, %v2117
      %v2143 = vsel %vm2018, %v298, %v2140
      %v2144 = vsel %vm2018, 0, %v2142
      %v2145 = vmul.f32 %v2143, %v2143
      %v2146 = vmul.f32 %v2145, -0.001358992
      %v2147 = vadd.f32 %v2146, 0.041655596
      %v2148 = vmul.f32 %v2145, %v2147
      %v2149 = vadd.f32 %v2148, -0.4999988
      %v2150 = vmul.f32 %v2145, %v2149
      %v2151 = vadd.f32 1.0, %v2150
      %v2152 = vmul.f32 %v2143, %v2143
      %v2153 = vmul.f32 %v2152, -0.00019511016
      %v2154 = vadd.f32 %v2153, 0.008332121
      %v2155 = vmul.f32 %v2152, %v2154
      %v2156 = vadd.f32 %v2155, -0.16666654
      %v2157 = vmul.f32 %v2152, %v2156
      %v2158 = vadd.f32 %v2157, 1.0
      %v2159 = vmul.f32 %v2158, %v2143
      %vm2160 = vweird.f32 %v298
      %v2161 = vadd.s32 %v2144, 3
      %v2162 = vand.u32 %v2161, 3
      %vm2163 = vcmp.lt.s32.totalorder %v2162, 2
      %vm2164 = vcmp.eq.s32.totalorder %v2162, 0
      %v2165 = vxor.u32 %v2159, 2147483648
      %v2166 = vsel %vm2164, %v2151, %v2165
      %vm2167 = vcmp.eq.s32.totalorder %v2162, 2
      %v2168 = vxor.u32 %v2151, 2147483648
      %v2169 = vsel %vm2167, %v2168, %v2159
      %v2170 = vsel %vm2163, %v2166, %v2169
      %v2171 = vsel %vm2160, nan, %v2170
      %v2172 = vand.u32 2147483647, %v301
      %vm2173 = vcmp.le.f32.partialorder %v2172, 0.7853982
      %vm2174 = vcmp.lt.s32.totalorder %v301, 0
      %v2175 = vand.u32 %v301, 2139095040
      %v2176 = vshrl.u32 %v2175, 23
      %v2177 = vsub.s32 %v2176, 127
      %v2178 = vand.u32 2147483647, %v301
      %v2179 = vand.u32 %v2178, 8388607
      %v2180 = vor.u32 %v2179, 8388608
      %v2181 = vsub.s32 0, %v2180
      %v2182 = vadd.s32 %v2177, 1
      %vm2183 = vcmp.gt.s32.totalorder %v2182, 0
      %v2184 = vsel %vm2183, %v2182, 0
      %v2185 = vshrl.u32 %v2184, 5
      %v2186 = vand.u32 %v2184, 31
      %v2187 = vsub.s32 32, %v2186
      %v2188 = vshrl.u32 683565275, %v2187
      %v2189 = vshll.u32 683565275, %v2186
      %v2190 = vshrl.u32 2475754826, %v2187
      %v2191 = vor.u32 %v2189, %v2190
      %v2192 = vshll.u32 2475754826, %v2186
      %v2193 = vshrl.u32 2131351028, %v2187
      %v2194 = vor.u32 %v2192, %v2193
      %v2195 = vshll.u32 2131351028, %v2186
      %v2196 = vshrl.u32 2102212464, %v2187
      %v2197 = vor.u32 %v2195, %v2196
      %v2198 = vshll.u32 2102212464, %v2186
      %v2199 = vshrl.u32 920167782, %v2187
      %v2200 = vor.u32 %v2198, %v2199
      %v2201 = vshll.u32 920167782, %v2186
      %v2202 = vshrl.u32 1326507024, %v2187
      %v2203 = vor.u32 %v2201, %v2202
      %vm2204 = vcmp.lt.s32.totalorder %v2185, 1
      %vm2205 = vcmp.lt.s32.totalorder %v2185, 2
      %vm2206 = vcmp.lt.s32.totalorder %v2185, 3
      %vm2207 = vcmp.lt.s32.totalorder %v2185, 4
      %v2208 = vsel %vm2204, %v2188, %v2191
      %v2209 = vsel %vm2207, %v2197, 2102212464
      %v2210 = vsel %vm2206, %v2194, %v2209
      %v2211 = vsel %vm2205, %v2208, %v2210
      %v2212 = vsel %vm2204, %v2191, %v2194
      %v2213 = vsel %vm2207, %v2200, 920167782
      %v2214 = vsel %vm2206, %v2197, %v2213
      %v2215 = vsel %vm2205, %v2212, %v2214
      %v2216 = vsel %vm2204, %v2194, %v2197
      %v2217 = vsel %vm2207, %v2203, 1326507024
      %v2218 = vsel %vm2206, %v2200, %v2217
      %v2219 = vsel %vm2205, %v2216, %v2218
      %v2220 = vshll.u32 %v2180, 8
      %v2221 = vand.u32 %v2220, 65535
      %v2222 = vshrl.u32 %v2220, 16
      %v2223 = vand.u32 %v2219, 65535
      %v2224 = vshrl.u32 %v2219, 16
      %v2225 = vmul.u32 %v2221, %v2223
      %v2226 = vmul.u32 %v2221, %v2224
      %v2227 = vmul.u32 %v2222, %v2223
      %v2228 = vmul.u32 %v2222, %v2224
      %v2229 = vshll.u32 %v2226, 16
      %v2230 = vshrl.u32 %v2226, 16
      %v2231 = vshll.u32 %v2227, 16
      %v2232 = vshrl.u32 %v2227, 16
      %vm2233 = vc.u32 %v2225, %v2229
      %v2234 = vsel %vm2233, 1, 0
      %v2235 = vadd.s32 %v2225, %v2229
      %v2236 = vadd.s32 %v2228, %v2234
      %vm2237 = vc.u32 %v2235, %v2231
      %v2238 = vsel %vm2237, 1, 0
      %v2239 = vadd.s32 %v2235, %v2231
      %v2240 = vadd.s32 %v2236, %v2238
      %v2241 = vadd.s32 %v2240, %v2230
      %v2242 = vadd.s32 %v2241, %v2232
      %v2243 = vand.u32 %v2220, 65535
      %v2244 = vshrl.u32 %v2220, 16
      %v2245 = vand.u32 %v2215, 65535
      %v2246 = vshrl.u32 %v2215, 16
      %v2247 = vmul.u32 %v2243, %v2245
      %v2248 = vmul.u32 %v2243, %v2246
      %v2249 = vmul.u32 %v2244, %v2245
      %v2250 = vmul.u32 %v2244, %v2246
      %v2251 = vshll.u32 %v2248, 16
      %v2252 = vshrl.u32 %v2248, 16
      %v2253 = vshll.u32 %v2249, 16
      %v2254 = vshrl.u32 %v2249, 16
      %vm2255 = vc.u32 %v2247, %v2251
      %v2256 = vsel %vm2255, 1, 0
      %v2257 = vadd.s32 %v2247, %v2251
      %v2258 = vadd.s32 %v2250, %v2256
      %vm2259 = vc.u32 %v2257, %v2253
      %v2260 = vsel %vm2259, 1, 0
      %v2261 = vadd.s32 %v2257, %v2253
      %v2262 = vadd.s32 %v2258, %v2260
      %v2263 = vadd.s32 %v2262, %v2252
      %v2264 = vadd.s32 %v2263, %v2254
      %v2265 = vmul.u32 %v2220, %v2211
      %v2266 = vadd.s32 %v2242, %v2261
      %vm2267 = vc.u32 %v2242, %v2261
      %v2268 = vadd.s32 %v2264, 1
      %v2269 = vsel %vm2267, %v2268, %v2264
      %v2270 = vadd.s32 %v2265, %v2269
      %v2271 = vadd.s32 %v2270, 536870912
      %v2272 = vshrl.u32 %v2271, 30
      %v2273 = vshll.u32 %v2272, 30
      %v2274 = vsub.s32 %v2270, %v2273
      %vm2275 = vcmp.lt.s32.totalorder %v2274, 0
      %v2276 = vsub.s32 0, %v2274
      %v2277 = vsel %vm2275, %v2276, %v2274
      %v2278 = vclz %v2277
      %v2279 = vsub.s32 %v2278, 2
      %vm2280 = vcmp.gt.s32.totalorder 0, %v2279
      %v2281 = vsel %vm2280, 0, %v2279
      %v2282 = vsub.s32 32, %v2281
      %v2283 = vshll.u32 %v2274, %v2281
      %v2284 = vshrl.u32 %v2266, %v2282
      %v2285 = vor.u32 %v2283, %v2284
      %v2286 = vsub.s32 4294967266, %v2281
      %v2287 = vadd.s32 %v2286, 127
      %v2288 = vshll.u32 %v2287, 23
      %v2289 = vor.u32 4788187, %v2288
      %v2290 = vand.u32 2147483647, %v2289
      %v2292 = vcvt.s32.f32 %v2285
      %v2293 = vmul.f32 %v2292, %v2290
      %v2294 = vxor.u32 %v2293, 2147483648
      %v2295 = vsel %vm2174, %v2294, %v2293
      %v2296 = vsub.s32 4, %v2272
      %v2297 = vsel %vm2174, %v2296, %v2272
      %v2298 = vsel %vm2173, %v301, %v2295
      %v2299 = vsel %vm2173, 0, %v2297
      %v2300 = vmul.f32 %v2298, %v2298
      %v2301 = vmul.f32 %v2300, -0.001358992
      %v2302 = vadd.f32 %v2301, 0.041655596
      %v2303 = vmul.f32 %v2300, %v2302
      %v2304 = vadd.f32 %v2303, -0.4999988
      %v2305 = vmul.f32 %v2300, %v2304
      %v2306 = vadd.f32 1.0, %v2305
      %v2307 = vmul.f32 %v2298, %v2298
      %v2308 = vmul.f32 %v2307, -0.00019511016
      %v2309 = vadd.f32 %v2308, 0.008332121
      %v2310 = vmul.f32 %v2307, %v2309
      %v2311 = vadd.f32 %v2310, -0.16666654
      %v2312 = vmul.f32 %v2307, %v2311
      %v2313 = vadd.f32 %v2312, 1.0
      %v2314 = vmul.f32 %v2313, %v2298
      %vm2315 = vweird.f32 %v301
      %v2316 = vadd.s32 %v2299, 3
      %v2317 = vand.u32 %v2316, 3
      %vm2318 = vcmp.lt.s32.totalorder %v2317, 2
      %vm2319 = vcmp.eq.s32.totalorder %v2317, 0
      %v2320 = vxor.u32 %v2314, 2147483648
      %v2321 = vsel %vm2319, %v2306, %v2320
      %vm2322 = vcmp.eq.s32.totalorder %v2317, 2
      %v2323 = vxor.u32 %v2306, 2147483648
      %v2324 = vsel %vm2322, %v2323, %v2314
      %v2325 = vsel %vm2318, %v2321, %v2324
      %v2326 = vsel %vm2315, nan, %v2325
      %v2327 = vand.u32 2147483647, %v304
      %vm2328 = vcmp.le.f32.partialorder %v2327, 0.7853982
      %vm2329 = vcmp.lt.s32.totalorder %v304, 0
      %v2330 = vand.u32 %v304, 2139095040
      %v2331 = vshrl.u32 %v2330, 23
      %v2332 = vsub.s32 %v2331, 127
      %v2333 = vand.u32 2147483647, %v304
      %v2334 = vand.u32 %v2333, 8388607
      %v2335 = vor.u32 %v2334, 8388608
      %v2336 = vsub.s32 0, %v2335
      %v2337 = vadd.s32 %v2332, 1
      %vm2338 = vcmp.gt.s32.totalorder %v2337, 0
      %v2339 = vsel %vm2338, %v2337, 0
      %v2340 = vshrl.u32 %v2339, 5
      %v2341 = vand.u32 %v2339, 31
      %v2342 = vsub.s32 32, %v2341
      %v2343 = vshrl.u32 683565275, %v2342
      %v2344 = vshll.u32 683565275, %v2341
      %v2345 = vshrl.u32 2475754826, %v2342
      %v2346 = vor.u32 %v2344, %v2345
      %v2347 = vshll.u32 2475754826, %v2341
      %v2348 = vshrl.u32 2131351028, %v2342
      %v2349 = vor.u32 %v2347, %v2348
      %v2350 = vshll.u32 2131351028, %v2341
      %v2351 = vshrl.u32 2102212464, %v2342
      %v2352 = vor.u32 %v2350, %v2351
      %v2353 = vshll.u32 2102212464, %v2341
      %v2354 = vshrl.u32 920167782, %v2342
      %v2355 = vor.u32 %v2353, %v2354
      %v2356 = vshll.u32 920167782, %v2341
      %v2357 = vshrl.u32 1326507024, %v2342
      %v2358 = vor.u32 %v2356, %v2357
      %vm2359 = vcmp.lt.s32.totalorder %v2340, 1
      %vm2360 = vcmp.lt.s32.totalorder %v2340, 2
      %vm2361 = vcmp.lt.s32.totalorder %v2340, 3
      %vm2362 = vcmp.lt.s32.totalorder %v2340, 4
      %v2363 = vsel %vm2359, %v2343, %v2346
      %v2364 = vsel %vm2362, %v2352, 2102212464
      %v2365 = vsel %vm2361, %v2349, %v2364
      %v2366 = vsel %vm2360, %v2363, %v2365
      %v2367 = vsel %vm2359, %v2346, %v2349
      %v2368 = vsel %vm2362, %v2355, 920167782
      %v2369 = vsel %vm2361, %v2352, %v2368
      %v2370 = vsel %vm2360, %v2367, %v2369
      %v2371 = vsel %vm2359, %v2349, %v2352
      %v2372 = vsel %vm2362, %v2358, 1326507024
      %v2373 = vsel %vm2361, %v2355, %v2372
      %v2374 = vsel %vm2360, %v2371, %v2373
      %v2375 = vshll.u32 %v2335, 8
      %v2376 = vand.u32 %v2375, 65535
      %v2377 = vshrl.u32 %v2375, 16
      %v2378 = vand.u32 %v2374, 65535
      %v2379 = vshrl.u32 %v2374, 16
      %v2380 = vmul.u32 %v2376, %v2378
      %v2381 = vmul.u32 %v2376, %v2379
      %v2382 = vmul.u32 %v2377, %v2378
      %v2383 = vmul.u32 %v2377, %v2379
      %v2384 = vshll.u32 %v2381, 16
      %v2385 = vshrl.u32 %v2381, 16
      %v2386 = vshll.u32 %v2382, 16
      %v2387 = vshrl.u32 %v2382, 16
      %vm2388 = vc.u32 %v2380, %v2384
      %v2389 = vsel %vm2388, 1, 0
      %v2390 = vadd.s32 %v2380, %v2384
      %v2391 = vadd.s32 %v2383, %v2389
      %vm2392 = vc.u32 %v2390, %v2386
      %v2393 = vsel %vm2392, 1, 0
      %v2394 = vadd.s32 %v2390, %v2386
      %v2395 = vadd.s32 %v2391, %v2393
      %v2396 = vadd.s32 %v2395, %v2385
      %v2397 = vadd.s32 %v2396, %v2387
      %v2398 = vand.u32 %v2375, 65535
      %v2399 = vshrl.u32 %v2375, 16
      %v2400 = vand.u32 %v2370, 65535
      %v2401 = vshrl.u32 %v2370, 16
      %v2402 = vmul.u32 %v2398, %v2400
      %v2403 = vmul.u32 %v2398, %v2401
      %v2404 = vmul.u32 %v2399, %v2400
      %v2405 = vmul.u32 %v2399, %v2401
      %v2406 = vshll.u32 %v2403, 16
      %v2407 = vshrl.u32 %v2403, 16
      %v2408 = vshll.u32 %v2404, 16
      %v2409 = vshrl.u32 %v2404, 16
      %vm2410 = vc.u32 %v2402, %v2406
      %v2411 = vsel %vm2410, 1, 0
      %v2412 = vadd.s32 %v2402, %v2406
      %v2413 = vadd.s32 %v2405, %v2411
      %vm2414 = vc.u32 %v2412, %v2408
      %v2415 = vsel %vm2414, 1, 0
      %v2416 = vadd.s32 %v2412, %v2408
      %v2417 = vadd.s32 %v2413, %v2415
      %v2418 = vadd.s32 %v2417, %v2407
      %v2419 = vadd.s32 %v2418, %v2409
      %v2420 = vmul.u32 %v2375, %v2366
      %v2421 = vadd.s32 %v2397, %v2416
      %vm2422 = vc.u32 %v2397, %v2416
      %v2423 = vadd.s32 %v2419, 1
      %v2424 = vsel %vm2422, %v2423, %v2419
      %v2425 = vadd.s32 %v2420, %v2424
      %v2426 = vadd.s32 %v2425, 536870912
      %v2427 = vshrl.u32 %v2426, 30
      %v2428 = vshll.u32 %v2427, 30
      %v2429 = vsub.s32 %v2425, %v2428
      %vm2430 = vcmp.lt.s32.totalorder %v2429, 0
      %v2431 = vsub.s32 0, %v2429
      %v2432 = vsel %vm2430, %v2431, %v2429
      %v2433 = vclz %v2432
      %v2434 = vsub.s32 %v2433, 2
      %vm2435 = vcmp.gt.s32.totalorder 0, %v2434
      %v2436 = vsel %vm2435, 0, %v2434
      %v2437 = vsub.s32 32, %v2436
      %v2438 = vshll.u32 %v2429, %v2436
      %v2439 = vshrl.u32 %v2421, %v2437
      %v2440 = vor.u32 %v2438, %v2439
      %v2441 = vsub.s32 4294967266, %v2436
      %v2442 = vadd.s32 %v2441, 127
      %v2443 = vshll.u32 %v2442, 23
      %v2444 = vor.u32 4788187, %v2443
      %v2445 = vand.u32 2147483647, %v2444
      %v2447 = vcvt.s32.f32 %v2440
      %v2448 = vmul.f32 %v2447, %v2445
      %v2449 = vxor.u32 %v2448, 2147483648
      %v2450 = vsel %vm2329, %v2449, %v2448
      %v2451 = vsub.s32 4, %v2427
      %v2452 = vsel %vm2329, %v2451, %v2427
      %v2453 = vsel %vm2328, %v304, %v2450
      %v2454 = vsel %vm2328, 0, %v2452
      %v2455 = vmul.f32 %v2453, %v2453
      %v2456 = vmul.f32 %v2455, -0.001358992
      %v2457 = vadd.f32 %v2456, 0.041655596
      %v2458 = vmul.f32 %v2455, %v2457
      %v2459 = vadd.f32 %v2458, -0.4999988
      %v2460 = vmul.f32 %v2455, %v2459
      %v2461 = vadd.f32 1.0, %v2460
      %v2462 = vmul.f32 %v2453, %v2453
      %v2463 = vmul.f32 %v2462, -0.00019511016
      %v2464 = vadd.f32 %v2463, 0.008332121
      %v2465 = vmul.f32 %v2462, %v2464
      %v2466 = vadd.f32 %v2465, -0.16666654
      %v2467 = vmul.f32 %v2462, %v2466
      %v2468 = vadd.f32 %v2467, 1.0
      %v2469 = vmul.f32 %v2468, %v2453
      %vm2470 = vweird.f32 %v304
      %v2471 = vadd.s32 %v2454, 3
      %v2472 = vand.u32 %v2471, 3
      %vm2473 = vcmp.lt.s32.totalorder %v2472, 2
      %vm2474 = vcmp.eq.s32.totalorder %v2472, 0
      %v2475 = vxor.u32 %v2469, 2147483648
      %v2476 = vsel %vm2474, %v2461, %v2475
      %vm2477 = vcmp.eq.s32.totalorder %v2472, 2
      %v2478 = vxor.u32 %v2461, 2147483648
      %v2479 = vsel %vm2477, %v2478, %v2469
      %v2480 = vsel %vm2473, %v2476, %v2479
      %v2481 = vsel %vm2470, nan, %v2480
      %v2482 = vand.u32 2147483647, %v307
      %vm2483 = vcmp.le.f32.partialorder %v2482, 0.7853982
      %vm2484 = vcmp.lt.s32.totalorder %v307, 0
      %v2485 = vand.u32 %v307, 2139095040
      %v2486 = vshrl.u32 %v2485, 23
      %v2487 = vsub.s32 %v2486, 127
      %v2488 = vand.u32 2147483647, %v307
      %v2489 = vand.u32 %v2488, 8388607
      %v2490 = vor.u32 %v2489, 8388608
      %v2491 = vsub.s32 0, %v2490
      %v2492 = vadd.s32 %v2487, 1
      %vm2493 = vcmp.gt.s32.totalorder %v2492, 0
      %v2494 = vsel %vm2493, %v2492, 0
      %v2495 = vshrl.u32 %v2494, 5
      %v2496 = vand.u32 %v2494, 31
      %v2497 = vsub.s32 32, %v2496
      %v2498 = vshrl.u32 683565275, %v2497
      %v2499 = vshll.u32 683565275, %v2496
      %v2500 = vshrl.u32 2475754826, %v2497
      %v2501 = vor.u32 %v2499, %v2500
      %v2502 = vshll.u32 2475754826, %v2496
      %v2503 = vshrl.u32 2131351028, %v2497
      %v2504 = vor.u32 %v2502, %v2503
      %v2505 = vshll.u32 2131351028, %v2496
      %v2506 = vshrl.u32 2102212464, %v2497
      %v2507 = vor.u32 %v2505, %v2506
      %v2508 = vshll.u32 2102212464, %v2496
      %v2509 = vshrl.u32 920167782, %v2497
      %v2510 = vor.u32 %v2508, %v2509
      %v2511 = vshll.u32 920167782, %v2496
      %v2512 = vshrl.u32 1326507024, %v2497
      %v2513 = vor.u32 %v2511, %v2512
      %vm2514 = vcmp.lt.s32.totalorder %v2495, 1
      %vm2515 = vcmp.lt.s32.totalorder %v2495, 2
      %vm2516 = vcmp.lt.s32.totalorder %v2495, 3
      %vm2517 = vcmp.lt.s32.totalorder %v2495, 4
      %v2518 = vsel %vm2514, %v2498, %v2501
      %v2519 = vsel %vm2517, %v2507, 2102212464
      %v2520 = vsel %vm2516, %v2504, %v2519
      %v2521 = vsel %vm2515, %v2518, %v2520
      %v2522 = vsel %vm2514, %v2501, %v2504
      %v2523 = vsel %vm2517, %v2510, 920167782
      %v2524 = vsel %vm2516, %v2507, %v2523
      %v2525 = vsel %vm2515, %v2522, %v2524
      %v2526 = vsel %vm2514, %v2504, %v2507
      %v2527 = vsel %vm2517, %v2513, 1326507024
      %v2528 = vsel %vm2516, %v2510, %v2527
      %v2529 = vsel %vm2515, %v2526, %v2528
      %v2530 = vshll.u32 %v2490, 8
      %v2531 = vand.u32 %v2530, 65535
      %v2532 = vshrl.u32 %v2530, 16
      %v2533 = vand.u32 %v2529, 65535
      %v2534 = vshrl.u32 %v2529, 16
      %v2535 = vmul.u32 %v2531, %v2533
      %v2536 = vmul.u32 %v2531, %v2534
      %v2537 = vmul.u32 %v2532, %v2533
      %v2538 = vmul.u32 %v2532, %v2534
      %v2539 = vshll.u32 %v2536, 16
      %v2540 = vshrl.u32 %v2536, 16
      %v2541 = vshll.u32 %v2537, 16
      %v2542 = vshrl.u32 %v2537, 16
      %vm2543 = vc.u32 %v2535, %v2539
      %v2544 = vsel %vm2543, 1, 0
      %v2545 = vadd.s32 %v2535, %v2539
      %v2546 = vadd.s32 %v2538, %v2544
      %vm2547 = vc.u32 %v2545, %v2541
      %v2548 = vsel %vm2547, 1, 0
      %v2549 = vadd.s32 %v2545, %v2541
      %v2550 = vadd.s32 %v2546, %v2548
      %v2551 = vadd.s32 %v2550, %v2540
      %v2552 = vadd.s32 %v2551, %v2542
      %v2553 = vand.u32 %v2530, 65535
      %v2554 = vshrl.u32 %v2530, 16
      %v2555 = vand.u32 %v2525, 65535
      %v2556 = vshrl.u32 %v2525, 16
      %v2557 = vmul.u32 %v2553, %v2555
      %v2558 = vmul.u32 %v2553, %v2556
      %v2559 = vmul.u32 %v2554, %v2555
      %v2560 = vmul.u32 %v2554, %v2556
      %v2561 = vshll.u32 %v2558, 16
      %v2562 = vshrl.u32 %v2558, 16
      %v2563 = vshll.u32 %v2559, 16
      %v2564 = vshrl.u32 %v2559, 16
      %vm2565 = vc.u32 %v2557, %v2561
      %v2566 = vsel %vm2565, 1, 0
      %v2567 = vadd.s32 %v2557, %v2561
      %v2568 = vadd.s32 %v2560, %v2566
      %vm2569 = vc.u32 %v2567, %v2563
      %v2570 = vsel %vm2569, 1, 0
      %v2571 = vadd.s32 %v2567, %v2563
      %v2572 = vadd.s32 %v2568, %v2570
      %v2573 = vadd.s32 %v2572, %v2562
      %v2574 = vadd.s32 %v2573, %v2564
      %v2575 = vmul.u32 %v2530, %v2521
      %v2576 = vadd.s32 %v2552, %v2571
      %vm2577 = vc.u32 %v2552, %v2571
      %v2578 = vadd.s32 %v2574, 1
      %v2579 = vsel %vm2577, %v2578, %v2574
      %v2580 = vadd.s32 %v2575, %v2579
      %v2581 = vadd.s32 %v2580, 536870912
      %v2582 = vshrl.u32 %v2581, 30
      %v2583 = vshll.u32 %v2582, 30
      %v2584 = vsub.s32 %v2580, %v2583
      %vm2585 = vcmp.lt.s32.totalorder %v2584, 0
      %v2586 = vsub.s32 0, %v2584
      %v2587 = vsel %vm2585, %v2586, %v2584
      %v2588 = vclz %v2587
      %v2589 = vsub.s32 %v2588, 2
      %vm2590 = vcmp.gt.s32.totalorder 0, %v2589
      %v2591 = vsel %vm2590, 0, %v2589
      %v2592 = vsub.s32 32, %v2591
      %v2593 = vshll.u32 %v2584, %v2591
      %v2594 = vshrl.u32 %v2576, %v2592
      %v2595 = vor.u32 %v2593, %v2594
      %v2596 = vsub.s32 4294967266, %v2591
      %v2597 = vadd.s32 %v2596, 127
      %v2598 = vshll.u32 %v2597, 23
      %v2599 = vor.u32 4788187, %v2598
      %v2600 = vand.u32 2147483647, %v2599
      %v2602 = vcvt.s32.f32 %v2595
      %v2603 = vmul.f32 %v2602, %v2600
      %v2604 = vxor.u32 %v2603, 2147483648
      %v2605 = vsel %vm2484, %v2604, %v2603
      %v2606 = vsub.s32 4, %v2582
      %v2607 = vsel %vm2484, %v2606, %v2582
      %v2608 = vsel %vm2483, %v307, %v2605
      %v2609 = vsel %vm2483, 0, %v2607
      %v2610 = vmul.f32 %v2608, %v2608
      %v2611 = vmul.f32 %v2610, -0.001358992
      %v2612 = vadd.f32 %v2611, 0.041655596
      %v2613 = vmul.f32 %v2610, %v2612
      %v2614 = vadd.f32 %v2613, -0.4999988
      %v2615 = vmul.f32 %v2610, %v2614
      %v2616 = vadd.f32 1.0, %v2615
      %v2617 = vmul.f32 %v2608, %v2608
      %v2618 = vmul.f32 %v2617, -0.00019511016
      %v2619 = vadd.f32 %v2618, 0.008332121
      %v2620 = vmul.f32 %v2617, %v2619
      %v2621 = vadd.f32 %v2620, -0.16666654
      %v2622 = vmul.f32 %v2617, %v2621
      %v2623 = vadd.f32 %v2622, 1.0
      %v2624 = vmul.f32 %v2623, %v2608
      %vm2625 = vweird.f32 %v307
      %v2626 = vadd.s32 %v2609, 3
      %v2627 = vand.u32 %v2626, 3
      %vm2628 = vcmp.lt.s32.totalorder %v2627, 2
      %vm2629 = vcmp.eq.s32.totalorder %v2627, 0
      %v2630 = vxor.u32 %v2624, 2147483648
      %v2631 = vsel %vm2629, %v2616, %v2630
      %vm2632 = vcmp.eq.s32.totalorder %v2627, 2
      %v2633 = vxor.u32 %v2616, 2147483648
      %v2634 = vsel %vm2632, %v2633, %v2624
      %v2635 = vsel %vm2628, %v2631, %v2634
      %v2636 = vsel %vm2625, nan, %v2635
      %v2637 = vand.u32 2147483647, %v310
      %vm2638 = vcmp.le.f32.partialorder %v2637, 0.7853982
      %vm2639 = vcmp.lt.s32.totalorder %v310, 0
      %v2640 = vand.u32 %v310, 2139095040
      %v2641 = vshrl.u32 %v2640, 23
      %v2642 = vsub.s32 %v2641, 127
      %v2643 = vand.u32 2147483647, %v310
      %v2644 = vand.u32 %v2643, 8388607
      %v2645 = vor.u32 %v2644, 8388608
      %v2646 = vsub.s32 0, %v2645
      %v2647 = vadd.s32 %v2642, 1
      %vm2648 = vcmp.gt.s32.totalorder %v2647, 0
      %v2649 = vsel %vm2648, %v2647, 0
      %v2650 = vshrl.u32 %v2649, 5
      %v2651 = vand.u32 %v2649, 31
      %v2652 = vsub.s32 32, %v2651
      %v2653 = vshrl.u32 683565275, %v2652
      %v2654 = vshll.u32 683565275, %v2651
      %v2655 = vshrl.u32 2475754826, %v2652
      %v2656 = vor.u32 %v2654, %v2655
      %v2657 = vshll.u32 2475754826, %v2651
      %v2658 = vshrl.u32 2131351028, %v2652
      %v2659 = vor.u32 %v2657, %v2658
      %v2660 = vshll.u32 2131351028, %v2651
      %v2661 = vshrl.u32 2102212464, %v2652
      %v2662 = vor.u32 %v2660, %v2661
      %v2663 = vshll.u32 2102212464, %v2651
      %v2664 = vshrl.u32 920167782, %v2652
      %v2665 = vor.u32 %v2663, %v2664
      %v2666 = vshll.u32 920167782, %v2651
      %v2667 = vshrl.u32 1326507024, %v2652
      %v2668 = vor.u32 %v2666, %v2667
      %vm2669 = vcmp.lt.s32.totalorder %v2650, 1
      %vm2670 = vcmp.lt.s32.totalorder %v2650, 2
      %vm2671 = vcmp.lt.s32.totalorder %v2650, 3
      %vm2672 = vcmp.lt.s32.totalorder %v2650, 4
      %v2673 = vsel %vm2669, %v2653, %v2656
      %v2674 = vsel %vm2672, %v2662, 2102212464
      %v2675 = vsel %vm2671, %v2659, %v2674
      %v2676 = vsel %vm2670, %v2673, %v2675
      %v2677 = vsel %vm2669, %v2656, %v2659
      %v2678 = vsel %vm2672, %v2665, 920167782
      %v2679 = vsel %vm2671, %v2662, %v2678
      %v2680 = vsel %vm2670, %v2677, %v2679
      %v2681 = vsel %vm2669, %v2659, %v2662
      %v2682 = vsel %vm2672, %v2668, 1326507024
      %v2683 = vsel %vm2671, %v2665, %v2682
      %v2684 = vsel %vm2670, %v2681, %v2683
      %v2685 = vshll.u32 %v2645, 8
      %v2686 = vand.u32 %v2685, 65535
      %v2687 = vshrl.u32 %v2685, 16
      %v2688 = vand.u32 %v2684, 65535
      %v2689 = vshrl.u32 %v2684, 16
      %v2690 = vmul.u32 %v2686, %v2688
      %v2691 = vmul.u32 %v2686, %v2689
      %v2692 = vmul.u32 %v2687, %v2688
      %v2693 = vmul.u32 %v2687, %v2689
      %v2694 = vshll.u32 %v2691, 16
      %v2695 = vshrl.u32 %v2691, 16
      %v2696 = vshll.u32 %v2692, 16
      %v2697 = vshrl.u32 %v2692, 16
      %vm2698 = vc.u32 %v2690, %v2694
      %v2699 = vsel %vm2698, 1, 0
      %v2700 = vadd.s32 %v2690, %v2694
      %v2701 = vadd.s32 %v2693, %v2699
      %vm2702 = vc.u32 %v2700, %v2696
      %v2703 = vsel %vm2702, 1, 0
      %v2704 = vadd.s32 %v2700, %v2696
      %v2705 = vadd.s32 %v2701, %v2703
      %v2706 = vadd.s32 %v2705, %v2695
      %v2707 = vadd.s32 %v2706, %v2697
      %v2708 = vand.u32 %v2685, 65535
      %v2709 = vshrl.u32 %v2685, 16
      %v2710 = vand.u32 %v2680, 65535
      %v2711 = vshrl.u32 %v2680, 16
      %v2712 = vmul.u32 %v2708, %v2710
      %v2713 = vmul.u32 %v2708, %v2711
      %v2714 = vmul.u32 %v2709, %v2710
      %v2715 = vmul.u32 %v2709, %v2711
      %v2716 = vshll.u32 %v2713, 16
      %v2717 = vshrl.u32 %v2713, 16
      %v2718 = vshll.u32 %v2714, 16
      %v2719 = vshrl.u32 %v2714, 16
      %vm2720 = vc.u32 %v2712, %v2716
      %v2721 = vsel %vm2720, 1, 0
      %v2722 = vadd.s32 %v2712, %v2716
      %v2723 = vadd.s32 %v2715, %v2721
      %vm2724 = vc.u32 %v2722, %v2718
      %v2725 = vsel %vm2724, 1, 0
      %v2726 = vadd.s32 %v2722, %v2718
      %v2727 = vadd.s32 %v2723, %v2725
      %v2728 = vadd.s32 %v2727, %v2717
      %v2729 = vadd.s32 %v2728, %v2719
      %v2730 = vmul.u32 %v2685, %v2676
      %v2731 = vadd.s32 %v2707, %v2726
      %vm2732 = vc.u32 %v2707, %v2726
      %v2733 = vadd.s32 %v2729, 1
      %v2734 = vsel %vm2732, %v2733, %v2729
      %v2735 = vadd.s32 %v2730, %v2734
      %v2736 = vadd.s32 %v2735, 536870912
      %v2737 = vshrl.u32 %v2736, 30
      %v2738 = vshll.u32 %v2737, 30
      %v2739 = vsub.s32 %v2735, %v2738
      %vm2740 = vcmp.lt.s32.totalorder %v2739, 0
      %v2741 = vsub.s32 0, %v2739
      %v2742 = vsel %vm2740, %v2741, %v2739
      %v2743 = vclz %v2742
      %v2744 = vsub.s32 %v2743, 2
      %vm2745 = vcmp.gt.s32.totalorder 0, %v2744
      %v2746 = vsel %vm2745, 0, %v2744
      %v2747 = vsub.s32 32, %v2746
      %v2748 = vshll.u32 %v2739, %v2746
      %v2749 = vshrl.u32 %v2731, %v2747
      %v2750 = vor.u32 %v2748, %v2749
      %v2751 = vsub.s32 4294967266, %v2746
      %v2752 = vadd.s32 %v2751, 127
      %v2753 = vshll.u32 %v2752, 23
      %v2754 = vor.u32 4788187, %v2753
      %v2755 = vand.u32 2147483647, %v2754
      %v2757 = vcvt.s32.f32 %v2750
      %v2758 = vmul.f32 %v2757, %v2755
      %v2759 = vxor.u32 %v2758, 2147483648
      %v2760 = vsel %vm2639, %v2759, %v2758
      %v2761 = vsub.s32 4, %v2737
      %v2762 = vsel %vm2639, %v2761, %v2737
      %v2763 = vsel %vm2638, %v310, %v2760
      %v2764 = vsel %vm2638, 0, %v2762
      %v2765 = vmul.f32 %v2763, %v2763
      %v2766 = vmul.f32 %v2765, -0.001358992
      %v2767 = vadd.f32 %v2766, 0.041655596
      %v2768 = vmul.f32 %v2765, %v2767
      %v2769 = vadd.f32 %v2768, -0.4999988
      %v2770 = vmul.f32 %v2765, %v2769
      %v2771 = vadd.f32 1.0, %v2770
      %v2772 = vmul.f32 %v2763, %v2763
      %v2773 = vmul.f32 %v2772, -0.00019511016
      %v2774 = vadd.f32 %v2773, 0.008332121
      %v2775 = vmul.f32 %v2772, %v2774
      %v2776 = vadd.f32 %v2775, -0.16666654
      %v2777 = vmul.f32 %v2772, %v2776
      %v2778 = vadd.f32 %v2777, 1.0
      %v2779 = vmul.f32 %v2778, %v2763
      %vm2780 = vweird.f32 %v310
      %v2781 = vadd.s32 %v2764, 3
      %v2782 = vand.u32 %v2781, 3
      %vm2783 = vcmp.lt.s32.totalorder %v2782, 2
      %vm2784 = vcmp.eq.s32.totalorder %v2782, 0
      %v2785 = vxor.u32 %v2779, 2147483648
      %v2786 = vsel %vm2784, %v2771, %v2785
      %vm2787 = vcmp.eq.s32.totalorder %v2782, 2
      %v2788 = vxor.u32 %v2771, 2147483648
      %v2789 = vsel %vm2787, %v2788, %v2779
      %v2790 = vsel %vm2783, %v2786, %v2789
      %v2791 = vsel %vm2780, nan, %v2790
      %2792 = vst.msk [vmem:[%s172] sm:$0xff] %vm198, %v466
      %2793 = vst.msk [vmem:[%s172 + $0x8] sm:$0xff] %vm198, %v621
      %2794 = vst.msk [vmem:[%s172 + $0x10] sm:$0xff] %vm198, %v776
      %2795 = vst.msk [vmem:[%s172 + $0x18] sm:$0xff] %vm198, %v931
      %2796 = vst.msk [vmem:[%s172 + $0x20] sm:$0xff] %vm198, %v1086
      %2797 = vst.msk [vmem:[%s172 + $0x28] sm:$0xff] %vm198, %v1241
      %2798 = vst.msk [vmem:[%s172 + $0x30] sm:$0xff] %vm198, %v1396
      %2799 = vst.msk [vmem:[%s172 + $0x38] sm:$0xff] %vm198, %v1551
      %2800 = vst.msk [vmem:[%s172 + $0x40] sm:$0xff] %vm198, %v1706
      %2801 = vst.msk [vmem:[%s172 + $0x48] sm:$0xff] %vm198, %v1861
      %2802 = vst.msk [vmem:[%s172 + $0x50] sm:$0xff] %vm198, %v2016
      %2803 = vst.msk [vmem:[%s172 + $0x58] sm:$0xff] %vm198, %v2171
      %2804 = vst.msk [vmem:[%s172 + $0x60] sm:$0xff] %vm198, %v2326
      %2805 = vst.msk [vmem:[%s172 + $0x68] sm:$0xff] %vm198, %v2481
      %2806 = vst.msk [vmem:[%s172 + $0x70] sm:$0xff] %vm198, %v2636
      %2807 = vst.msk [vmem:[%s172 + $0x78] sm:$0xff] %vm198, %v2791
      %s2808 = smul.u32 16, %s14
      %p2809 = scmp.lt.s32.totalorder %s2808, 127
      %s2810 = scalar_select %p2809, %s2808, 127
      %s2811 = smul.addr %s2810, 8
      %s2812 = scalar_lea.vmem %s3, %s2811
      // Predicated region
      $region33: #{tpu_custom_call.1} parent=31 // pred_check
        %p2813 = pneg %p100
      $region34: #{tpu_custom_call.1} parent=31 // pred_check_branch
        %2815 = sbr.rel (%p2813) target = $region36
      $region35: #{tpu_custom_call.1} parent=31 // pred_region
        %s2816 = smul.u32 16, %s14
      $region36: #{tpu_custom_call.1} parent=31 // pred_fallthru
        _
    $region32: #{tpu_custom_call.1} parent=5 // pred_fallthru
      _
    %p2817 = scmp.le.s32.totalorder 2, %s9
    // Predicated region
    $region37: #{tpu_custom_call.1} parent=5 // pred_check
      %p2818 = pneg %p2817
    $region38: #{tpu_custom_call.1} parent=5 // pred_check_branch
      %2820 = sbr.rel (%p2818) target = $region40
    $region39: #{tpu_custom_call.1} parent=5 // pred_region
      %s2821 = ssub.s32 %s9, 2
      // Predicated region
      $region41: #{tpu_custom_call.1} parent=39 // pred_check
        %p2822 = pneg %p106
      $region42: #{tpu_custom_call.1} parent=39 // pred_check_branch
        %2824 = sbr.rel (%p2822) target = $region44
      $region43: #{tpu_custom_call.1} parent=39 // pred_region
        %s2825 = smul.u32 16, %s15
        %p2826 = scmp.lt.s32.totalorder %s2825, 127
        %s2827 = scalar_select %p2826, %s2825, 127
        %s2828 = smul.addr %s2827, 8
        %s2829 = scalar_lea.vmem %s3, %s2828
      $region44: #{tpu_custom_call.1} parent=39 // pred_fallthru
        _
    $region40: #{tpu_custom_call.1} parent=5 // pred_fallthru
      _
  $region6: #{tpu_custom_call.1} parent=0 // loop_footer
    %s13 = sadd.s32 1, %s9
  $region7: #{tpu_custom_call.1} parent=0 // loop_footer_branch
    %8 = sbr.rel target = $region3
  $region8: #{tpu_custom_call.1} parent=0 // loop_exit
    _

</llo_original>
